<compile_context>
chip_gen: v7x
topology: tpu7x:2x2x1
jax: 0.10.0
libtpu: 0.0.40
codegen_flags: <defaults>
</compile_context>

<pallas_src>
import functools

import jax
import jax.numpy as jnp
from jax import lax
from jax.experimental import pallas as pl
from jax.experimental.pallas import tpu as pltpu

INPUT_SIZE = 4      # x row = [reward, one_hot(action), timestep] (see form_x)
N_ACTIONS = 2
HIDDEN = 48
T_SEQ = 8           # LSTM steps fused into one kernel invocation
BATCH_ENVS = 16     # parallel bandit environments (two sublane-full tiles)


def pick_gate_stride():
    """128-lane per-gate stride on v6e/v7x; 64 on v5e (128-wide MXU)."""
    try:
        kind = jax.devices()[0].device_kind.lower()
    except Exception:
        kind = ""
    return 64 if "v5" in kind else 128


def pad_gate_cols(w, hidden, stride):
    """(rows, 4H) PyTorch-order gates -> (rows, 4*stride), gate g in lanes
    [g*stride, g*stride+H), zeros elsewhere (zero columns -> zero lanes, so
    padded lanes never leak: slices below stay exactly H wide)."""
    rows = w.shape[0]
    out = jnp.zeros((rows, 4 * stride), w.dtype)
    for g in range(4):
        out = out.at[:, g * stride: g * stride + hidden].set(
            w[:, g * hidden:(g + 1) * hidden])
    return out


def a2c_forward_kernel(x_ref, h0_ref, c0_ref, wih_ref, whh_ref, bg_ref,
                       wh_ref, bh_ref, pv_ref, hT_ref, cT_ref, xproj_ref):
    """T LSTM steps over a batch tile of envs + fused pi/v head, all in VMEM.

    x_ref  : (T, Bt, I)        per-step inputs
    h0/c0  : (Bt, H)           recurrent state (aliased to hT/cT outputs)
    wih_ref: (I, 4*GS)         gate-padded input weights  (PyTorch order i,f,g,o)
    whh_ref: (H, 4*GS)         gate-padded recurrent weights
    bg_ref : (1, 4*GS)         gate-padded bias (b_ih + b_hh)
    wh_ref : (H, A+1)          fused [W_pi | W_v] head weights
    bh_ref : (1, A+1)          fused head bias
    pv_ref : (T, Bt, A+1)      [pre-softmax policy | value] per step
    xproj  : (T*Bt, 4*GS)      VMEM scratch: batched input projection
    """
    T, Bt, I = x_ref.shape
    H = h0_ref.shape[-1]
    GS = whh_ref.shape[-1] // 4          # per-gate lane stride

    # --- off the serial chain: input projection for all T steps in one dot ---
    x_all = x_ref[...].reshape(T * Bt, I)                       # tile-preserving
    xproj_ref[...] = (jnp.dot(x_all, wih_ref[...],
                              preferred_element_type=jnp.float32)
                      + bg_ref[...])

    # --- hoist loop-invariant loads (JAX does not CSE these per-iter) ---
    whh = whh_ref[...]
    wh = wh_ref[...]
    bh = bh_ref[...]

    def step(t, carry):
        h, c = carry                                            # (Bt, H) each
        row = pl.multiple_of(t * Bt, Bt)
        gates = xproj_ref[pl.ds(row, Bt), :] + jnp.dot(
            h, whh, preferred_element_type=jnp.float32)         # (Bt, 4*GS)
        # Lane-aligned, vreg-interior gate slices (width stays exactly H).
        i_g = jax.nn.sigmoid(gates[:, 0 * GS:0 * GS + H])
        f_g = jax.nn.sigmoid(gates[:, 1 * GS:1 * GS + H])
        g_g = jnp.tanh(gates[:, 2 * GS:2 * GS + H])
        o_g = jax.nn.sigmoid(gates[:, 3 * GS:3 * GS + H])
        c_new = f_g * c + i_g * g_g
        h_new = o_g * jnp.tanh(c_new)
        # Fused policy/value head straight from the live hidden state.
        pv_ref[t] = jnp.dot(h_new, wh, preferred_element_type=jnp.float32) + bh
        return h_new, c_new

    h_fin, c_fin = lax.fori_loop(0, T, step, (h0_ref[...], c0_ref[...]),
                                 unroll=True)
    hT_ref[...] = h_fin
    cT_ref[...] = c_fin


@functools.partial(jax.jit, donate_argnums=(1, 2))
def a2c_forward(x, h0, c0, w_ih, w_hh, b_gates, w_head, b_head):
    """x: (T, B, I); h0/c0: (B, H); gate weights pre-padded to 4*GS lanes.
    Returns (pre_softmax_policy, value, h_t, c_t)."""
    T, B, I = x.shape
    H = h0.shape[-1]
    G4 = w_hh.shape[-1]                  # 4 * gate_stride
    A1 = w_head.shape[-1]                # n_actions + 1 (fused heads)

    # Exactly two batch tiles when possible: engages both TensorCores on v7x
    # while keeping the (serial) grid short on v5e/v6e.  B < 16 -> one tile.
    if B % 16 == 0:
        b_tile = B // 2
    else:
        b_tile = B
    grid = (B // b_tile,)

    in_specs = [
        pl.BlockSpec((T, b_tile, I), lambda b: (0, b, 0)),      # x
        pl.BlockSpec((b_tile, H), lambda b: (b, 0)),            # h0
        pl.BlockSpec((b_tile, H), lambda b: (b, 0)),            # c0
        pl.BlockSpec((I, G4), lambda b: (0, 0)),                # w_ih (padded)
        pl.BlockSpec((H, G4), lambda b: (0, 0)),                # w_hh (padded)
        pl.BlockSpec((1, G4), lambda b: (0, 0)),                # b_gates (padded)
        pl.BlockSpec((H, A1), lambda b: (0, 0)),                # w_head
        pl.BlockSpec((1, A1), lambda b: (0, 0)),                # b_head
    ]
    out_specs = (
        pl.BlockSpec((T, b_tile, A1), lambda b: (0, b, 0)),     # pv
        pl.BlockSpec((b_tile, H), lambda b: (b, 0)),            # h_t
        pl.BlockSpec((b_tile, H), lambda b: (b, 0)),            # c_t
    )
    out_shape = (
        jax.ShapeDtypeStruct((T, B, A1), jnp.float32),
        jax.ShapeDtypeStruct((B, H), jnp.float32),
        jax.ShapeDtypeStruct((B, H), jnp.float32),
    )

    pv, h_t, c_t = pl.pallas_call(
        a2c_forward_kernel,
        out_shape=out_shape,
        grid=grid,
        in_specs=in_specs,
        out_specs=out_specs,
        scratch_shapes=[pltpu.VMEM((T * b_tile, G4), jnp.float32)],
        # Update the recurrent state in place (h0 -> h_t, c0 -> c_t).
        input_output_aliases={1: 1, 2: 2},
        compiler_params=pltpu.CompilerParams(
            dimension_semantics=("parallel",)),
    )(x, h0, c0, w_ih, w_hh, b_gates, w_head, b_head)

    pre_softmax_policy = pv[..., :A1 - 1]
    value = pv[..., A1 - 1:]
    return pre_softmax_policy, value, h_t, c_t


def ref_forward(x, h0, c0, w_ih, w_hh, b_g, w_head, b_head, hidden, n_actions):
    """Pure-JAX reference with PyTorch nn.LSTM semantics (gates i, f, g, o),
    using the UNPADDED weight layout."""
    H = hidden
    h, c = h0, c0
    outs = []
    for t in range(x.shape[0]):
        g = x[t] @ w_ih + h @ w_hh + b_g
        i = jax.nn.sigmoid(g[:, 0:H])
        f = jax.nn.sigmoid(g[:, H:2 * H])
        gg = jnp.tanh(g[:, 2 * H:3 * H])
        o = jax.nn.sigmoid(g[:, 3 * H:4 * H])
        c = f * c + i * gg
        h = o * jnp.tanh(c)
        outs.append(h @ w_head + b_head)
    pv = jnp.stack(outs, axis=0)
    return pv[..., :n_actions], pv[..., n_actions:], h, c


def init_params(key, input_size, hidden, n_actions):
    """PyTorch-style uniform(-1/sqrt(H), 1/sqrt(H)) init, UNPADDED layouts."""
    k = 1.0 / jnp.sqrt(jnp.float32(hidden))
    ks = jax.random.split(key, 8)
    u = lambda kk, shape: jax.random.uniform(kk, shape, jnp.float32, -k, k)
    w_ih = u(ks[0], (input_size, 4 * hidden))        # == weight_ih_l0.T
    w_hh = u(ks[1], (hidden, 4 * hidden))            # == weight_hh_l0.T
    b_g = u(ks[2], (1, 4 * hidden)) + u(ks[3], (1, 4 * hidden))  # b_ih + b_hh
    w_pi = u(ks[4], (hidden, n_actions))
    b_pi = u(ks[5], (1, n_actions))
    w_v = u(ks[6], (hidden, 1))
    b_v = u(ks[7], (1, 1))
    w_head = jnp.concatenate([w_pi, w_v], axis=1)    # (H, A+1)
    b_head = jnp.concatenate([b_pi, b_v], axis=1)    # (1, A+1)
    return w_ih, w_hh, b_g, w_head, b_head


# TODO(synk): calc_loss / Categorical sampling / Bandits environment are
# host-side RL-loop bookkeeping with Python RNG, not forward-pass tensor
# compute; only forward() (LSTM + pi/v heads) is implemented as a kernel.

if __name__ == "__main__":
    key = jax.random.PRNGKey(0)
    pkey, xkey, akey, hkey, ckey = jax.random.split(key, 5)

    # Unpadded (reference) params, then the kernel's gate-padded layout.
    w_ih, w_hh, b_g, w_head, b_head = init_params(pkey, INPUT_SIZE, HIDDEN,
                                                  N_ACTIONS)
    stride = pick_gate_stride()
    w_ih_p = pad_gate_cols(w_ih, HIDDEN, stride)     # (I, 4*GS)
    w_hh_p = pad_gate_cols(w_hh, HIDDEN, stride)     # (H, 4*GS)
    b_g_p = pad_gate_cols(b_g, HIDDEN, stride)       # (1, 4*GS)

    B, T = BATCH_ENVS, T_SEQ
    # Per-env, per-step inputs shaped like the module's form_x():
    # [reward, 1-hot(action), timestep].
    rewards = jax.random.bernoulli(xkey, 0.5, (T, B)).astype(jnp.float32)
    acts = jax.random.bernoulli(akey, 0.5, (T, B)).astype(jnp.float32)
    tsteps = jnp.broadcast_to(
        jnp.arange(1, T + 1, dtype=jnp.float32)[:, None], (T, B))
    x = jnp.stack([rewards, 1.0 - acts, acts, tsteps], axis=-1)   # (T, B, 4)
    # Env 0, step 0 gets the module's initial x = [[1, 1, 0, 0]].
    x = x.at[0, 0].set(jnp.array([1.0, 1.0, 0.0, 0.0], jnp.float32))

    # Mid-rollout recurrent state (nonzero so W_hh is actually exercised).
    h0 = 0.1 * jax.random.normal(hkey, (B, HIDDEN), jnp.float32)
    c0 = 0.1 * jax.random.normal(ckey, (B, HIDDEN), jnp.float32)

    # Reference first: h0/c0 are donated to the kernel call below.
    pi_r, v_r, h_r, c_r = ref_forward(x, h0, c0, w_ih, w_hh, b_g,
                                      w_head, b_head, HIDDEN, N_ACTIONS)

    pi, value, h_t, c_t = a2c_forward(x, h0, c0, w_ih_p, w_hh_p, b_g_p,
                                      w_head, b_head)
    jax.block_until_ready((pi, value, h_t, c_t))

    assert pi.shape == (T, B, N_ACTIONS) and value.shape == (T, B, 1)
    assert jnp.allclose(pi, pi_r, atol=1e-4)
    assert jnp.allclose(value, v_r, atol=1e-4)
    assert jnp.allclose(h_t, h_r, atol=1e-4)
    assert jnp.allclose(c_t, c_r, atol=1e-4)

    print("KERNEL_OK")
</pallas_src>

<mosaic_0001>
module attributes {stable_mosaic.version = 11 : i64} {
  func.func @a2c_forward_kernel(%arg0: i32, %arg1: memref<8x8x4xf32, #tpu.memory_space<vmem>>, %arg2: memref<8x48xf32, #tpu.memory_space<vmem>>, %arg3: memref<8x48xf32, #tpu.memory_space<vmem>>, %arg4: memref<4x512xf32, #tpu.memory_space<vmem>>, %arg5: memref<48x512xf32, #tpu.memory_space<vmem>>, %arg6: memref<1x512xf32, #tpu.memory_space<vmem>>, %arg7: memref<48x3xf32, #tpu.memory_space<vmem>>, %arg8: memref<1x3xf32, #tpu.memory_space<vmem>>, %arg9: memref<8x8x3xf32, #tpu.memory_space<vmem>>, %arg10: memref<8x48xf32, #tpu.memory_space<vmem>>, %arg11: memref<8x48xf32, #tpu.memory_space<vmem>>, %arg12: memref<64x512xf32, #tpu.memory_space<vmem>>) attributes {dimension_semantics = [#tpu.dimension_semantics<parallel>], iteration_bounds = array<i64: 2>, scalar_prefetch = 0 : i64, scratch_operands = 1 : i64, tpu.core_type = #tpu.core_type<tc>, window_params = [{transform_indices = @transform_0, window_bounds = array<i64: 8, 8, 4>}, {transform_indices = @transform_1, window_bounds = array<i64: 8, 48>}, {transform_indices = @transform_2, window_bounds = array<i64: 8, 48>}, {pipeline_mode = #tpu.pipeline_mode<synchronous>, transform_indices = @transform_3, window_bounds = array<i64: 4, 512>}, {pipeline_mode = #tpu.pipeline_mode<synchronous>, transform_indices = @transform_4, window_bounds = array<i64: 48, 512>}, {pipeline_mode = #tpu.pipeline_mode<synchronous>, transform_indices = @transform_5, window_bounds = array<i64: 1, 512>}, {pipeline_mode = #tpu.pipeline_mode<synchronous>, transform_indices = @transform_6, window_bounds = array<i64: 48, 3>}, {pipeline_mode = #tpu.pipeline_mode<synchronous>, transform_indices = @transform_7, window_bounds = array<i64: 1, 3>}, {transform_indices = @transform_8, window_bounds = array<i64: 8, 8, 3>}, {transform_indices = @transform_9, window_bounds = array<i64: 8, 48>}, {transform_indices = @transform_10, window_bounds = array<i64: 8, 48>}]} {
    %c0 = arith.constant 0 : index
    %c0_0 = arith.constant 0 : index
    %c0_1 = arith.constant 0 : index
    %0 = vector.load %arg1[%c0, %c0_0, %c0_1] : memref<8x8x4xf32, #tpu.memory_space<vmem>>, vector<8x8x4xf32>
    %1 = vector.shape_cast %0 : vector<8x8x4xf32> to vector<64x4xf32>
    %c0_2 = arith.constant 0 : index
    %c0_3 = arith.constant 0 : index
    %2 = vector.load %arg4[%c0_2, %c0_3] : memref<4x512xf32, #tpu.memory_space<vmem>>, vector<4x512xf32>
    %cst = arith.constant dense<0.000000e+00> : vector<64x512xf32>
    %3 = tpu.matmul %1, %2, %cst {dimension_numbers = #tpu.dot_dimension_numbers<[1], [0], [0], [1], [0, 0, 1, 1], [], []>} : vector<64x4xf32>, vector<4x512xf32>, vector<64x512xf32> -> vector<64x512xf32>
    %c0_4 = arith.constant 0 : index
    %c0_5 = arith.constant 0 : index
    %4 = vector.load %arg6[%c0_4, %c0_5] : memref<1x512xf32, #tpu.memory_space<vmem>>, vector<1x512xf32>
    %5 = vector.broadcast %4 : vector<1x512xf32> to vector<64x512xf32>
    %6 = arith.addf %3, %5 : vector<64x512xf32>
    %c0_6 = arith.constant 0 : index
    %c0_7 = arith.constant 0 : index
    %7 = vector.load %arg12[%c0_6, %c0_7] : memref<64x512xf32, #tpu.memory_space<vmem>>, vector<64x512xf32>
    tpu.vector_store %arg12[%c0_6, %c0_7], %6 {strides = array<i32>} : memref<64x512xf32, #tpu.memory_space<vmem>>, vector<64x512xf32>,
    %c0_8 = arith.constant 0 : index
    %c0_9 = arith.constant 0 : index
    %8 = vector.load %arg5[%c0_8, %c0_9] : memref<48x512xf32, #tpu.memory_space<vmem>>, vector<48x512xf32>
    %c0_10 = arith.constant 0 : index
    %c0_11 = arith.constant 0 : index
    %9 = vector.load %arg7[%c0_10, %c0_11] : memref<48x3xf32, #tpu.memory_space<vmem>>, vector<48x3xf32>
    %c0_12 = arith.constant 0 : index
    %c0_13 = arith.constant 0 : index
    %10 = vector.load %arg8[%c0_12, %c0_13] : memref<1x3xf32, #tpu.memory_space<vmem>>, vector<1x3xf32>
    %c0_14 = arith.constant 0 : index
    %c0_15 = arith.constant 0 : index
    %11 = vector.load %arg2[%c0_14, %c0_15] : memref<8x48xf32, #tpu.memory_space<vmem>>, vector<8x48xf32>
    %c0_16 = arith.constant 0 : index
    %c0_17 = arith.constant 0 : index
    %12 = vector.load %arg3[%c0_16, %c0_17] : memref<8x48xf32, #tpu.memory_space<vmem>>, vector<8x48xf32>
    %c0_i32 = arith.constant 0 : i32
    %c8_i32 = arith.constant 8 : i32
    %13 = arith.muli %c0_i32, %c8_i32 : i32
    %14 = tpu.assume_multiple %13, 8 : i32
    %15 = arith.index_cast %14 : i32 to index
    %c0_18 = arith.constant 0 : index
    %16 = vector.load %arg12[%15, %c0_18] : memref<64x512xf32, #tpu.memory_space<vmem>>, vector<8x512xf32>
    %cst_19 = arith.constant dense<0.000000e+00> : vector<8x512xf32>
    %17 = tpu.matmul %11, %8, %cst_19 {dimension_numbers = #tpu.dot_dimension_numbers<[1], [0], [0], [1], [0, 0, 1, 1], [], []>} : vector<8x48xf32>, vector<48x512xf32>, vector<8x512xf32> -> vector<8x512xf32>
    %18 = arith.addf %16, %17 : vector<8x512xf32>
    %19 = vector.extract_strided_slice %18 {offsets = [0, 0], sizes = [8, 48], strides = [1, 1]} : vector<8x512xf32> to vector<8x48xf32>
    %20 = arith.negf %19 : vector<8x48xf32>
    %21 = math.exp %20 : vector<8x48xf32>
    %cst_20 = arith.constant 1.000000e+00 : f32
    %22 = vector.broadcast %cst_20 : f32 to vector<8x48xf32>
    %23 = arith.addf %22, %21 : vector<8x48xf32>
    %24 = arith.divf %22, %23 : vector<8x48xf32>
    %25 = vector.extract_strided_slice %18 {offsets = [0, 128], sizes = [8, 48], strides = [1, 1]} : vector<8x512xf32> to vector<8x48xf32>
    %26 = arith.negf %25 : vector<8x48xf32>
    %27 = math.exp %26 : vector<8x48xf32>
    %cst_21 = arith.constant 1.000000e+00 : f32
    %28 = vector.broadcast %cst_21 : f32 to vector<8x48xf32>
    %29 = arith.addf %28, %27 : vector<8x48xf32>
    %30 = arith.divf %28, %29 : vector<8x48xf32>
    %31 = vector.extract_strided_slice %18 {offsets = [0, 256], sizes = [8, 48], strides = [1, 1]} : vector<8x512xf32> to vector<8x48xf32>
    %32 = math.tanh %31 : vector<8x48xf32>
    %33 = vector.extract_strided_slice %18 {offsets = [0, 384], sizes = [8, 48], strides = [1, 1]} : vector<8x512xf32> to vector<8x48xf32>
    %34 = arith.negf %33 : vector<8x48xf32>
    %35 = math.exp %34 : vector<8x48xf32>
    %cst_22 = arith.constant 1.000000e+00 : f32
    %36 = vector.broadcast %cst_22 : f32 to vector<8x48xf32>
    %37 = arith.addf %36, %35 : vector<8x48xf32>
    %38 = arith.divf %36, %37 : vector<8x48xf32>
    %39 = arith.mulf %30, %12 : vector<8x48xf32>
    %40 = arith.mulf %24, %32 : vector<8x48xf32>
    %41 = arith.addf %39, %40 : vector<8x48xf32>
    %42 = math.tanh %41 : vector<8x48xf32>
    %43 = arith.mulf %38, %42 : vector<8x48xf32>
    %cst_23 = arith.constant dense<0.000000e+00> : vector<8x3xf32>
    %44 = tpu.matmul %43, %9, %cst_23 {dimension_numbers = #tpu.dot_dimension_numbers<[1], [0], [0], [1], [0, 0, 1, 1], [], []>} : vector<8x48xf32>, vector<48x3xf32>, vector<8x3xf32> -> vector<8x3xf32>
    %45 = vector.broadcast %10 : vector<1x3xf32> to vector<8x3xf32>
    %46 = arith.addf %44, %45 : vector<8x3xf32>
    %47 = arith.index_cast %c0_i32 : i32 to index
    %c0_24 = arith.constant 0 : index
    %c0_25 = arith.constant 0 : index
    %48 = vector.load %arg9[%47, %c0_24, %c0_25] : memref<8x8x3xf32, #tpu.memory_space<vmem>>, vector<1x8x3xf32>
    %49 = vector.shape_cast %48 : vector<1x8x3xf32> to vector<8x3xf32>
    %50 = vector.shape_cast %46 : vector<8x3xf32> to vector<1x8x3xf32>
    tpu.vector_store %arg9[%47, %c0_24, %c0_25], %50 {strides = array<i32>} : memref<8x8x3xf32, #tpu.memory_space<vmem>>, vector<1x8x3xf32>,
    %c1_i32 = arith.constant 1 : i32
    %c8_i32_26 = arith.constant 8 : i32
    %51 = arith.muli %c1_i32, %c8_i32_26 : i32
    %52 = tpu.assume_multiple %51, 8 : i32
    %53 = arith.index_cast %52 : i32 to index
    %c0_27 = arith.constant 0 : index
    %54 = vector.load %arg12[%53, %c0_27] : memref<64x512xf32, #tpu.memory_space<vmem>>, vector<8x512xf32>
    %cst_28 = arith.constant dense<0.000000e+00> : vector<8x512xf32>
    %55 = tpu.matmul %43, %8, %cst_28 {dimension_numbers = #tpu.dot_dimension_numbers<[1], [0], [0], [1], [0, 0, 1, 1], [], []>} : vector<8x48xf32>, vector<48x512xf32>, vector<8x512xf32> -> vector<8x512xf32>
    %56 = arith.addf %54, %55 : vector<8x512xf32>
    %57 = vector.extract_strided_slice %56 {offsets = [0, 0], sizes = [8, 48], strides = [1, 1]} : vector<8x512xf32> to vector<8x48xf32>
    %58 = arith.negf %57 : vector<8x48xf32>
    %59 = math.exp %58 : vector<8x48xf32>
    %cst_29 = arith.constant 1.000000e+00 : f32
    %60 = vector.broadcast %cst_29 : f32 to vector<8x48xf32>
    %61 = arith.addf %60, %59 : vector<8x48xf32>
    %62 = arith.divf %60, %61 : vector<8x48xf32>
    %63 = vector.extract_strided_slice %56 {offsets = [0, 128], sizes = [8, 48], strides = [1, 1]} : vector<8x512xf32> to vector<8x48xf32>
    %64 = arith.negf %63 : vector<8x48xf32>
    %65 = math.exp %64 : vector<8x48xf32>
    %cst_30 = arith.constant 1.000000e+00 : f32
    %66 = vector.broadcast %cst_30 : f32 to vector<8x48xf32>
    %67 = arith.addf %66, %65 : vector<8x48xf32>
    %68 = arith.divf %66, %67 : vector<8x48xf32>
    %69 = vector.extract_strided_slice %56 {offsets = [0, 256], sizes = [8, 48], strides = [1, 1]} : vector<8x512xf32> to vector<8x48xf32>
    %70 = math.tanh %69 : vector<8x48xf32>
    %71 = vector.extract_strided_slice %56 {offsets = [0, 384], sizes = [8, 48], strides = [1, 1]} : vector<8x512xf32> to vector<8x48xf32>
    %72 = arith.negf %71 : vector<8x48xf32>
    %73 = math.exp %72 : vector<8x48xf32>
    %cst_31 = arith.constant 1.000000e+00 : f32
    %74 = vector.broadcast %cst_31 : f32 to vector<8x48xf32>
    %75 = arith.addf %74, %73 : vector<8x48xf32>
    %76 = arith.divf %74, %75 : vector<8x48xf32>
    %77 = arith.mulf %68, %41 : vector<8x48xf32>
    %78 = arith.mulf %62, %70 : vector<8x48xf32>
    %79 = arith.addf %77, %78 : vector<8x48xf32>
    %80 = math.tanh %79 : vector<8x48xf32>
    %81 = arith.mulf %76, %80 : vector<8x48xf32>
    %cst_32 = arith.constant dense<0.000000e+00> : vector<8x3xf32>
    %82 = tpu.matmul %81, %9, %cst_32 {dimension_numbers = #tpu.dot_dimension_numbers<[1], [0], [0], [1], [0, 0, 1, 1], [], []>} : vector<8x48xf32>, vector<48x3xf32>, vector<8x3xf32> -> vector<8x3xf32>
    %83 = vector.broadcast %10 : vector<1x3xf32> to vector<8x3xf32>
    %84 = arith.addf %82, %83 : vector<8x3xf32>
    %85 = arith.index_cast %c1_i32 : i32 to index
    %c0_33 = arith.constant 0 : index
    %c0_34 = arith.constant 0 : index
    %86 = vector.load %arg9[%85, %c0_33, %c0_34] : memref<8x8x3xf32, #tpu.memory_space<vmem>>, vector<1x8x3xf32>
    %87 = vector.shape_cast %86 : vector<1x8x3xf32> to vector<8x3xf32>
    %88 = vector.shape_cast %84 : vector<8x3xf32> to vector<1x8x3xf32>
    tpu.vector_store %arg9[%85, %c0_33, %c0_34], %88 {strides = array<i32>} : memref<8x8x3xf32, #tpu.memory_space<vmem>>, vector<1x8x3xf32>,
    %c2_i32 = arith.constant 2 : i32
    %c8_i32_35 = arith.constant 8 : i32
    %89 = arith.muli %c2_i32, %c8_i32_35 : i32
    %90 = tpu.assume_multiple %89, 8 : i32
    %91 = arith.index_cast %90 : i32 to index
    %c0_36 = arith.constant 0 : index
    %92 = vector.load %arg12[%91, %c0_36] : memref<64x512xf32, #tpu.memory_space<vmem>>, vector<8x512xf32>
    %cst_37 = arith.constant dense<0.000000e+00> : vector<8x512xf32>
    %93 = tpu.matmul %81, %8, %cst_37 {dimension_numbers = #tpu.dot_dimension_numbers<[1], [0], [0], [1], [0, 0, 1, 1], [], []>} : vector<8x48xf32>, vector<48x512xf32>, vector<8x512xf32> -> vector<8x512xf32>
    %94 = arith.addf %92, %93 : vector<8x512xf32>
    %95 = vector.extract_strided_slice %94 {offsets = [0, 0], sizes = [8, 48], strides = [1, 1]} : vector<8x512xf32> to vector<8x48xf32>
    %96 = arith.negf %95 : vector<8x48xf32>
    %97 = math.exp %96 : vector<8x48xf32>
    %cst_38 = arith.constant 1.000000e+00 : f32
    %98 = vector.broadcast %cst_38 : f32 to vector<8x48xf32>
    %99 = arith.addf %98, %97 : vector<8x48xf32>
    %100 = arith.divf %98, %99 : vector<8x48xf32>
    %101 = vector.extract_strided_slice %94 {offsets = [0, 128], sizes = [8, 48], strides = [1, 1]} : vector<8x512xf32> to vector<8x48xf32>
    %102 = arith.negf %101 : vector<8x48xf32>
    %103 = math.exp %102 : vector<8x48xf32>
    %cst_39 = arith.constant 1.000000e+00 : f32
    %104 = vector.broadcast %cst_39 : f32 to vector<8x48xf32>
    %105 = arith.addf %104, %103 : vector<8x48xf32>
    %106 = arith.divf %104, %105 : vector<8x48xf32>
    %107 = vector.extract_strided_slice %94 {offsets = [0, 256], sizes = [8, 48], strides = [1, 1]} : vector<8x512xf32> to vector<8x48xf32>
    %108 = math.tanh %107 : vector<8x48xf32>
    %109 = vector.extract_strided_slice %94 {offsets = [0, 384], sizes = [8, 48], strides = [1, 1]} : vector<8x512xf32> to vector<8x48xf32>
    %110 = arith.negf %109 : vector<8x48xf32>
    %111 = math.exp %110 : vector<8x48xf32>
    %cst_40 = arith.constant 1.000000e+00 : f32
    %112 = vector.broadcast %cst_40 : f32 to vector<8x48xf32>
    %113 = arith.addf %112, %111 : vector<8x48xf32>
    %114 = arith.divf %112, %113 : vector<8x48xf32>
    %115 = arith.mulf %106, %79 : vector<8x48xf32>
    %116 = arith.mulf %100, %108 : vector<8x48xf32>
    %117 = arith.addf %115, %116 : vector<8x48xf32>
    %118 = math.tanh %117 : vector<8x48xf32>
    %119 = arith.mulf %114, %118 : vector<8x48xf32>
    %cst_41 = arith.constant dense<0.000000e+00> : vector<8x3xf32>
    %120 = tpu.matmul %119, %9, %cst_41 {dimension_numbers = #tpu.dot_dimension_numbers<[1], [0], [0], [1], [0, 0, 1, 1], [], []>} : vector<8x48xf32>, vector<48x3xf32>, vector<8x3xf32> -> vector<8x3xf32>
    %121 = vector.broadcast %10 : vector<1x3xf32> to vector<8x3xf32>
    %122 = arith.addf %120, %121 : vector<8x3xf32>
    %123 = arith.index_cast %c2_i32 : i32 to index
    %c0_42 = arith.constant 0 : index
    %c0_43 = arith.constant 0 : index
    %124 = vector.load %arg9[%123, %c0_42, %c0_43] : memref<8x8x3xf32, #tpu.memory_space<vmem>>, vector<1x8x3xf32>
    %125 = vector.shape_cast %124 : vector<1x8x3xf32> to vector<8x3xf32>
    %126 = vector.shape_cast %122 : vector<8x3xf32> to vector<1x8x3xf32>
    tpu.vector_store %arg9[%123, %c0_42, %c0_43], %126 {strides = array<i32>} : memref<8x8x3xf32, #tpu.memory_space<vmem>>, vector<1x8x3xf32>,
    %c3_i32 = arith.constant 3 : i32
    %c8_i32_44 = arith.constant 8 : i32
    %127 = arith.muli %c3_i32, %c8_i32_44 : i32
    %128 = tpu.assume_multiple %127, 8 : i32
    %129 = arith.index_cast %128 : i32 to index
    %c0_45 = arith.constant 0 : index
    %130 = vector.load %arg12[%129, %c0_45] : memref<64x512xf32, #tpu.memory_space<vmem>>, vector<8x512xf32>
    %cst_46 = arith.constant dense<0.000000e+00> : vector<8x512xf32>
    %131 = tpu.matmul %119, %8, %cst_46 {dimension_numbers = #tpu.dot_dimension_numbers<[1], [0], [0], [1], [0, 0, 1, 1], [], []>} : vector<8x48xf32>, vector<48x512xf32>, vector<8x512xf32> -> vector<8x512xf32>
    %132 = arith.addf %130, %131 : vector<8x512xf32>
    %133 = vector.extract_strided_slice %132 {offsets = [0, 0], sizes = [8, 48], strides = [1, 1]} : vector<8x512xf32> to vector<8x48xf32>
    %134 = arith.negf %133 : vector<8x48xf32>
    %135 = math.exp %134 : vector<8x48xf32>
    %cst_47 = arith.constant 1.000000e+00 : f32
    %136 = vector.broadcast %cst_47 : f32 to vector<8x48xf32>
    %137 = arith.addf %136, %135 : vector<8x48xf32>
    %138 = arith.divf %136, %137 : vector<8x48xf32>
    %139 = vector.extract_strided_slice %132 {offsets = [0, 128], sizes = [8, 48], strides = [1, 1]} : vector<8x512xf32> to vector<8x48xf32>
    %140 = arith.negf %139 : vector<8x48xf32>
    %141 = math.exp %140 : vector<8x48xf32>
    %cst_48 = arith.constant 1.000000e+00 : f32
    %142 = vector.broadcast %cst_48 : f32 to vector<8x48xf32>
    %143 = arith.addf %142, %141 : vector<8x48xf32>
    %144 = arith.divf %142, %143 : vector<8x48xf32>
    %145 = vector.extract_strided_slice %132 {offsets = [0, 256], sizes = [8, 48], strides = [1, 1]} : vector<8x512xf32> to vector<8x48xf32>
    %146 = math.tanh %145 : vector<8x48xf32>
    %147 = vector.extract_strided_slice %132 {offsets = [0, 384], sizes = [8, 48], strides = [1, 1]} : vector<8x512xf32> to vector<8x48xf32>
    %148 = arith.negf %147 : vector<8x48xf32>
    %149 = math.exp %148 : vector<8x48xf32>
    %cst_49 = arith.constant 1.000000e+00 : f32
    %150 = vector.broadcast %cst_49 : f32 to vector<8x48xf32>
    %151 = arith.addf %150, %149 : vector<8x48xf32>
    %152 = arith.divf %150, %151 : vector<8x48xf32>
    %153 = arith.mulf %144, %117 : vector<8x48xf32>
    %154 = arith.mulf %138, %146 : vector<8x48xf32>
    %155 = arith.addf %153, %154 : vector<8x48xf32>
    %156 = math.tanh %155 : vector<8x48xf32>
    %157 = arith.mulf %152, %156 : vector<8x48xf32>
    %cst_50 = arith.constant dense<0.000000e+00> : vector<8x3xf32>
    %158 = tpu.matmul %157, %9, %cst_50 {dimension_numbers = #tpu.dot_dimension_numbers<[1], [0], [0], [1], [0, 0, 1, 1], [], []>} : vector<8x48xf32>, vector<48x3xf32>, vector<8x3xf32> -> vector<8x3xf32>
    %159 = vector.broadcast %10 : vector<1x3xf32> to vector<8x3xf32>
    %160 = arith.addf %158, %159 : vector<8x3xf32>
    %161 = arith.index_cast %c3_i32 : i32 to index
    %c0_51 = arith.constant 0 : index
    %c0_52 = arith.constant 0 : index
    %162 = vector.load %arg9[%161, %c0_51, %c0_52] : memref<8x8x3xf32, #tpu.memory_space<vmem>>, vector<1x8x3xf32>
    %163 = vector.shape_cast %162 : vector<1x8x3xf32> to vector<8x3xf32>
    %164 = vector.shape_cast %160 : vector<8x3xf32> to vector<1x8x3xf32>
    tpu.vector_store %arg9[%161, %c0_51, %c0_52], %164 {strides = array<i32>} : memref<8x8x3xf32, #tpu.memory_space<vmem>>, vector<1x8x3xf32>,
    %c4_i32 = arith.constant 4 : i32
    %c8_i32_53 = arith.constant 8 : i32
    %165 = arith.muli %c4_i32, %c8_i32_53 : i32
    %166 = tpu.assume_multiple %165, 8 : i32
    %167 = arith.index_cast %166 : i32 to index
    %c0_54 = arith.constant 0 : index
    %168 = vector.load %arg12[%167, %c0_54] : memref<64x512xf32, #tpu.memory_space<vmem>>, vector<8x512xf32>
    %cst_55 = arith.constant dense<0.000000e+00> : vector<8x512xf32>
    %169 = tpu.matmul %157, %8, %cst_55 {dimension_numbers = #tpu.dot_dimension_numbers<[1], [0], [0], [1], [0, 0, 1, 1], [], []>} : vector<8x48xf32>, vector<48x512xf32>, vector<8x512xf32> -> vector<8x512xf32>
    %170 = arith.addf %168, %169 : vector<8x512xf32>
    %171 = vector.extract_strided_slice %170 {offsets = [0, 0], sizes = [8, 48], strides = [1, 1]} : vector<8x512xf32> to vector<8x48xf32>
    %172 = arith.negf %171 : vector<8x48xf32>
    %173 = math.exp %172 : vector<8x48xf32>
    %cst_56 = arith.constant 1.000000e+00 : f32
    %174 = vector.broadcast %cst_56 : f32 to vector<8x48xf32>
    %175 = arith.addf %174, %173 : vector<8x48xf32>
    %176 = arith.divf %174, %175 : vector<8x48xf32>
    %177 = vector.extract_strided_slice %170 {offsets = [0, 128], sizes = [8, 48], strides = [1, 1]} : vector<8x512xf32> to vector<8x48xf32>
    %178 = arith.negf %177 : vector<8x48xf32>
    %179 = math.exp %178 : vector<8x48xf32>
    %cst_57 = arith.constant 1.000000e+00 : f32
    %180 = vector.broadcast %cst_57 : f32 to vector<8x48xf32>
    %181 = arith.addf %180, %179 : vector<8x48xf32>
    %182 = arith.divf %180, %181 : vector<8x48xf32>
    %183 = vector.extract_strided_slice %170 {offsets = [0, 256], sizes = [8, 48], strides = [1, 1]} : vector<8x512xf32> to vector<8x48xf32>
    %184 = math.tanh %183 : vector<8x48xf32>
    %185 = vector.extract_strided_slice %170 {offsets = [0, 384], sizes = [8, 48], strides = [1, 1]} : vector<8x512xf32> to vector<8x48xf32>
    %186 = arith.negf %185 : vector<8x48xf32>
    %187 = math.exp %186 : vector<8x48xf32>
    %cst_58 = arith.constant 1.000000e+00 : f32
    %188 = vector.broadcast %cst_58 : f32 to vector<8x48xf32>
    %189 = arith.addf %188, %187 : vector<8x48xf32>
    %190 = arith.divf %188, %189 : vector<8x48xf32>
    %191 = arith.mulf %182, %155 : vector<8x48xf32>
    %192 = arith.mulf %176, %184 : vector<8x48xf32>
    %193 = arith.addf %191, %192 : vector<8x48xf32>
    %194 = math.tanh %193 : vector<8x48xf32>
    %195 = arith.mulf %190, %194 : vector<8x48xf32>
    %cst_59 = arith.constant dense<0.000000e+00> : vector<8x3xf32>
    %196 = tpu.matmul %195, %9, %cst_59 {dimension_numbers = #tpu.dot_dimension_numbers<[1], [0], [0], [1], [0, 0, 1, 1], [], []>} : vector<8x48xf32>, vector<48x3xf32>, vector<8x3xf32> -> vector<8x3xf32>
    %197 = vector.broadcast %10 : vector<1x3xf32> to vector<8x3xf32>
    %198 = arith.addf %196, %197 : vector<8x3xf32>
    %199 = arith.index_cast %c4_i32 : i32 to index
    %c0_60 = arith.constant 0 : index
    %c0_61 = arith.constant 0 : index
    %200 = vector.load %arg9[%199, %c0_60, %c0_61] : memref<8x8x3xf32, #tpu.memory_space<vmem>>, vector<1x8x3xf32>
    %201 = vector.shape_cast %200 : vector<1x8x3xf32> to vector<8x3xf32>
    %202 = vector.shape_cast %198 : vector<8x3xf32> to vector<1x8x3xf32>
    tpu.vector_store %arg9[%199, %c0_60, %c0_61], %202 {strides = array<i32>} : memref<8x8x3xf32, #tpu.memory_space<vmem>>, vector<1x8x3xf32>,
    %c5_i32 = arith.constant 5 : i32
    %c8_i32_62 = arith.constant 8 : i32
    %203 = arith.muli %c5_i32, %c8_i32_62 : i32
    %204 = tpu.assume_multiple %203, 8 : i32
    %205 = arith.index_cast %204 : i32 to index
    %c0_63 = arith.constant 0 : index
    %206 = vector.load %arg12[%205, %c0_63] : memref<64x512xf32, #tpu.memory_space<vmem>>, vector<8x512xf32>
    %cst_64 = arith.constant dense<0.000000e+00> : vector<8x512xf32>
    %207 = tpu.matmul %195, %8, %cst_64 {dimension_numbers = #tpu.dot_dimension_numbers<[1], [0], [0], [1], [0, 0, 1, 1], [], []>} : vector<8x48xf32>, vector<48x512xf32>, vector<8x512xf32> -> vector<8x512xf32>
    %208 = arith.addf %206, %207 : vector<8x512xf32>
    %209 = vector.extract_strided_slice %208 {offsets = [0, 0], sizes = [8, 48], strides = [1, 1]} : vector<8x512xf32> to vector<8x48xf32>
    %210 = arith.negf %209 : vector<8x48xf32>
    %211 = math.exp %210 : vector<8x48xf32>
    %cst_65 = arith.constant 1.000000e+00 : f32
    %212 = vector.broadcast %cst_65 : f32 to vector<8x48xf32>
    %213 = arith.addf %212, %211 : vector<8x48xf32>
    %214 = arith.divf %212, %213 : vector<8x48xf32>
    %215 = vector.extract_strided_slice %208 {offsets = [0, 128], sizes = [8, 48], strides = [1, 1]} : vector<8x512xf32> to vector<8x48xf32>
    %216 = arith.negf %215 : vector<8x48xf32>
    %217 = math.exp %216 : vector<8x48xf32>
    %cst_66 = arith.constant 1.000000e+00 : f32
    %218 = vector.broadcast %cst_66 : f32 to vector<8x48xf32>
    %219 = arith.addf %218, %217 : vector<8x48xf32>
    %220 = arith.divf %218, %219 : vector<8x48xf32>
    %221 = vector.extract_strided_slice %208 {offsets = [0, 256], sizes = [8, 48], strides = [1, 1]} : vector<8x512xf32> to vector<8x48xf32>
    %222 = math.tanh %221 : vector<8x48xf32>
    %223 = vector.extract_strided_slice %208 {offsets = [0, 384], sizes = [8, 48], strides = [1, 1]} : vector<8x512xf32> to vector<8x48xf32>
    %224 = arith.negf %223 : vector<8x48xf32>
    %225 = math.exp %224 : vector<8x48xf32>
    %cst_67 = arith.constant 1.000000e+00 : f32
    %226 = vector.broadcast %cst_67 : f32 to vector<8x48xf32>
    %227 = arith.addf %226, %225 : vector<8x48xf32>
    %228 = arith.divf %226, %227 : vector<8x48xf32>
    %229 = arith.mulf %220, %193 : vector<8x48xf32>
    %230 = arith.mulf %214, %222 : vector<8x48xf32>
    %231 = arith.addf %229, %230 : vector<8x48xf32>
    %232 = math.tanh %231 : vector<8x48xf32>
    %233 = arith.mulf %228, %232 : vector<8x48xf32>
    %cst_68 = arith.constant dense<0.000000e+00> : vector<8x3xf32>
    %234 = tpu.matmul %233, %9, %cst_68 {dimension_numbers = #tpu.dot_dimension_numbers<[1], [0], [0], [1], [0, 0, 1, 1], [], []>} : vector<8x48xf32>, vector<48x3xf32>, vector<8x3xf32> -> vector<8x3xf32>
    %235 = vector.broadcast %10 : vector<1x3xf32> to vector<8x3xf32>
    %236 = arith.addf %234, %235 : vector<8x3xf32>
    %237 = arith.index_cast %c5_i32 : i32 to index
    %c0_69 = arith.constant 0 : index
    %c0_70 = arith.constant 0 : index
    %238 = vector.load %arg9[%237, %c0_69, %c0_70] : memref<8x8x3xf32, #tpu.memory_space<vmem>>, vector<1x8x3xf32>
    %239 = vector.shape_cast %238 : vector<1x8x3xf32> to vector<8x3xf32>
    %240 = vector.shape_cast %236 : vector<8x3xf32> to vector<1x8x3xf32>
    tpu.vector_store %arg9[%237, %c0_69, %c0_70], %240 {strides = array<i32>} : memref<8x8x3xf32, #tpu.memory_space<vmem>>, vector<1x8x3xf32>,
    %c6_i32 = arith.constant 6 : i32
    %c8_i32_71 = arith.constant 8 : i32
    %241 = arith.muli %c6_i32, %c8_i32_71 : i32
    %242 = tpu.assume_multiple %241, 8 : i32
    %243 = arith.index_cast %242 : i32 to index
    %c0_72 = arith.constant 0 : index
    %244 = vector.load %arg12[%243, %c0_72] : memref<64x512xf32, #tpu.memory_space<vmem>>, vector<8x512xf32>
    %cst_73 = arith.constant dense<0.000000e+00> : vector<8x512xf32>
    %245 = tpu.matmul %233, %8, %cst_73 {dimension_numbers = #tpu.dot_dimension_numbers<[1], [0], [0], [1], [0, 0, 1, 1], [], []>} : vector<8x48xf32>, vector<48x512xf32>, vector<8x512xf32> -> vector<8x512xf32>
    %246 = arith.addf %244, %245 : vector<8x512xf32>
    %247 = vector.extract_strided_slice %246 {offsets = [0, 0], sizes = [8, 48], strides = [1, 1]} : vector<8x512xf32> to vector<8x48xf32>
    %248 = arith.negf %247 : vector<8x48xf32>
    %249 = math.exp %248 : vector<8x48xf32>
    %cst_74 = arith.constant 1.000000e+00 : f32
    %250 = vector.broadcast %cst_74 : f32 to vector<8x48xf32>
    %251 = arith.addf %250, %249 : vector<8x48xf32>
    %252 = arith.divf %250, %251 : vector<8x48xf32>
    %253 = vector.extract_strided_slice %246 {offsets = [0, 128], sizes = [8, 48], strides = [1, 1]} : vector<8x512xf32> to vector<8x48xf32>
    %254 = arith.negf %253 : vector<8x48xf32>
    %255 = math.exp %254 : vector<8x48xf32>
    %cst_75 = arith.constant 1.000000e+00 : f32
    %256 = vector.broadcast %cst_75 : f32 to vector<8x48xf32>
    %257 = arith.addf %256, %255 : vector<8x48xf32>
    %258 = arith.divf %256, %257 : vector<8x48xf32>
    %259 = vector.extract_strided_slice %246 {offsets = [0, 256], sizes = [8, 48], strides = [1, 1]} : vector<8x512xf32> to vector<8x48xf32>
    %260 = math.tanh %259 : vector<8x48xf32>
    %261 = vector.extract_strided_slice %246 {offsets = [0, 384], sizes = [8, 48], strides = [1, 1]} : vector<8x512xf32> to vector<8x48xf32>
    %262 = arith.negf %261 : vector<8x48xf32>
    %263 = math.exp %262 : vector<8x48xf32>
    %cst_76 = arith.constant 1.000000e+00 : f32
    %264 = vector.broadcast %cst_76 : f32 to vector<8x48xf32>
    %265 = arith.addf %264, %263 : vector<8x48xf32>
    %266 = arith.divf %264, %265 : vector<8x48xf32>
    %267 = arith.mulf %258, %231 : vector<8x48xf32>
    %268 = arith.mulf %252, %260 : vector<8x48xf32>
    %269 = arith.addf %267, %268 : vector<8x48xf32>
    %270 = math.tanh %269 : vector<8x48xf32>
    %271 = arith.mulf %266, %270 : vector<8x48xf32>
    %cst_77 = arith.constant dense<0.000000e+00> : vector<8x3xf32>
    %272 = tpu.matmul %271, %9, %cst_77 {dimension_numbers = #tpu.dot_dimension_numbers<[1], [0], [0], [1], [0, 0, 1, 1], [], []>} : vector<8x48xf32>, vector<48x3xf32>, vector<8x3xf32> -> vector<8x3xf32>
    %273 = vector.broadcast %10 : vector<1x3xf32> to vector<8x3xf32>
    %274 = arith.addf %272, %273 : vector<8x3xf32>
    %275 = arith.index_cast %c6_i32 : i32 to index
    %c0_78 = arith.constant 0 : index
    %c0_79 = arith.constant 0 : index
    %276 = vector.load %arg9[%275, %c0_78, %c0_79] : memref<8x8x3xf32, #tpu.memory_space<vmem>>, vector<1x8x3xf32>
    %277 = vector.shape_cast %276 : vector<1x8x3xf32> to vector<8x3xf32>
    %278 = vector.shape_cast %274 : vector<8x3xf32> to vector<1x8x3xf32>
    tpu.vector_store %arg9[%275, %c0_78, %c0_79], %278 {strides = array<i32>} : memref<8x8x3xf32, #tpu.memory_space<vmem>>, vector<1x8x3xf32>,
    %c7_i32 = arith.constant 7 : i32
    %c8_i32_80 = arith.constant 8 : i32
    %279 = arith.muli %c7_i32, %c8_i32_80 : i32
    %280 = tpu.assume_multiple %279, 8 : i32
    %281 = arith.index_cast %280 : i32 to index
    %c0_81 = arith.constant 0 : index
    %282 = vector.load %arg12[%281, %c0_81] : memref<64x512xf32, #tpu.memory_space<vmem>>, vector<8x512xf32>
    %cst_82 = arith.constant dense<0.000000e+00> : vector<8x512xf32>
    %283 = tpu.matmul %271, %8, %cst_82 {dimension_numbers = #tpu.dot_dimension_numbers<[1], [0], [0], [1], [0, 0, 1, 1], [], []>} : vector<8x48xf32>, vector<48x512xf32>, vector<8x512xf32> -> vector<8x512xf32>
    %284 = arith.addf %282, %283 : vector<8x512xf32>
    %285 = vector.extract_strided_slice %284 {offsets = [0, 0], sizes = [8, 48], strides = [1, 1]} : vector<8x512xf32> to vector<8x48xf32>
    %286 = arith.negf %285 : vector<8x48xf32>
    %287 = math.exp %286 : vector<8x48xf32>
    %cst_83 = arith.constant 1.000000e+00 : f32
    %288 = vector.broadcast %cst_83 : f32 to vector<8x48xf32>
    %289 = arith.addf %288, %287 : vector<8x48xf32>
    %290 = arith.divf %288, %289 : vector<8x48xf32>
    %291 = vector.extract_strided_slice %284 {offsets = [0, 128], sizes = [8, 48], strides = [1, 1]} : vector<8x512xf32> to vector<8x48xf32>
    %292 = arith.negf %291 : vector<8x48xf32>
    %293 = math.exp %292 : vector<8x48xf32>
    %cst_84 = arith.constant 1.000000e+00 : f32
    %294 = vector.broadcast %cst_84 : f32 to vector<8x48xf32>
    %295 = arith.addf %294, %293 : vector<8x48xf32>
    %296 = arith.divf %294, %295 : vector<8x48xf32>
    %297 = vector.extract_strided_slice %284 {offsets = [0, 256], sizes = [8, 48], strides = [1, 1]} : vector<8x512xf32> to vector<8x48xf32>
    %298 = math.tanh %297 : vector<8x48xf32>
    %299 = vector.extract_strided_slice %284 {offsets = [0, 384], sizes = [8, 48], strides = [1, 1]} : vector<8x512xf32> to vector<8x48xf32>
    %300 = arith.negf %299 : vector<8x48xf32>
    %301 = math.exp %300 : vector<8x48xf32>
    %cst_85 = arith.constant 1.000000e+00 : f32
    %302 = vector.broadcast %cst_85 : f32 to vector<8x48xf32>
    %303 = arith.addf %302, %301 : vector<8x48xf32>
    %304 = arith.divf %302, %303 : vector<8x48xf32>
    %305 = arith.mulf %296, %269 : vector<8x48xf32>
    %306 = arith.mulf %290, %298 : vector<8x48xf32>
    %307 = arith.addf %305, %306 : vector<8x48xf32>
    %308 = math.tanh %307 : vector<8x48xf32>
    %309 = arith.mulf %304, %308 : vector<8x48xf32>
    %cst_86 = arith.constant dense<0.000000e+00> : vector<8x3xf32>
    %310 = tpu.matmul %309, %9, %cst_86 {dimension_numbers = #tpu.dot_dimension_numbers<[1], [0], [0], [1], [0, 0, 1, 1], [], []>} : vector<8x48xf32>, vector<48x3xf32>, vector<8x3xf32> -> vector<8x3xf32>
    %311 = vector.broadcast %10 : vector<1x3xf32> to vector<8x3xf32>
    %312 = arith.addf %310, %311 : vector<8x3xf32>
    %313 = arith.index_cast %c7_i32 : i32 to index
    %c0_87 = arith.constant 0 : index
    %c0_88 = arith.constant 0 : index
    %314 = vector.load %arg9[%313, %c0_87, %c0_88] : memref<8x8x3xf32, #tpu.memory_space<vmem>>, vector<1x8x3xf32>
    %315 = vector.shape_cast %314 : vector<1x8x3xf32> to vector<8x3xf32>
    %316 = vector.shape_cast %312 : vector<8x3xf32> to vector<1x8x3xf32>
    tpu.vector_store %arg9[%313, %c0_87, %c0_88], %316 {strides = array<i32>} : memref<8x8x3xf32, #tpu.memory_space<vmem>>, vector<1x8x3xf32>,
    %c8_i32_89 = arith.constant 8 : i32
    %c0_90 = arith.constant 0 : index
    %c0_91 = arith.constant 0 : index
    %317 = vector.load %arg10[%c0_90, %c0_91] : memref<8x48xf32, #tpu.memory_space<vmem>>, vector<8x48xf32>
    tpu.vector_store %arg10[%c0_90, %c0_91], %309 {strides = array<i32>} : memref<8x48xf32, #tpu.memory_space<vmem>>, vector<8x48xf32>,
    %c0_92 = arith.constant 0 : index
    %c0_93 = arith.constant 0 : index
    %318 = vector.load %arg11[%c0_92, %c0_93] : memref<8x48xf32, #tpu.memory_space<vmem>>, vector<8x48xf32>
    tpu.vector_store %arg11[%c0_92, %c0_93], %307 {strides = array<i32>} : memref<8x48xf32, #tpu.memory_space<vmem>>, vector<8x48xf32>,
    return
  }
  func.func @transform_0(%arg0: i32) -> (i32, i32, i32) {
    %c0_i32 = arith.constant 0 : i32
    %c0_i32_0 = arith.constant 0 : i32
    %c0_i32_1 = arith.constant 0 : i32
    return %c0_i32, %arg0, %c0_i32_0 : i32, i32, i32
  }
  func.func @transform_1(%arg0: i32) -> (i32, i32) {
    %c0_i32 = arith.constant 0 : i32
    %c0_i32_0 = arith.constant 0 : i32
    return %arg0, %c0_i32 : i32, i32
  }
  func.func @transform_2(%arg0: i32) -> (i32, i32) {
    %c0_i32 = arith.constant 0 : i32
    %c0_i32_0 = arith.constant 0 : i32
    return %arg0, %c0_i32 : i32, i32
  }
  func.func @transform_3(%arg0: i32) -> (i32, i32) {
    %c0_i32 = arith.constant 0 : i32
    %c0_i32_0 = arith.constant 0 : i32
    %c0_i32_1 = arith.constant 0 : i32
    return %c0_i32, %c0_i32_0 : i32, i32
  }
  func.func @transform_4(%arg0: i32) -> (i32, i32) {
    %c0_i32 = arith.constant 0 : i32
    %c0_i32_0 = arith.constant 0 : i32
    %c0_i32_1 = arith.constant 0 : i32
    return %c0_i32, %c0_i32_0 : i32, i32
  }
  func.func @transform_5(%arg0: i32) -> (i32, i32) {
    %c0_i32 = arith.constant 0 : i32
    %c0_i32_0 = arith.constant 0 : i32
    %c0_i32_1 = arith.constant 0 : i32
    return %c0_i32, %c0_i32_0 : i32, i32
  }
  func.func @transform_6(%arg0: i32) -> (i32, i32) {
    %c0_i32 = arith.constant 0 : i32
    %c0_i32_0 = arith.constant 0 : i32
    %c0_i32_1 = arith.constant 0 : i32
    return %c0_i32, %c0_i32_0 : i32, i32
  }
  func.func @transform_7(%arg0: i32) -> (i32, i32) {
    %c0_i32 = arith.constant 0 : i32
    %c0_i32_0 = arith.constant 0 : i32
    %c0_i32_1 = arith.constant 0 : i32
    return %c0_i32, %c0_i32_0 : i32, i32
  }
  func.func @transform_8(%arg0: i32) -> (i32, i32, i32) {
    %c0_i32 = arith.constant 0 : i32
    %c0_i32_0 = arith.constant 0 : i32
    %c0_i32_1 = arith.constant 0 : i32
    return %c0_i32, %arg0, %c0_i32_0 : i32, i32, i32
  }
  func.func @transform_9(%arg0: i32) -> (i32, i32) {
    %c0_i32 = arith.constant 0 : i32
    %c0_i32_0 = arith.constant 0 : i32
    return %arg0, %c0_i32 : i32, i32
  }
  func.func @transform_10(%arg0: i32) -> (i32, i32) {
    %c0_i32 = arith.constant 0 : i32
    %c0_i32_0 = arith.constant 0 : i32
    return %arg0, %c0_i32 : i32, i32
  }
}

</mosaic_0001>

<llo_original>
// kernel: a2c_forward.1
$region0: #{a2c_forward.1}
  #allocation0 [shape = 'u32[]', space=smem, size = 0x4, offset = 0x4, fixed_abs, tag = 'smem constant byte address 0x4 - core index']
  #allocation1 [shape = 'u32[144,128]{1,0:T(1,128)}', space=vmem, size = 0x12000, scoped, tag = 'internal scratch']
  #allocation2 [shape = 'f32[64,512]{1,0:T(8,128)}', space=vmem, size = 0x20000, scoped, tag = 'scratch operand']
  %s0 = inlined_call_operand.vmem [shape: f32[8,16,4], index: 0, kind: input, shape index: {}]
  %s1 = inlined_call_operand.vmem [shape: f32[16,48], index: 1, kind: input, shape index: {}, may-alias: {1,9}]
  %s2 = inlined_call_operand.hbm [shape: f32[16,48], index: 2, kind: input, shape index: {}, may-alias: {2,10}]
  %s3 = inlined_call_operand.vmem [shape: f32[4,512], index: 3, kind: input, shape index: {}]
  %s4 = inlined_call_operand.vmem [shape: f32[48,512], index: 4, kind: input, shape index: {}]
  %s5 = inlined_call_operand.vmem [shape: f32[1,512], index: 5, kind: input, shape index: {}]
  %s6 = inlined_call_operand.vmem [shape: f32[48,3], index: 6, kind: input, shape index: {}]
  %s7 = inlined_call_operand.vmem [shape: f32[1,3], index: 7, kind: input, shape index: {}]
  %s8 = inlined_call_operand.vmem [shape: f32[8,16,3], index: 8, kind: output, shape index: {0}]
  %s9 = inlined_call_operand.vmem [shape: f32[16,48], index: 9, kind: output, shape index: {1}, may-alias: {1,9}]
  %s10 = inlined_call_operand.hbm [shape: f32[16,48], index: 10, kind: output, shape index: {2}, may-alias: {2,10}]
  %11 = xla_tuple %s8, %s9, %s10
  %s12 = sld [smem:[#allocation0]]
  $region157: #{a2c_forward.1} parent=0
    _
  %s14 = ssub.s32 1, %s12
  %s15 = scalar_select 0, %s14, %s12
  $region1: #{a2c_forward.1} parent=0
    #allocation3 [shape = 'u8[65536]{0}', space=vmem, size = 0x10000, scoped, tag = 'input window, operand 0']
    #allocation4 [shape = 'u8[8192]{0}', space=vmem, size = 0x2000, scoped, tag = 'input window, operand 2']
    #allocation5 [shape = 's32[2]{0}', space=sflag, size = 0x8, scoped, tag = 'scoped memory for a2c_forward.1']
    #allocation6 [shape = 's32[2]{0}', space=sflag, size = 0x8, scoped, tag = 'scoped memory for a2c_forward.1']
    #allocation7 [shape = 'u8[65536]{0}', space=vmem, size = 0x10000, scoped, tag = 'output window, operand 0']
    #allocation8 [shape = 'u8[8192]{0}', space=vmem, size = 0x2000, scoped, tag = 'output window, operand 2']
    %16 = vsyncpa [#allocation5], 0
    %s17 = scalar_lea.sflag [#allocation5], 1
    %18 = vsyncpa %s17, 0
    %19 = vsyncpa [#allocation6], 0
    %s20 = scalar_lea.sflag [#allocation6], 1
    %21 = vsyncpa %s20, 0
    loop: start=0, step=1, limit=4
    $region2: #{a2c_forward.1} parent=1 // loop_pre_header
      _
    $region3: #{a2c_forward.1} parent=1 // loop_header
      %s23 = sphi 0, %s27
      %p24 = scmp.ge.s32.totalorder %s23, 4
      %s33 = sphi 0, %s35
      %s36 = sphi 0, %s33
      %s37 = sphi 0, %s36
      %s53 = sphi 0, %s37
      %s59 = sphi 0, %s61
      %s62 = sphi 0, %s59
      %s63 = sphi 0, %s62
      %s79 = sphi 0, %s63
      %s85 = sphi 0, %s87
      %s88 = sphi 0, %s85
      %s89 = sphi 0, %s88
      %s105 = sphi 0, %s89
      %s109 = sphi 0, %s109
      %s111 = sphi 0, %s109
      %s112 = sphi 0, %s111
      %s126 = sphi 0, %s112
      %s130 = sphi 0, %s130
      %s132 = sphi 0, %s130
      %s133 = sphi 0, %s132
      %s147 = sphi 0, %s133
      %s151 = sphi 0, %s151
      %s153 = sphi 0, %s151
      %s154 = sphi 0, %s153
      %s168 = sphi 0, %s154
      %s172 = sphi 0, %s172
      %s174 = sphi 0, %s172
      %s175 = sphi 0, %s174
      %s189 = sphi 0, %s175
      %s193 = sphi 0, %s193
      %s195 = sphi 0, %s193
      %s196 = sphi 0, %s195
      %s210 = sphi 0, %s196
      %s216 = sphi 0, %s218
      %s219 = sphi 0, %s216
      %s220 = sphi 0, %s219
      %s236 = sphi 0, %s220
      %s242 = sphi 0, %s244
      %s245 = sphi 0, %s242
      %s246 = sphi 0, %s245
      %s262 = sphi 0, %s246
      %s268 = sphi 0, %s270
      %s271 = sphi 0, %s268
      %s272 = sphi 0, %s271
      %s288 = sphi 0, %s272
    $region4: #{a2c_forward.1} parent=1 // loop_header_branch
      %26 = sbr.rel (%p24) target = $region8
    $region5: #{a2c_forward.1} parent=1 // loop_body
      %s28 = ssub.s32 %s23, 1
      %s29 = ssub.s32 %s23, 2
      %s30 = sadd.s32 %s23, 1
      %s31 = ssub.s32 %s23, %s30
      %p32 = scmp.eq.s32.totalorder %s31, 0
      %s34 = sadd.s32 %s33, 1
      %s35 = scalar_select %p32, %s33, %s34
      %p38 = pneg %p32
      %p39 = scmp.eq.s32.totalorder %s23, 1
      %p40 = por %p38, %p39
      %p41 = scmp.ne.s32.totalorder %s33, %s36
      %p42 = scmp.eq.s32.totalorder %s23, 0
      %p43 = por %p41, %p42
      %p44 = scmp.ne.s32.totalorder %s33, %s36
      %p45 = scmp.eq.s32.totalorder %s28, 1
      %p46 = por %p44, %p45
      %p47 = scmp.ne.s32.totalorder %s36, %s37
      %p48 = scmp.eq.s32.totalorder %s28, 0
      %p49 = por %p47, %p48
      %p50 = scmp.ne.s32.totalorder %s36, %s37
      %p51 = scmp.eq.s32.totalorder %s29, 1
      %p52 = por %p50, %p51
      %p54 = scmp.ne.s32.totalorder %s37, %s53
      %p55 = scmp.eq.s32.totalorder %s29, 0
      %p56 = por %p54, %p55
      %s57 = ssub.s32 %s23, %s30
      %p58 = scmp.eq.s32.totalorder %s57, 0
      %s60 = sadd.s32 %s59, 1
      %s61 = scalar_select %p58, %s59, %s60
      %p64 = pneg %p58
      %p65 = scmp.eq.s32.totalorder %s23, 1
      %p66 = por %p64, %p65
      %p67 = scmp.ne.s32.totalorder %s59, %s62
      %p68 = scmp.eq.s32.totalorder %s23, 0
      %p69 = por %p67, %p68
      %p70 = scmp.ne.s32.totalorder %s59, %s62
      %p71 = scmp.eq.s32.totalorder %s28, 1
      %p72 = por %p70, %p71
      %p73 = scmp.ne.s32.totalorder %s62, %s63
      %p74 = scmp.eq.s32.totalorder %s28, 0
      %p75 = por %p73, %p74
      %p76 = scmp.ne.s32.totalorder %s62, %s63
      %p77 = scmp.eq.s32.totalorder %s29, 1
      %p78 = por %p76, %p77
      %p80 = scmp.ne.s32.totalorder %s63, %s79
      %p81 = scmp.eq.s32.totalorder %s29, 0
      %p82 = por %p80, %p81
      %s83 = ssub.s32 %s23, %s30
      %p84 = scmp.eq.s32.totalorder %s83, 0
      %s86 = sadd.s32 %s85, 1
      %s87 = scalar_select %p84, %s85, %s86
      %p90 = pneg %p84
      %p91 = scmp.eq.s32.totalorder %s23, 1
      %p92 = por %p90, %p91
      %p93 = scmp.ne.s32.totalorder %s85, %s88
      %p94 = scmp.eq.s32.totalorder %s23, 0
      %p95 = por %p93, %p94
      %p96 = scmp.ne.s32.totalorder %s85, %s88
      %p97 = scmp.eq.s32.totalorder %s28, 1
      %p98 = por %p96, %p97
      %p99 = scmp.ne.s32.totalorder %s88, %s89
      %p100 = scmp.eq.s32.totalorder %s28, 0
      %p101 = por %p99, %p100
      %p102 = scmp.ne.s32.totalorder %s88, %s89
      %p103 = scmp.eq.s32.totalorder %s29, 1
      %p104 = por %p102, %p103
      %p106 = scmp.ne.s32.totalorder %s89, %s105
      %p107 = scmp.eq.s32.totalorder %s29, 0
      %p108 = por %p106, %p107
      %s110 = sadd.s32 %s109, 1
      %p113 = scmp.eq.s32.totalorder %s23, 1
      %p114 = scmp.ne.s32.totalorder %s109, %s111
      %p115 = scmp.eq.s32.totalorder %s23, 0
      %p116 = por %p114, %p115
      %p117 = scmp.ne.s32.totalorder %s109, %s111
      %p118 = scmp.eq.s32.totalorder %s28, 1
      %p119 = por %p117, %p118
      %p120 = scmp.ne.s32.totalorder %s111, %s112
      %p121 = scmp.eq.s32.totalorder %s28, 0
      %p122 = por %p120, %p121
      %p123 = scmp.ne.s32.totalorder %s111, %s112
      %p124 = scmp.eq.s32.totalorder %s29, 1
      %p125 = por %p123, %p124
      %p127 = scmp.ne.s32.totalorder %s112, %s126
      %p128 = scmp.eq.s32.totalorder %s29, 0
      %p129 = por %p127, %p128
      %s131 = sadd.s32 %s130, 1
      %p134 = scmp.eq.s32.totalorder %s23, 1
      %p135 = scmp.ne.s32.totalorder %s130, %s132
      %p136 = scmp.eq.s32.totalorder %s23, 0
      %p137 = por %p135, %p136
      %p138 = scmp.ne.s32.totalorder %s130, %s132
      %p139 = scmp.eq.s32.totalorder %s28, 1
      %p140 = por %p138, %p139
      %p141 = scmp.ne.s32.totalorder %s132, %s133
      %p142 = scmp.eq.s32.totalorder %s28, 0
      %p143 = por %p141, %p142
      %p144 = scmp.ne.s32.totalorder %s132, %s133
      %p145 = scmp.eq.s32.totalorder %s29, 1
      %p146 = por %p144, %p145
      %p148 = scmp.ne.s32.totalorder %s133, %s147
      %p149 = scmp.eq.s32.totalorder %s29, 0
      %p150 = por %p148, %p149
      %s152 = sadd.s32 %s151, 1
      %p155 = scmp.eq.s32.totalorder %s23, 1
      %p156 = scmp.ne.s32.totalorder %s151, %s153
      %p157 = scmp.eq.s32.totalorder %s23, 0
      %p158 = por %p156, %p157
      %p159 = scmp.ne.s32.totalorder %s151, %s153
      %p160 = scmp.eq.s32.totalorder %s28, 1
      %p161 = por %p159, %p160
      %p162 = scmp.ne.s32.totalorder %s153, %s154
      %p163 = scmp.eq.s32.totalorder %s28, 0
      %p164 = por %p162, %p163
      %p165 = scmp.ne.s32.totalorder %s153, %s154
      %p166 = scmp.eq.s32.totalorder %s29, 1
      %p167 = por %p165, %p166
      %p169 = scmp.ne.s32.totalorder %s154, %s168
      %p170 = scmp.eq.s32.totalorder %s29, 0
      %p171 = por %p169, %p170
      %s173 = sadd.s32 %s172, 1
      %p176 = scmp.eq.s32.totalorder %s23, 1
      %p177 = scmp.ne.s32.totalorder %s172, %s174
      %p178 = scmp.eq.s32.totalorder %s23, 0
      %p179 = por %p177, %p178
      %p180 = scmp.ne.s32.totalorder %s172, %s174
      %p181 = scmp.eq.s32.totalorder %s28, 1
      %p182 = por %p180, %p181
      %p183 = scmp.ne.s32.totalorder %s174, %s175
      %p184 = scmp.eq.s32.totalorder %s28, 0
      %p185 = por %p183, %p184
      %p186 = scmp.ne.s32.totalorder %s174, %s175
      %p187 = scmp.eq.s32.totalorder %s29, 1
      %p188 = por %p186, %p187
      %p190 = scmp.ne.s32.totalorder %s175, %s189
      %p191 = scmp.eq.s32.totalorder %s29, 0
      %p192 = por %p190, %p191
      %s194 = sadd.s32 %s193, 1
      %p197 = scmp.eq.s32.totalorder %s23, 1
      %p198 = scmp.ne.s32.totalorder %s193, %s195
      %p199 = scmp.eq.s32.totalorder %s23, 0
      %p200 = por %p198, %p199
      %p201 = scmp.ne.s32.totalorder %s193, %s195
      %p202 = scmp.eq.s32.totalorder %s28, 1
      %p203 = por %p201, %p202
      %p204 = scmp.ne.s32.totalorder %s195, %s196
      %p205 = scmp.eq.s32.totalorder %s28, 0
      %p206 = por %p204, %p205
      %p207 = scmp.ne.s32.totalorder %s195, %s196
      %p208 = scmp.eq.s32.totalorder %s29, 1
      %p209 = por %p207, %p208
      %p211 = scmp.ne.s32.totalorder %s196, %s210
      %p212 = scmp.eq.s32.totalorder %s29, 0
      %p213 = por %p211, %p212
      %s214 = ssub.s32 %s23, %s30
      %p215 = scmp.eq.s32.totalorder %s214, 0
      %s217 = sadd.s32 %s216, 1
      %s218 = scalar_select %p215, %s216, %s217
      %p221 = pneg %p215
      %p222 = scmp.eq.s32.totalorder %s23, 1
      %p223 = por %p221, %p222
      %p224 = scmp.ne.s32.totalorder %s216, %s219
      %p225 = scmp.eq.s32.totalorder %s23, 0
      %p226 = por %p224, %p225
      %p227 = scmp.ne.s32.totalorder %s216, %s219
      %p228 = scmp.eq.s32.totalorder %s28, 1
      %p229 = por %p227, %p228
      %p230 = scmp.ne.s32.totalorder %s219, %s220
      %p231 = scmp.eq.s32.totalorder %s28, 0
      %p232 = por %p230, %p231
      %p233 = scmp.ne.s32.totalorder %s219, %s220
      %p234 = scmp.eq.s32.totalorder %s29, 1
      %p235 = por %p233, %p234
      %p237 = scmp.ne.s32.totalorder %s220, %s236
      %p238 = scmp.eq.s32.totalorder %s29, 0
      %p239 = por %p237, %p238
      %s240 = ssub.s32 %s23, %s30
      %p241 = scmp.eq.s32.totalorder %s240, 0
      %s243 = sadd.s32 %s242, 1
      %s244 = scalar_select %p241, %s242, %s243
      %p247 = pneg %p241
      %p248 = scmp.eq.s32.totalorder %s23, 1
      %p249 = por %p247, %p248
      %p250 = scmp.ne.s32.totalorder %s242, %s245
      %p251 = scmp.eq.s32.totalorder %s23, 0
      %p252 = por %p250, %p251
      %p253 = scmp.ne.s32.totalorder %s242, %s245
      %p254 = scmp.eq.s32.totalorder %s28, 1
      %p255 = por %p253, %p254
      %p256 = scmp.ne.s32.totalorder %s245, %s246
      %p257 = scmp.eq.s32.totalorder %s28, 0
      %p258 = por %p256, %p257
      %p259 = scmp.ne.s32.totalorder %s245, %s246
      %p260 = scmp.eq.s32.totalorder %s29, 1
      %p261 = por %p259, %p260
      %p263 = scmp.ne.s32.totalorder %s246, %s262
      %p264 = scmp.eq.s32.totalorder %s29, 0
      %p265 = por %p263, %p264
      %s266 = ssub.s32 %s23, %s30
      %p267 = scmp.eq.s32.totalorder %s266, 0
      %s269 = sadd.s32 %s268, 1
      %s270 = scalar_select %p267, %s268, %s269
      %p273 = pneg %p267
      %p274 = scmp.eq.s32.totalorder %s23, 1
      %p275 = por %p273, %p274
      %p276 = scmp.ne.s32.totalorder %s268, %s271
      %p277 = scmp.eq.s32.totalorder %s23, 0
      %p278 = por %p276, %p277
      %p279 = scmp.ne.s32.totalorder %s268, %s271
      %p280 = scmp.eq.s32.totalorder %s28, 1
      %p281 = por %p279, %p280
      %p282 = scmp.ne.s32.totalorder %s271, %s272
      %p283 = scmp.eq.s32.totalorder %s28, 0
      %p284 = por %p282, %p283
      %p285 = scmp.ne.s32.totalorder %s271, %s272
      %p286 = scmp.eq.s32.totalorder %s29, 1
      %p287 = por %p285, %p286
      %p289 = scmp.ne.s32.totalorder %s272, %s288
      %p290 = scmp.eq.s32.totalorder %s29, 0
      %p291 = por %p289, %p290
      %p292 = scmp.le.s32.totalorder 1, %s23
      %p293 = scmp.lt.s32.totalorder %s23, 3
      %p294 = pnand %p292, %p293
      %p295 = pneg %p294
      // Predicated region
      $region9: #{a2c_forward.1} parent=5 // pred_check
        _
      $region10: #{a2c_forward.1} parent=5 // pred_check_branch
        %297 = sbr.rel (%p294) target = $region12
      $region11: #{a2c_forward.1} parent=5 // pred_region
        %s298 = ssub.s32 %s23, 1
        // Predicated region
        $region13: #{a2c_forward.1} parent=11 // pred_check
          %p299 = pneg %p122
        $region14: #{a2c_forward.1} parent=11 // pred_check_branch
          %301 = sbr.rel (%p299) target = $region16
        $region15: #{a2c_forward.1} parent=11 // pred_region
          _
        $region16: #{a2c_forward.1} parent=11 // pred_fallthru
          _
        // Predicated region
        $region17: #{a2c_forward.1} parent=11 // pred_check
          %p302 = pneg %p143
        $region18: #{a2c_forward.1} parent=11 // pred_check_branch
          %304 = sbr.rel (%p302) target = $region20
        $region19: #{a2c_forward.1} parent=11 // pred_region
          _
        $region20: #{a2c_forward.1} parent=11 // pred_fallthru
          _
        // Predicated region
        $region21: #{a2c_forward.1} parent=11 // pred_check
          %p305 = pneg %p164
        $region22: #{a2c_forward.1} parent=11 // pred_check_branch
          %307 = sbr.rel (%p305) target = $region24
        $region23: #{a2c_forward.1} parent=11 // pred_region
          _
        $region24: #{a2c_forward.1} parent=11 // pred_fallthru
          _
        // Predicated region
        $region25: #{a2c_forward.1} parent=11 // pred_check
          %p308 = pneg %p185
        $region26: #{a2c_forward.1} parent=11 // pred_check_branch
          %310 = sbr.rel (%p308) target = $region28
        $region27: #{a2c_forward.1} parent=11 // pred_region
          _
        $region28: #{a2c_forward.1} parent=11 // pred_fallthru
          _
        // Predicated region
        $region29: #{a2c_forward.1} parent=11 // pred_check
          %p311 = pneg %p206
        $region30: #{a2c_forward.1} parent=11 // pred_check_branch
          %313 = sbr.rel (%p311) target = $region32
        $region31: #{a2c_forward.1} parent=11 // pred_region
          _
        $region32: #{a2c_forward.1} parent=11 // pred_fallthru
          _
      $region12: #{a2c_forward.1} parent=5 // pred_fallthru
        _
      %p314 = scmp.lt.s32.totalorder %s23, 2
      // Predicated region
      $region33: #{a2c_forward.1} parent=5 // pred_check
        %p315 = pneg %p314
      $region34: #{a2c_forward.1} parent=5 // pred_check_branch
        %317 = sbr.rel (%p315) target = $region36
      $region35: #{a2c_forward.1} parent=5 // pred_region
        // Predicated region
        $region37: #{a2c_forward.1} parent=35 // pred_check
          %p318 = pneg %p43
        $region38: #{a2c_forward.1} parent=35 // pred_check_branch
          %320 = sbr.rel (%p318) target = $region40
        $region39: #{a2c_forward.1} parent=35 // pred_region
          %s321 = sand.u32 %s33, 1
          %s322 = sand.u32 %s33, 1
          %s323 = smul.addr %s322, 64
          %s324 = scalar_lea.vmem [#allocation3], %s323
          %s325 = smul.addr %s23, 8
          %s326 = scalar_lea.vmem %s0, %s325
          // Predicated region
          $region41: #{a2c_forward.1} parent=39 // pred_check
            _
          $region42: #{a2c_forward.1} parent=39 // pred_check_branch
            %328 = sbr.rel (0) target = $region44
          $region43: #{a2c_forward.1} parent=39 // pred_region
            // Predicated region
            $region45: #{a2c_forward.1} parent=43 // pred_check
              _
            $region46: #{a2c_forward.1} parent=43 // pred_check_branch
              %330 = sbr.rel (0) target = $region48
            $region47: #{a2c_forward.1} parent=43 // pred_region
              // Predicated region
              $region60: #{a2c_forward.1} parent=47 // pred_check
                _
              $region61: #{a2c_forward.1} parent=47 // pred_check_branch
                %359 = sbr.rel (0) target = $region63
              $region62: #{a2c_forward.1} parent=47 // pred_region
                loop: start=0, step=1, limit=1
                $region64: #{a2c_forward.1} parent=62 // loop_pre_header
                  _
                $region65: #{a2c_forward.1} parent=62 // loop_header
                  %s361 = sphi 0, %s365
                  %p362 = scmp.ge.s32.totalorder %s361, 1
                  %s366 = sphi %s326, %s326
                  %s367 = sphi %s324, %s324
                $region66: #{a2c_forward.1} parent=62 // loop_header_branch
                  %364 = sbr.rel (%p362) target = $region70
                $region67: #{a2c_forward.1} parent=62 // loop_body
                  %v368 = vld [vmem:[%s366] sm:$0xff]
                  %369 = vst [vmem:[%s367] sm:$0xff] %v368
                  %v370 = vld [vmem:[%s366 + $0x10] sm:$0xff]
                  %371 = vst [vmem:[%s367 + $0x8] sm:$0xff] %v370
                  %v372 = vld [vmem:[%s366 + $0x20] sm:$0xff]
                  %373 = vst [vmem:[%s367 + $0x10] sm:$0xff] %v372
                  %v374 = vld [vmem:[%s366 + $0x30] sm:$0xff]
                  %375 = vst [vmem:[%s367 + $0x18] sm:$0xff] %v374
                  %v376 = vld [vmem:[%s366 + $0x40] sm:$0xff]
                  %377 = vst [vmem:[%s367 + $0x20] sm:$0xff] %v376
                  %v378 = vld [vmem:[%s366 + $0x50] sm:$0xff]
                  %379 = vst [vmem:[%s367 + $0x28] sm:$0xff] %v378
                  %v380 = vld [vmem:[%s366 + $0x60] sm:$0xff]
                  %381 = vst [vmem:[%s367 + $0x30] sm:$0xff] %v380
                  %v382 = vld [vmem:[%s366 + $0x70] sm:$0xff]
                  %383 = vst [vmem:[%s367 + $0x38] sm:$0xff] %v382
                $region68: #{a2c_forward.1} parent=62 // loop_footer
                  %s365 = sadd.s32 1, %s361
                $region69: #{a2c_forward.1} parent=62 // loop_footer_branch
                  %360 = sbr.rel target = $region65
                $region70: #{a2c_forward.1} parent=62 // loop_exit
                  _
              $region63: #{a2c_forward.1} parent=47 // pred_fallthru
                _
              // Predicated region
              $region71: #{a2c_forward.1} parent=47 // pred_check
                _
              $region72: #{a2c_forward.1} parent=47 // pred_check_branch
                %385 = sbr.rel target = $region74
              $region73: #{a2c_forward.1} parent=47 // pred_region
                _
              $region74: #{a2c_forward.1} parent=47 // pred_fallthru
                _
            $region48: #{a2c_forward.1} parent=43 // pred_fallthru
              _
            // Predicated region
            $region49: #{a2c_forward.1} parent=43 // pred_check
              _
            $region50: #{a2c_forward.1} parent=43 // pred_check_branch
              %332 = sbr.rel target = $region52
            $region51: #{a2c_forward.1} parent=43 // pred_region
              loop: start=0, step=1, limit=1
              $region53: #{a2c_forward.1} parent=51 // loop_pre_header
                _
              $region54: #{a2c_forward.1} parent=51 // loop_header
                %s335 = sphi 0, %s339
                %p336 = scmp.ge.s32.totalorder %s335, 1
                %s340 = sphi %s326, %s326
                %s341 = sphi %s324, %s324
              $region55: #{a2c_forward.1} parent=51 // loop_header_branch
                %338 = sbr.rel (%p336) target = $region59
              $region56: #{a2c_forward.1} parent=51 // loop_body
                %v342 = vld [vmem:[%s340] sm:$0xff]
                %343 = vst [vmem:[%s341] sm:$0xff] %v342
                %v344 = vld [vmem:[%s340 + $0x10] sm:$0xff]
                %345 = vst [vmem:[%s341 + $0x8] sm:$0xff] %v344
                %v346 = vld [vmem:[%s340 + $0x20] sm:$0xff]
                %347 = vst [vmem:[%s341 + $0x10] sm:$0xff] %v346
                %v348 = vld [vmem:[%s340 + $0x30] sm:$0xff]
                %349 = vst [vmem:[%s341 + $0x18] sm:$0xff] %v348
                %v350 = vld [vmem:[%s340 + $0x40] sm:$0xff]
                %351 = vst [vmem:[%s341 + $0x20] sm:$0xff] %v350
                %v352 = vld [vmem:[%s340 + $0x50] sm:$0xff]
                %353 = vst [vmem:[%s341 + $0x28] sm:$0xff] %v352
                %v354 = vld [vmem:[%s340 + $0x60] sm:$0xff]
                %355 = vst [vmem:[%s341 + $0x30] sm:$0xff] %v354
                %v356 = vld [vmem:[%s340 + $0x70] sm:$0xff]
                %357 = vst [vmem:[%s341 + $0x38] sm:$0xff] %v356
              $region57: #{a2c_forward.1} parent=51 // loop_footer
                %s339 = sadd.s32 1, %s335
              $region58: #{a2c_forward.1} parent=51 // loop_footer_branch
                %334 = sbr.rel target = $region54
              $region59: #{a2c_forward.1} parent=51 // loop_exit
                _
            $region52: #{a2c_forward.1} parent=43 // pred_fallthru
              _
          $region44: #{a2c_forward.1} parent=39 // pred_fallthru
            _
          %386 = vnop
        $region40: #{a2c_forward.1} parent=35 // pred_fallthru
          _
        // Predicated region
        $region75: #{a2c_forward.1} parent=35 // pred_check
          %p387 = pneg %p69
        $region76: #{a2c_forward.1} parent=35 // pred_check_branch
          %389 = sbr.rel (%p387) target = $region78
        $region77: #{a2c_forward.1} parent=35 // pred_region
          %p390 = scmp.lt.s32.totalorder %s23, 1
          %s391 = scalar_select %p390, %s23, 1
          %s392 = smul.addr %s391, 8
          %s393 = scalar_lea.vmem %s1, %s392
        $region78: #{a2c_forward.1} parent=35 // pred_fallthru
          _
        // Predicated region
        $region79: #{a2c_forward.1} parent=35 // pred_check
          %p394 = pneg %p95
        $region80: #{a2c_forward.1} parent=35 // pred_check_branch
          %396 = sbr.rel (%p394) target = $region82
        $region81: #{a2c_forward.1} parent=35 // pred_region
          %s397 = sand.u32 %s85, 1
          %s398 = scalar_lea.sflag [#allocation5], %s397
          %s399 = sand.u32 %s85, 1
          %s400 = smul.addr %s399, 8
          %s401 = scalar_lea.vmem [#allocation4], %s400
          %s403 = ssub.s32 128, 128
          %404 = vsyncadd %s398, %s403
          %s405 = smul.addr %s23, 128
          %s406 = scalar_lea.hbm %s2, %s405
          %s408 = sshll.u32 %s401, 4
          %s409 = int_to_ptr.vmem [resolvable:$true] %s408
          %411 = dma.hbm_to_vmem [thread:$0]  %s406, 128, %s409, %s398
        $region82: #{a2c_forward.1} parent=35 // pred_fallthru
          _
      $region36: #{a2c_forward.1} parent=5 // pred_fallthru
        _
      %p412 = scmp.le.s32.totalorder 1, %s23
      %p413 = scmp.lt.s32.totalorder %s23, 3
      %p414 = pnand %p412, %p413
      %p415 = pneg %p414
      // Predicated region
      $region83: #{a2c_forward.1} parent=5 // pred_check
        _
      $region84: #{a2c_forward.1} parent=5 // pred_check_branch
        %417 = sbr.rel (%p414) target = $region86
      $region85: #{a2c_forward.1} parent=5 // pred_region
        %s418 = ssub.s32 %s23, 1
        %s419 = sand.u32 %s36, 1
        %s420 = sand.u32 %s36, 1
        %s421 = smul.addr %s420, 64
        %s422 = scalar_lea.vmem [#allocation3], %s421
        // Predicated region
        $region87: #{a2c_forward.1} parent=85 // pred_check
          %p423 = pneg %p49
        $region88: #{a2c_forward.1} parent=85 // pred_check_branch
          %425 = sbr.rel (%p423) target = $region90
        $region89: #{a2c_forward.1} parent=85 // pred_region
          _
        $region90: #{a2c_forward.1} parent=85 // pred_fallthru
          _
        %s426 = sand.u32 %s88, 1
        %s427 = scalar_lea.sflag [#allocation5], %s426
        %s428 = sand.u32 %s88, 1
        %s429 = smul.addr %s428, 8
        %s430 = scalar_lea.vmem [#allocation4], %s429
        // Predicated region
        $region91: #{a2c_forward.1} parent=85 // pred_check
          %p431 = pneg %p101
        $region92: #{a2c_forward.1} parent=85 // pred_check_branch
          %433 = sbr.rel (%p431) target = $region94
        $region93: #{a2c_forward.1} parent=85 // pred_region
          %434 = dma.done %s427, 128
        $region94: #{a2c_forward.1} parent=85 // pred_fallthru
          _
        %s435 = sand.u32 %s36, 1
        %s436 = sand.u32 %s36, 1
        %s437 = smul.addr %s436, 64
        %s438 = scalar_lea.vmem [#allocation3], %s437
        %p439 = pneg %p49
        %p440 = pneg %p46
        %p441 = scmp.lt.s32.totalorder %s28, 1
        %s442 = scalar_select %p441, %s28, 1
        %s443 = smul.addr %s442, 8
        %s444 = scalar_lea.vmem %s1, %s443
        %p445 = pneg %p75
        %p446 = pneg %p72
        %s447 = sand.u32 %s88, 1
        %s448 = scalar_lea.sflag [#allocation5], %s447
        %s449 = sand.u32 %s88, 1
        %s450 = smul.addr %s449, 8
        %s451 = scalar_lea.vmem [#allocation4], %s450
        %p452 = pneg %p101
        %p453 = pneg %p98
        %p454 = pneg %p122
        %p455 = pneg %p119
        %p456 = pneg %p143
        %p457 = pneg %p140
        %p458 = pneg %p164
        %p459 = pneg %p161
        %p460 = pneg %p185
        %p461 = pneg %p182
        %p462 = pneg %p206
        %p463 = pneg %p203
        %p464 = pneg %p232
        %p465 = pneg %p229
        %s466 = sand.u32 %s219, 1
        %s467 = sand.u32 %s219, 1
        %s468 = smul.addr %s467, 64
        %s469 = scalar_lea.vmem [#allocation7], %s468
        %p470 = pneg %p258
        %p471 = pneg %p255
        %p472 = scmp.lt.s32.totalorder %s28, 1
        %s473 = scalar_select %p472, %s28, 1
        %s474 = smul.addr %s473, 8
        %s475 = scalar_lea.vmem %s9, %s474
        %p476 = pneg %p284
        %p477 = pneg %p281
        %s478 = sand.u32 %s271, 1
        %s479 = scalar_lea.sflag [#allocation6], %s478
        %s480 = sand.u32 %s271, 1
        %s481 = smul.addr %s480, 8
        %s482 = scalar_lea.vmem [#allocation8], %s481
        %p483 = scmp.lt.s32.totalorder %s28, 1
        %s484 = scalar_select %p483, %s28, 1
        %s485 = smul.addr %s484, 8
        %s486 = scalar_lea.vmem %s1, %s485
        %p487 = scmp.lt.s32.totalorder %s28, 1
        %s488 = scalar_select %p487, %s28, 1
        %s489 = smul.addr %s488, 8
        %s490 = scalar_lea.vmem %s9, %s489
        %v491 = vld [vmem:[%s422] sm:$0xff]
        %v492 = vld [vmem:[%s422 + $0x8] sm:$0xff]
        %v493 = vld [vmem:[%s422 + $0x10] sm:$0xff]
        %v494 = vld [vmem:[%s422 + $0x18] sm:$0xff]
        %v495 = vld [vmem:[%s422 + $0x20] sm:$0xff]
        %v496 = vld [vmem:[%s422 + $0x28] sm:$0xff]
        %v497 = vld [vmem:[%s422 + $0x30] sm:$0xff]
        %v498 = vld [vmem:[%s422 + $0x38] sm:$0xff]
        %v499 = vld [vmem:[%s3] sm:$0xff]
        %v500 = vld [vmem:[%s3 + $0x8] sm:$0xff]
        %v501 = vld [vmem:[%s5] sm:$0xf]
        %v503 = vlaneseq
        %v504 = vshrl.u32 %v503, 7
        %v505 = vsub.s32 0, %v504
        %v506 = vrot.slane %v501, %v505
        %v507 = vlaneseq
        %v508 = vshrl.u32 %v507, 7
        %v509 = vsub.s32 1, %v508
        %v510 = vrot.slane %v501, %v509
        %v511 = vlaneseq
        %v512 = vshrl.u32 %v511, 7
        %v513 = vsub.s32 2, %v512
        %v514 = vrot.slane %v501, %v513
        %v515 = vlaneseq
        %v516 = vshrl.u32 %v515, 7
        %v517 = vsub.s32 3, %v516
        %v518 = vrot.slane %v501, %v517
        %v525 = vcombine.high %v499, %v499
        %v526 = vcombine.high %v500, %v500
        %vm527 = vcmask 31744
        %v529 = vsel %vm527, %v491, 0
        %v532 = vsel %vm527, %v492, 0
        %v535 = vsel %vm527, %v493, 0
        %v538 = vsel %vm527, %v494, 0
        %v541 = vsel %vm527, %v495, 0
        %v544 = vsel %vm527, %v496, 0
        %v547 = vsel %vm527, %v497, 0
        %v550 = vsel %vm527, %v498, 0
        %vm552 = vcmask 1043456
        %v553 = vsel %vm552, %v499, 0
        %v555 = vsel %vm552, %v525, 0
        %v557 = vsel %vm552, %v500, 0
        %v559 = vsel %vm552, %v526, 0
        %561 = vmatprep.subr.mxu0 %v555
        %562 = vmatpush1.msra.mxu0 %v553
        %563 = vmatprep.subr.mxu0 0.0
        %564 = vmatpush1.msra.mxu0 0.0
        %565 = vmatprep.subr.mxu0 0.0
        %566 = vmatpush1.msra.mxu0 0.0
        %567 = vmatprep.subr.mxu0 0.0
        %568 = vmatpush1.msra.mxu0 0.0
        %569 = vmatprep.subr.mxu0 0.0
        %570 = vmatpush1.msra.mxu0 0.0
        %571 = vmatprep.subr.mxu0 0.0
        %572 = vmatpush1.msra.mxu0 0.0
        %573 = vmatprep.subr.mxu0 0.0
        %574 = vmatpush1.msra.mxu0 0.0
        %575 = vmatprep.subr.mxu0 0.0
        %576 = vmatpush1.msra.mxu0 0.0
        %577 = vmatprep.subr.mxu0 0.0
        %578 = vmatpush1.msra.mxu0 0.0
        %579 = vmatprep.subr.mxu0 0.0
        %580 = vmatpush1.msra.mxu0 0.0
        %581 = vmatprep.subr.mxu0 0.0
        %582 = vmatpush1.msra.mxu0 0.0
        %583 = vmatprep.subr.mxu0 0.0
        %584 = vmatpush1.msra.mxu0 0.0
        %585 = vmatprep.subr.mxu0 0.0
        %586 = vmatpush1.msra.mxu0 0.0
        %587 = vmatprep.subr.mxu0 0.0
        %588 = vmatpush1.msra.mxu0 0.0
        %589 = vmatprep.subr.mxu0 0.0
        %590 = vmatpush1.msra.mxu0 0.0
        %591 = vmatprep.subr.mxu0 0.0
        %592 = vmatpush1.msra.mxu0 0.0
        %593 = vmatprep.subr.mxu0 0.0
        %594 = vmatpush1.msra.mxu0 0.0
        %595 = vmatprep.subr.mxu0 0.0
        %596 = vmatpush1.msra.mxu0 0.0
        %597 = vmatprep.subr.mxu0 0.0
        %598 = vmatpush1.msra.mxu0 0.0
        %599 = vmatprep.subr.mxu0 0.0
        %600 = vmatpush1.msra.mxu0 0.0
        %601 = vmatprep.subr.mxu0 0.0
        %602 = vmatpush1.msra.mxu0 0.0
        %603 = vmatprep.subr.mxu0 0.0
        %604 = vmatpush1.msra.mxu0 0.0
        %605 = vmatprep.subr.mxu0 0.0
        %606 = vmatpush1.msra.mxu0 0.0
        %607 = vmatprep.subr.mxu0 0.0
        %608 = vmatpush1.msra.mxu0 0.0
        %609 = vmatprep.subr.mxu0 0.0
        %610 = vmatpush1.msra.mxu0 0.0
        %611 = vmatprep.subr.mxu0 0.0
        %612 = vmatpush1.msra.mxu0 0.0
        %613 = vmatprep.subr.mxu0 0.0
        %614 = vmatpush1.msra.mxu0 0.0
        %615 = vmatprep.subr.mxu0 0.0
        %616 = vmatpush1.msra.mxu0 0.0
        %617 = vmatprep.subr.mxu0 0.0
        %618 = vmatpush1.msra.mxu0 0.0
        %619 = vmatprep.subr.mxu0 0.0
        %620 = vmatpush1.msra.mxu0 0.0
        %621 = vmatprep.subr.mxu0 0.0
        %622 = vmatpush1.msra.mxu0 0.0
        %623 = vmatprep.subr.mxu0 0.0
        %624 = vmatpush1.msra.mxu0 0.0
        %625 = vmatprep.mubr.f32.mxu0 0.0
        %626 = vmatmul.mubr.f32.gmra.mrb[0].mxu0 %v529
        %v627 = vpop.f32.mrb[0].mxu0
        %v628 = vadd.f32 %v506, %v627
        %v629 = vpop.f32.mrb[0].mxu0
        %v630 = vadd.f32 %v510, %v629
        %631 = vmatprep.mubr.f32.mxu0 0.0
        %632 = vmatmul.mubr.f32.gmra.mrb[0].mxu0 %v532
        %v633 = vpop.f32.mrb[0].mxu0
        %v634 = vadd.f32 %v506, %v633
        %v635 = vpop.f32.mrb[0].mxu0
        %v636 = vadd.f32 %v510, %v635
        %637 = vmatprep.mubr.f32.mxu0 0.0
        %638 = vmatmul.mubr.f32.gmra.mrb[0].mxu0 %v535
        %v639 = vpop.f32.mrb[0].mxu0
        %v640 = vadd.f32 %v506, %v639
        %v641 = vpop.f32.mrb[0].mxu0
        %v642 = vadd.f32 %v510, %v641
        %643 = vmatprep.mubr.f32.mxu0 0.0
        %644 = vmatmul.mubr.f32.gmra.mrb[0].mxu0 %v538
        %v645 = vpop.f32.mrb[0].mxu0
        %v646 = vadd.f32 %v506, %v645
        %v647 = vpop.f32.mrb[0].mxu0
        %v648 = vadd.f32 %v510, %v647
        %649 = vmatprep.mubr.f32.mxu0 0.0
        %650 = vmatmul.mubr.f32.gmra.mrb[0].mxu0 %v541
        %v651 = vpop.f32.mrb[0].mxu0
        %v652 = vadd.f32 %v506, %v651
        %v653 = vpop.f32.mrb[0].mxu0
        %v654 = vadd.f32 %v510, %v653
        %655 = vmatprep.mubr.f32.mxu0 0.0
        %656 = vmatmul.mubr.f32.gmra.mrb[0].mxu0 %v544
        %v657 = vpop.f32.mrb[0].mxu0
        %v658 = vadd.f32 %v506, %v657
        %v659 = vpop.f32.mrb[0].mxu0
        %v660 = vadd.f32 %v510, %v659
        %661 = vmatprep.mubr.f32.mxu0 0.0
        %662 = vmatmul.mubr.f32.gmra.mrb[0].mxu0 %v547
        %v663 = vpop.f32.mrb[0].mxu0
        %v664 = vadd.f32 %v506, %v663
        %v665 = vpop.f32.mrb[0].mxu0
        %v666 = vadd.f32 %v510, %v665
        %667 = vmatprep.mubr.f32.mxu0 0.0
        %668 = vmatmul.mubr.f32.gmra.mrb[0].mxu0 %v550
        %v669 = vpop.f32.mrb[0].mxu0
        %v670 = vadd.f32 %v506, %v669
        %v671 = vpop.f32.mrb[0].mxu0
        %v672 = vadd.f32 %v510, %v671
        %673 = vdwg.mxu0
        %674 = vmatprep.subr.mxu0 %v559
        %675 = vmatpush1.msra.mxu0 %v557
        %676 = vmatprep.subr.mxu0 0.0
        %677 = vmatpush1.msra.mxu0 0.0
        %678 = vmatprep.subr.mxu0 0.0
        %679 = vmatpush1.msra.mxu0 0.0
        %680 = vmatprep.subr.mxu0 0.0
        %681 = vmatpush1.msra.mxu0 0.0
        %682 = vmatprep.subr.mxu0 0.0
        %683 = vmatpush1.msra.mxu0 0.0
        %684 = vmatprep.subr.mxu0 0.0
        %685 = vmatpush1.msra.mxu0 0.0
        %686 = vmatprep.subr.mxu0 0.0
        %687 = vmatpush1.msra.mxu0 0.0
        %688 = vmatprep.subr.mxu0 0.0
        %689 = vmatpush1.msra.mxu0 0.0
        %690 = vmatprep.subr.mxu0 0.0
        %691 = vmatpush1.msra.mxu0 0.0
        %692 = vmatprep.subr.mxu0 0.0
        %693 = vmatpush1.msra.mxu0 0.0
        %694 = vmatprep.subr.mxu0 0.0
        %695 = vmatpush1.msra.mxu0 0.0
        %696 = vmatprep.subr.mxu0 0.0
        %697 = vmatpush1.msra.mxu0 0.0
        %698 = vmatprep.subr.mxu0 0.0
        %699 = vmatpush1.msra.mxu0 0.0
        %700 = vmatprep.subr.mxu0 0.0
        %701 = vmatpush1.msra.mxu0 0.0
        %702 = vmatprep.subr.mxu0 0.0
        %703 = vmatpush1.msra.mxu0 0.0
        %704 = vmatprep.subr.mxu0 0.0
        %705 = vmatpush1.msra.mxu0 0.0
        %706 = vmatprep.subr.mxu0 0.0
        %707 = vmatpush1.msra.mxu0 0.0
        %708 = vmatprep.subr.mxu0 0.0
        %709 = vmatpush1.msra.mxu0 0.0
        %710 = vmatprep.subr.mxu0 0.0
        %711 = vmatpush1.msra.mxu0 0.0
        %712 = vmatprep.subr.mxu0 0.0
        %713 = vmatpush1.msra.mxu0 0.0
        %714 = vmatprep.subr.mxu0 0.0
        %715 = vmatpush1.msra.mxu0 0.0
        %716 = vmatprep.subr.mxu0 0.0
        %717 = vmatpush1.msra.mxu0 0.0
        %718 = vmatprep.subr.mxu0 0.0
        %719 = vmatpush1.msra.mxu0 0.0
        %720 = vmatprep.subr.mxu0 0.0
        %721 = vmatpush1.msra.mxu0 0.0
        %722 = vmatprep.subr.mxu0 0.0
        %723 = vmatpush1.msra.mxu0 0.0
        %724 = vmatprep.subr.mxu0 0.0
        %725 = vmatpush1.msra.mxu0 0.0
        %726 = vmatprep.subr.mxu0 0.0
        %727 = vmatpush1.msra.mxu0 0.0
        %728 = vmatprep.subr.mxu0 0.0
        %729 = vmatpush1.msra.mxu0 0.0
        %730 = vmatprep.subr.mxu0 0.0
        %731 = vmatpush1.msra.mxu0 0.0
        %732 = vmatprep.subr.mxu0 0.0
        %733 = vmatpush1.msra.mxu0 0.0
        %734 = vmatprep.subr.mxu0 0.0
        %735 = vmatpush1.msra.mxu0 0.0
        %736 = vmatprep.subr.mxu0 0.0
        %737 = vmatpush1.msra.mxu0 0.0
        %738 = vmatprep.mubr.f32.mxu0 0.0
        %739 = vmatmul.mubr.f32.gmra.mrb[0].mxu0 %v529
        %v740 = vpop.f32.mrb[0].mxu0
        %v741 = vadd.f32 %v514, %v740
        %v742 = vpop.f32.mrb[0].mxu0
        %v743 = vadd.f32 %v518, %v742
        %744 = vmatprep.mubr.f32.mxu0 0.0
        %745 = vmatmul.mubr.f32.gmra.mrb[0].mxu0 %v532
        %v746 = vpop.f32.mrb[0].mxu0
        %v747 = vadd.f32 %v514, %v746
        %v748 = vpop.f32.mrb[0].mxu0
        %v749 = vadd.f32 %v518, %v748
        %750 = vmatprep.mubr.f32.mxu0 0.0
        %751 = vmatmul.mubr.f32.gmra.mrb[0].mxu0 %v535
        %v752 = vpop.f32.mrb[0].mxu0
        %v753 = vadd.f32 %v514, %v752
        %v754 = vpop.f32.mrb[0].mxu0
        %v755 = vadd.f32 %v518, %v754
        %756 = vmatprep.mubr.f32.mxu0 0.0
        %757 = vmatmul.mubr.f32.gmra.mrb[0].mxu0 %v538
        %v758 = vpop.f32.mrb[0].mxu0
        %v759 = vadd.f32 %v514, %v758
        %v760 = vpop.f32.mrb[0].mxu0
        %v761 = vadd.f32 %v518, %v760
        %762 = vmatprep.mubr.f32.mxu0 0.0
        %763 = vmatmul.mubr.f32.gmra.mrb[0].mxu0 %v541
        %v764 = vpop.f32.mrb[0].mxu0
        %v765 = vadd.f32 %v514, %v764
        %v766 = vpop.f32.mrb[0].mxu0
        %v767 = vadd.f32 %v518, %v766
        %768 = vmatprep.mubr.f32.mxu0 0.0
        %769 = vmatmul.mubr.f32.gmra.mrb[0].mxu0 %v544
        %v770 = vpop.f32.mrb[0].mxu0
        %v771 = vadd.f32 %v514, %v770
        %v772 = vpop.f32.mrb[0].mxu0
        %v773 = vadd.f32 %v518, %v772
        %774 = vmatprep.mubr.f32.mxu0 0.0
        %775 = vmatmul.mubr.f32.gmra.mrb[0].mxu0 %v547
        %v776 = vpop.f32.mrb[0].mxu0
        %v777 = vadd.f32 %v514, %v776
        %v778 = vpop.f32.mrb[0].mxu0
        %v779 = vadd.f32 %v518, %v778
        %780 = vmatprep.mubr.f32.mxu0 0.0
        %781 = vmatmul.mubr.f32.gmra.mrb[0].mxu0 %v550
        %v782 = vpop.f32.mrb[0].mxu0
        %v783 = vadd.f32 %v514, %v782
        %v784 = vpop.f32.mrb[0].mxu0
        %v785 = vadd.f32 %v518, %v784
        %786 = vdwg.mxu0
        %787 = vst [vmem:[#allocation2] sm:$0xff] %v628
        %788 = vst [vmem:[#allocation2 + $0x8] sm:$0xff] %v630
        %789 = vst [vmem:[#allocation2 + $0x10] sm:$0xff] %v741
        %790 = vst [vmem:[#allocation2 + $0x18] sm:$0xff] %v743
        %791 = vst [vmem:[#allocation2 + $0x20] sm:$0xff] %v634
        %792 = vst [vmem:[#allocation2 + $0x28] sm:$0xff] %v636
        %793 = vst [vmem:[#allocation2 + $0x30] sm:$0xff] %v747
        %794 = vst [vmem:[#allocation2 + $0x38] sm:$0xff] %v749
        %795 = vst [vmem:[#allocation2 + $0x40] sm:$0xff] %v640
        %796 = vst [vmem:[#allocation2 + $0x48] sm:$0xff] %v642
        %797 = vst [vmem:[#allocation2 + $0x50] sm:$0xff] %v753
        %798 = vst [vmem:[#allocation2 + $0x58] sm:$0xff] %v755
        %799 = vst [vmem:[#allocation2 + $0x60] sm:$0xff] %v646
        %800 = vst [vmem:[#allocation2 + $0x68] sm:$0xff] %v648
        %801 = vst [vmem:[#allocation2 + $0x70] sm:$0xff] %v759
        %802 = vst [vmem:[#allocation2 + $0x78] sm:$0xff] %v761
        %803 = vst [vmem:[#allocation2 + $0x80] sm:$0xff] %v652
        %804 = vst [vmem:[#allocation2 + $0x88] sm:$0xff] %v654
        %805 = vst [vmem:[#allocation2 + $0x90] sm:$0xff] %v765
        %806 = vst [vmem:[#allocation2 + $0x98] sm:$0xff] %v767
        %807 = vst [vmem:[#allocation2 + $0xa0] sm:$0xff] %v658
        %808 = vst [vmem:[#allocation2 + $0xa8] sm:$0xff] %v660
        %809 = vst [vmem:[#allocation2 + $0xb0] sm:$0xff] %v771
        %810 = vst [vmem:[#allocation2 + $0xb8] sm:$0xff] %v773
        %811 = vst [vmem:[#allocation2 + $0xc0] sm:$0xff] %v664
        %812 = vst [vmem:[#allocation2 + $0xc8] sm:$0xff] %v666
        %813 = vst [vmem:[#allocation2 + $0xd0] sm:$0xff] %v777
        %814 = vst [vmem:[#allocation2 + $0xd8] sm:$0xff] %v779
        %815 = vst [vmem:[#allocation2 + $0xe0] sm:$0xff] %v670
        %816 = vst [vmem:[#allocation2 + $0xe8] sm:$0xff] %v672
        %817 = vst [vmem:[#allocation2 + $0xf0] sm:$0xff] %v783
        %818 = vst [vmem:[#allocation2 + $0xf8] sm:$0xff] %v785
        %v819 = vld [vmem:[%s4] sm:$0xff]
        %v820 = vld [vmem:[%s4 + $0x8] sm:$0xff]
        %v821 = vld [vmem:[%s4 + $0x10] sm:$0xff]
        %v822 = vld [vmem:[%s4 + $0x18] sm:$0xff]
        %v823 = vld [vmem:[%s4 + $0x20] sm:$0xff]
        %v824 = vld [vmem:[%s4 + $0x28] sm:$0xff]
        %v825 = vld [vmem:[%s4 + $0x30] sm:$0xff]
        %v826 = vld [vmem:[%s4 + $0x38] sm:$0xff]
        %v827 = vld [vmem:[%s4 + $0x40] sm:$0xff]
        %v828 = vld [vmem:[%s4 + $0x48] sm:$0xff]
        %v829 = vld [vmem:[%s4 + $0x50] sm:$0xff]
        %v830 = vld [vmem:[%s4 + $0x58] sm:$0xff]
        %v831 = vld [vmem:[%s4 + $0x60] sm:$0xff]
        %v832 = vld [vmem:[%s4 + $0x68] sm:$0xff]
        %v833 = vld [vmem:[%s4 + $0x70] sm:$0xff]
        %v834 = vld [vmem:[%s4 + $0x78] sm:$0xff]
        %v835 = vld [vmem:[%s4 + $0x80] sm:$0xff]
        %v836 = vld [vmem:[%s4 + $0x88] sm:$0xff]
        %v837 = vld [vmem:[%s4 + $0x90] sm:$0xff]
        %v838 = vld [vmem:[%s4 + $0x98] sm:$0xff]
        %v839 = vld [vmem:[%s4 + $0xa0] sm:$0xff]
        %v840 = vld [vmem:[%s4 + $0xa8] sm:$0xff]
        %v841 = vld [vmem:[%s4 + $0xb0] sm:$0xff]
        %v842 = vld [vmem:[%s4 + $0xb8] sm:$0xff]
        %v843 = vld [vmem:[%s6] sm:$0xff]
        %v844 = vld [vmem:[%s6 + $0x8] sm:$0xff]
        %v845 = vld [vmem:[%s6 + $0x10] sm:$0xff]
        %v846 = vld [vmem:[%s6 + $0x18] sm:$0xff]
        %v847 = vld [vmem:[%s6 + $0x20] sm:$0xff]
        %v848 = vld [vmem:[%s6 + $0x28] sm:$0xff]
        %v849 = vld [vmem:[%s7] sm:$0x1]
        %v850 = vld [vmem:[%s486] sm:$0xff]
        %v851 = vld [vmem:[%s430] sm:$0xff]
        %s852 = smul.u32 0, 4
        %s853 = smul.addr %s852, 8
        %s854 = scalar_lea.vmem [#allocation2], %s853
        %v855 = vld [vmem:[%s854] sm:$0xff]
        %v856 = vld [vmem:[%s854 + $0x8] sm:$0xff]
        %v857 = vld [vmem:[%s854 + $0x10] sm:$0xff]
        %v858 = vld [vmem:[%s854 + $0x18] sm:$0xff]
        %vm859 = vcmask 392192
        %v861 = vsel %vm859, %v850, 0
        %863 = vmatprep.subr.mxu0 %v820
        %864 = vmatpush1.msra.mxu0 %v819
        %865 = vmatprep.subr.mxu0 %v824
        %866 = vmatpush1.msra.mxu0 %v823
        %867 = vmatprep.subr.mxu0 %v828
        %868 = vmatpush1.msra.mxu0 %v827
        %869 = vmatprep.subr.mxu0 %v832
        %870 = vmatpush1.msra.mxu0 %v831
        %871 = vmatprep.subr.mxu0 %v836
        %872 = vmatpush1.msra.mxu0 %v835
        %873 = vmatprep.subr.mxu0 %v840
        %874 = vmatpush1.msra.mxu0 %v839
        %875 = vmatprep.subr.mxu0 0.0
        %876 = vmatpush1.msra.mxu0 0.0
        %877 = vmatprep.subr.mxu0 0.0
        %878 = vmatpush1.msra.mxu0 0.0
        %879 = vmatprep.subr.mxu0 0.0
        %880 = vmatpush1.msra.mxu0 0.0
        %881 = vmatprep.subr.mxu0 0.0
        %882 = vmatpush1.msra.mxu0 0.0
        %883 = vmatprep.subr.mxu0 0.0
        %884 = vmatpush1.msra.mxu0 0.0
        %885 = vmatprep.subr.mxu0 0.0
        %886 = vmatpush1.msra.mxu0 0.0
        %887 = vmatprep.subr.mxu0 0.0
        %888 = vmatpush1.msra.mxu0 0.0
        %889 = vmatprep.subr.mxu0 0.0
        %890 = vmatpush1.msra.mxu0 0.0
        %891 = vmatprep.subr.mxu0 0.0
        %892 = vmatpush1.msra.mxu0 0.0
        %893 = vmatprep.subr.mxu0 0.0
        %894 = vmatpush1.msra.mxu0 0.0
        %895 = vmatprep.subr.mxu0 0.0
        %896 = vmatpush1.msra.mxu0 0.0
        %897 = vmatprep.subr.mxu0 0.0
        %898 = vmatpush1.msra.mxu0 0.0
        %899 = vmatprep.subr.mxu0 0.0
        %900 = vmatpush1.msra.mxu0 0.0
        %901 = vmatprep.subr.mxu0 0.0
        %902 = vmatpush1.msra.mxu0 0.0
        %903 = vmatprep.subr.mxu0 0.0
        %904 = vmatpush1.msra.mxu0 0.0
        %905 = vmatprep.subr.mxu0 0.0
        %906 = vmatpush1.msra.mxu0 0.0
        %907 = vmatprep.subr.mxu0 0.0
        %908 = vmatpush1.msra.mxu0 0.0
        %909 = vmatprep.subr.mxu0 0.0
        %910 = vmatpush1.msra.mxu0 0.0
        %911 = vmatprep.subr.mxu0 0.0
        %912 = vmatpush1.msra.mxu0 0.0
        %913 = vmatprep.subr.mxu0 0.0
        %914 = vmatpush1.msra.mxu0 0.0
        %915 = vmatprep.subr.mxu0 0.0
        %916 = vmatpush1.msra.mxu0 0.0
        %917 = vmatprep.subr.mxu0 0.0
        %918 = vmatpush1.msra.mxu0 0.0
        %919 = vmatprep.subr.mxu0 0.0
        %920 = vmatpush1.msra.mxu0 0.0
        %921 = vmatprep.subr.mxu0 0.0
        %922 = vmatpush1.msra.mxu0 0.0
        %923 = vmatprep.subr.mxu0 0.0
        %924 = vmatpush1.msra.mxu0 0.0
        %925 = vmatprep.subr.mxu0 0.0
        %926 = vmatpush1.msra.mxu0 0.0
        %927 = vmatprep.mubr.f32.mxu0 0.0
        %928 = vmatmul.mubr.f32.gmra.mrb[0].mxu0 %v861
        %v929 = vpop.f32.mrb[0].mxu0
        %v930 = vadd.f32 0.0, %v929
        %v931 = vpop.f32.mrb[0].mxu0
        %v932 = vadd.f32 0.0, %v931
        %933 = vdwg.mxu0
        %934 = vmatprep.subr.mxu0 %v822
        %935 = vmatpush1.msra.mxu0 %v821
        %936 = vmatprep.subr.mxu0 %v826
        %937 = vmatpush1.msra.mxu0 %v825
        %938 = vmatprep.subr.mxu0 %v830
        %939 = vmatpush1.msra.mxu0 %v829
        %940 = vmatprep.subr.mxu0 %v834
        %941 = vmatpush1.msra.mxu0 %v833
        %942 = vmatprep.subr.mxu0 %v838
        %943 = vmatpush1.msra.mxu0 %v837
        %944 = vmatprep.subr.mxu0 %v842
        %945 = vmatpush1.msra.mxu0 %v841
        %946 = vmatprep.subr.mxu0 0.0
        %947 = vmatpush1.msra.mxu0 0.0
        %948 = vmatprep.subr.mxu0 0.0
        %949 = vmatpush1.msra.mxu0 0.0
        %950 = vmatprep.subr.mxu0 0.0
        %951 = vmatpush1.msra.mxu0 0.0
        %952 = vmatprep.subr.mxu0 0.0
        %953 = vmatpush1.msra.mxu0 0.0
        %954 = vmatprep.subr.mxu0 0.0
        %955 = vmatpush1.msra.mxu0 0.0
        %956 = vmatprep.subr.mxu0 0.0
        %957 = vmatpush1.msra.mxu0 0.0
        %958 = vmatprep.subr.mxu0 0.0
        %959 = vmatpush1.msra.mxu0 0.0
        %960 = vmatprep.subr.mxu0 0.0
        %961 = vmatpush1.msra.mxu0 0.0
        %962 = vmatprep.subr.mxu0 0.0
        %963 = vmatpush1.msra.mxu0 0.0
        %964 = vmatprep.subr.mxu0 0.0
        %965 = vmatpush1.msra.mxu0 0.0
        %966 = vmatprep.subr.mxu0 0.0
        %967 = vmatpush1.msra.mxu0 0.0
        %968 = vmatprep.subr.mxu0 0.0
        %969 = vmatpush1.msra.mxu0 0.0
        %970 = vmatprep.subr.mxu0 0.0
        %971 = vmatpush1.msra.mxu0 0.0
        %972 = vmatprep.subr.mxu0 0.0
        %973 = vmatpush1.msra.mxu0 0.0
        %974 = vmatprep.subr.mxu0 0.0
        %975 = vmatpush1.msra.mxu0 0.0
        %976 = vmatprep.subr.mxu0 0.0
        %977 = vmatpush1.msra.mxu0 0.0
        %978 = vmatprep.subr.mxu0 0.0
        %979 = vmatpush1.msra.mxu0 0.0
        %980 = vmatprep.subr.mxu0 0.0
        %981 = vmatpush1.msra.mxu0 0.0
        %982 = vmatprep.subr.mxu0 0.0
        %983 = vmatpush1.msra.mxu0 0.0
        %984 = vmatprep.subr.mxu0 0.0
        %985 = vmatpush1.msra.mxu0 0.0
        %986 = vmatprep.subr.mxu0 0.0
        %987 = vmatpush1.msra.mxu0 0.0
        %988 = vmatprep.subr.mxu0 0.0
        %989 = vmatpush1.msra.mxu0 0.0
        %990 = vmatprep.subr.mxu0 0.0
        %991 = vmatpush1.msra.mxu0 0.0
        %992 = vmatprep.subr.mxu0 0.0
        %993 = vmatpush1.msra.mxu0 0.0
        %994 = vmatprep.subr.mxu0 0.0
        %995 = vmatpush1.msra.mxu0 0.0
        %996 = vmatprep.subr.mxu0 0.0
        %997 = vmatpush1.msra.mxu0 0.0
        %998 = vmatprep.mubr.f32.mxu0 0.0
        %999 = vmatmul.mubr.f32.gmra.mrb[0].mxu0 %v861
        %v1000 = vpop.f32.mrb[0].mxu0
        %v1001 = vadd.f32 0.0, %v1000
        %v1002 = vpop.f32.mrb[0].mxu0
        %v1003 = vadd.f32 0.0, %v1002
        %1004 = vdwg.mxu0
        %v1005 = vadd.f32 %v855, %v930
        %v1006 = vadd.f32 %v856, %v932
        %v1007 = vadd.f32 %v857, %v1001
        %v1008 = vadd.f32 %v858, %v1003
        %v1009 = vxor.u32 %v1005, 2147483648
        %v1010 = vmul.f32 %v1009, 1.442695
        %v1011 = vpow.pop %v1010
        %v1012 = vadd.f32 %v1011, 1.0
        %v1013 = vrcp.pop %v1012
        %v1014 = vmul.f32 1.0, %v1013
        %v1015 = vxor.u32 %v1006, 2147483648
        %v1016 = vmul.f32 %v1015, 1.442695
        %v1017 = vpow.pop %v1016
        %v1018 = vadd.f32 %v1017, 1.0
        %v1019 = vrcp.pop %v1018
        %v1020 = vmul.f32 1.0, %v1019
        %v1021 = vtanh.pop %v1007
        %v1022 = vxor.u32 %v1008, 2147483648
        %v1023 = vmul.f32 %v1022, 1.442695
        %v1024 = vpow.pop %v1023
        %v1025 = vadd.f32 %v1024, 1.0
        %v1026 = vrcp.pop %v1025
        %v1027 = vmul.f32 1.0, %v1026
        %v1028 = vmul.f32 %v1020, %v851
        %v1029 = vmul.f32 %v1014, %v1021
        %v1030 = vadd.f32 %v1028, %v1029
        %v1031 = vtanh.pop %v1030
        %v1032 = vmul.f32 %v1027, %v1031
        %v1034 = vlaneseq
        %v1035 = vshrl.u32 %v1034, 7
        %v1036 = vsub.s32 0, %v1035
        %v1037 = vrot.slane %v849, %v1036
        %v1040 = vsel %vm859, %v1032, 0
        %1042 = vmatprep.subr.mxu0 0.0
        %1043 = vmatpush1.msra.mxu0 %v843
        %1044 = vmatprep.subr.mxu0 0.0
        %1045 = vmatpush1.msra.mxu0 %v844
        %1046 = vmatprep.subr.mxu0 0.0
        %1047 = vmatpush1.msra.mxu0 %v845
        %1048 = vmatprep.subr.mxu0 0.0
        %1049 = vmatpush1.msra.mxu0 %v846
        %1050 = vmatprep.subr.mxu0 0.0
        %1051 = vmatpush1.msra.mxu0 %v847
        %1052 = vmatprep.subr.mxu0 0.0
        %1053 = vmatpush1.msra.mxu0 %v848
        %1054 = vmatprep.subr.mxu0 0.0
        %1055 = vmatpush1.msra.mxu0 0.0
        %1056 = vmatprep.subr.mxu0 0.0
        %1057 = vmatpush1.msra.mxu0 0.0
        %1058 = vmatprep.subr.mxu0 0.0
        %1059 = vmatpush1.msra.mxu0 0.0
        %1060 = vmatprep.subr.mxu0 0.0
        %1061 = vmatpush1.msra.mxu0 0.0
        %1062 = vmatprep.subr.mxu0 0.0
        %1063 = vmatpush1.msra.mxu0 0.0
        %1064 = vmatprep.subr.mxu0 0.0
        %1065 = vmatpush1.msra.mxu0 0.0
        %1066 = vmatprep.subr.mxu0 0.0
        %1067 = vmatpush1.msra.mxu0 0.0
        %1068 = vmatprep.subr.mxu0 0.0
        %1069 = vmatpush1.msra.mxu0 0.0
        %1070 = vmatprep.subr.mxu0 0.0
        %1071 = vmatpush1.msra.mxu0 0.0
        %1072 = vmatprep.subr.mxu0 0.0
        %1073 = vmatpush1.msra.mxu0 0.0
        %1074 = vmatprep.subr.mxu0 0.0
        %1075 = vmatpush1.msra.mxu0 0.0
        %1076 = vmatprep.subr.mxu0 0.0
        %1077 = vmatpush1.msra.mxu0 0.0
        %1078 = vmatprep.subr.mxu0 0.0
        %1079 = vmatpush1.msra.mxu0 0.0
        %1080 = vmatprep.subr.mxu0 0.0
        %1081 = vmatpush1.msra.mxu0 0.0
        %1082 = vmatprep.subr.mxu0 0.0
        %1083 = vmatpush1.msra.mxu0 0.0
        %1084 = vmatprep.subr.mxu0 0.0
        %1085 = vmatpush1.msra.mxu0 0.0
        %1086 = vmatprep.subr.mxu0 0.0
        %1087 = vmatpush1.msra.mxu0 0.0
        %1088 = vmatprep.subr.mxu0 0.0
        %1089 = vmatpush1.msra.mxu0 0.0
        %1090 = vmatprep.subr.mxu0 0.0
        %1091 = vmatpush1.msra.mxu0 0.0
        %1092 = vmatprep.subr.mxu0 0.0
        %1093 = vmatpush1.msra.mxu0 0.0
        %1094 = vmatprep.subr.mxu0 0.0
        %1095 = vmatpush1.msra.mxu0 0.0
        %1096 = vmatprep.subr.mxu0 0.0
        %1097 = vmatpush1.msra.mxu0 0.0
        %1098 = vmatprep.subr.mxu0 0.0
        %1099 = vmatpush1.msra.mxu0 0.0
        %1100 = vmatprep.subr.mxu0 0.0
        %1101 = vmatpush1.msra.mxu0 0.0
        %1102 = vmatprep.subr.mxu0 0.0
        %1103 = vmatpush1.msra.mxu0 0.0
        %1104 = vmatprep.subr.mxu0 0.0
        %1105 = vmatpush1.msra.mxu0 0.0
        %1106 = vmatprep.mubr.f32.mxu0 0.0
        %1107 = vmatmul.mubr.f32.gmra.mrb[0].mxu0 %v1040
        %v1108 = vpop.f32.mrb[0].mxu0
        %v1109 = vadd.f32 %v1037, %v1108
        %v1110 = vpop.f32.mrb[0].mxu0
        %1111 = vdwg.mxu0
        %vm1112 = vcmask 23552
        %1113 = vst.msk [vmem:[%s469] sm:$0xff] %vm1112, %v1109
        %s1114 = smul.u32 1, 4
        %s1115 = smul.addr %s1114, 8
        %s1116 = scalar_lea.vmem [#allocation2], %s1115
        %v1117 = vld [vmem:[%s1116] sm:$0xff]
        %v1118 = vld [vmem:[%s1116 + $0x8] sm:$0xff]
        %v1119 = vld [vmem:[%s1116 + $0x10] sm:$0xff]
        %v1120 = vld [vmem:[%s1116 + $0x18] sm:$0xff]
        %1121 = vmatprep.subr.mxu0 %v820
        %1122 = vmatpush1.msra.mxu0 %v819
        %1123 = vmatprep.subr.mxu0 %v824
        %1124 = vmatpush1.msra.mxu0 %v823
        %1125 = vmatprep.subr.mxu0 %v828
        %1126 = vmatpush1.msra.mxu0 %v827
        %1127 = vmatprep.subr.mxu0 %v832
        %1128 = vmatpush1.msra.mxu0 %v831
        %1129 = vmatprep.subr.mxu0 %v836
        %1130 = vmatpush1.msra.mxu0 %v835
        %1131 = vmatprep.subr.mxu0 %v840
        %1132 = vmatpush1.msra.mxu0 %v839
        %1133 = vmatprep.subr.mxu0 0.0
        %1134 = vmatpush1.msra.mxu0 0.0
        %1135 = vmatprep.subr.mxu0 0.0
        %1136 = vmatpush1.msra.mxu0 0.0
        %1137 = vmatprep.subr.mxu0 0.0
        %1138 = vmatpush1.msra.mxu0 0.0
        %1139 = vmatprep.subr.mxu0 0.0
        %1140 = vmatpush1.msra.mxu0 0.0
        %1141 = vmatprep.subr.mxu0 0.0
        %1142 = vmatpush1.msra.mxu0 0.0
        %1143 = vmatprep.subr.mxu0 0.0
        %1144 = vmatpush1.msra.mxu0 0.0
        %1145 = vmatprep.subr.mxu0 0.0
        %1146 = vmatpush1.msra.mxu0 0.0
        %1147 = vmatprep.subr.mxu0 0.0
        %1148 = vmatpush1.msra.mxu0 0.0
        %1149 = vmatprep.subr.mxu0 0.0
        %1150 = vmatpush1.msra.mxu0 0.0
        %1151 = vmatprep.subr.mxu0 0.0
        %1152 = vmatpush1.msra.mxu0 0.0
        %1153 = vmatprep.subr.mxu0 0.0
        %1154 = vmatpush1.msra.mxu0 0.0
        %1155 = vmatprep.subr.mxu0 0.0
        %1156 = vmatpush1.msra.mxu0 0.0
        %1157 = vmatprep.subr.mxu0 0.0
        %1158 = vmatpush1.msra.mxu0 0.0
        %1159 = vmatprep.subr.mxu0 0.0
        %1160 = vmatpush1.msra.mxu0 0.0
        %1161 = vmatprep.subr.mxu0 0.0
        %1162 = vmatpush1.msra.mxu0 0.0
        %1163 = vmatprep.subr.mxu0 0.0
        %1164 = vmatpush1.msra.mxu0 0.0
        %1165 = vmatprep.subr.mxu0 0.0
        %1166 = vmatpush1.msra.mxu0 0.0
        %1167 = vmatprep.subr.mxu0 0.0
        %1168 = vmatpush1.msra.mxu0 0.0
        %1169 = vmatprep.subr.mxu0 0.0
        %1170 = vmatpush1.msra.mxu0 0.0
        %1171 = vmatprep.subr.mxu0 0.0
        %1172 = vmatpush1.msra.mxu0 0.0
        %1173 = vmatprep.subr.mxu0 0.0
        %1174 = vmatpush1.msra.mxu0 0.0
        %1175 = vmatprep.subr.mxu0 0.0
        %1176 = vmatpush1.msra.mxu0 0.0
        %1177 = vmatprep.subr.mxu0 0.0
        %1178 = vmatpush1.msra.mxu0 0.0
        %1179 = vmatprep.subr.mxu0 0.0
        %1180 = vmatpush1.msra.mxu0 0.0
        %1181 = vmatprep.subr.mxu0 0.0
        %1182 = vmatpush1.msra.mxu0 0.0
        %1183 = vmatprep.subr.mxu0 0.0
        %1184 = vmatpush1.msra.mxu0 0.0
        %1185 = vmatprep.mubr.f32.mxu0 0.0
        %1186 = vmatmul.mubr.f32.gmra.mrb[0].mxu0 %v1040
        %v1187 = vpop.f32.mrb[0].mxu0
        %v1188 = vadd.f32 0.0, %v1187
        %v1189 = vpop.f32.mrb[0].mxu0
        %v1190 = vadd.f32 0.0, %v1189
        %1191 = vdwg.mxu0
        %1192 = vmatprep.subr.mxu0 %v822
        %1193 = vmatpush1.msra.mxu0 %v821
        %1194 = vmatprep.subr.mxu0 %v826
        %1195 = vmatpush1.msra.mxu0 %v825
        %1196 = vmatprep.subr.mxu0 %v830
        %1197 = vmatpush1.msra.mxu0 %v829
        %1198 = vmatprep.subr.mxu0 %v834
        %1199 = vmatpush1.msra.mxu0 %v833
        %1200 = vmatprep.subr.mxu0 %v838
        %1201 = vmatpush1.msra.mxu0 %v837
        %1202 = vmatprep.subr.mxu0 %v842
        %1203 = vmatpush1.msra.mxu0 %v841
        %1204 = vmatprep.subr.mxu0 0.0
        %1205 = vmatpush1.msra.mxu0 0.0
        %1206 = vmatprep.subr.mxu0 0.0
        %1207 = vmatpush1.msra.mxu0 0.0
        %1208 = vmatprep.subr.mxu0 0.0
        %1209 = vmatpush1.msra.mxu0 0.0
        %1210 = vmatprep.subr.mxu0 0.0
        %1211 = vmatpush1.msra.mxu0 0.0
        %1212 = vmatprep.subr.mxu0 0.0
        %1213 = vmatpush1.msra.mxu0 0.0
        %1214 = vmatprep.subr.mxu0 0.0
        %1215 = vmatpush1.msra.mxu0 0.0
        %1216 = vmatprep.subr.mxu0 0.0
        %1217 = vmatpush1.msra.mxu0 0.0
        %1218 = vmatprep.subr.mxu0 0.0
        %1219 = vmatpush1.msra.mxu0 0.0
        %1220 = vmatprep.subr.mxu0 0.0
        %1221 = vmatpush1.msra.mxu0 0.0
        %1222 = vmatprep.subr.mxu0 0.0
        %1223 = vmatpush1.msra.mxu0 0.0
        %1224 = vmatprep.subr.mxu0 0.0
        %1225 = vmatpush1.msra.mxu0 0.0
        %1226 = vmatprep.subr.mxu0 0.0
        %1227 = vmatpush1.msra.mxu0 0.0
        %1228 = vmatprep.subr.mxu0 0.0
        %1229 = vmatpush1.msra.mxu0 0.0
        %1230 = vmatprep.subr.mxu0 0.0
        %1231 = vmatpush1.msra.mxu0 0.0
        %1232 = vmatprep.subr.mxu0 0.0
        %1233 = vmatpush1.msra.mxu0 0.0
        %1234 = vmatprep.subr.mxu0 0.0
        %1235 = vmatpush1.msra.mxu0 0.0
        %1236 = vmatprep.subr.mxu0 0.0
        %1237 = vmatpush1.msra.mxu0 0.0
        %1238 = vmatprep.subr.mxu0 0.0
        %1239 = vmatpush1.msra.mxu0 0.0
        %1240 = vmatprep.subr.mxu0 0.0
        %1241 = vmatpush1.msra.mxu0 0.0
        %1242 = vmatprep.subr.mxu0 0.0
        %1243 = vmatpush1.msra.mxu0 0.0
        %1244 = vmatprep.subr.mxu0 0.0
        %1245 = vmatpush1.msra.mxu0 0.0
        %1246 = vmatprep.subr.mxu0 0.0
        %1247 = vmatpush1.msra.mxu0 0.0
        %1248 = vmatprep.subr.mxu0 0.0
        %1249 = vmatpush1.msra.mxu0 0.0
        %1250 = vmatprep.subr.mxu0 0.0
        %1251 = vmatpush1.msra.mxu0 0.0
        %1252 = vmatprep.subr.mxu0 0.0
        %1253 = vmatpush1.msra.mxu0 0.0
        %1254 = vmatprep.subr.mxu0 0.0
        %1255 = vmatpush1.msra.mxu0 0.0
        %1256 = vmatprep.mubr.f32.mxu0 0.0
        %1257 = vmatmul.mubr.f32.gmra.mrb[0].mxu0 %v1040
        %v1258 = vpop.f32.mrb[0].mxu0
        %v1259 = vadd.f32 0.0, %v1258
        %v1260 = vpop.f32.mrb[0].mxu0
        %v1261 = vadd.f32 0.0, %v1260
        %1262 = vdwg.mxu0
        %v1263 = vadd.f32 %v1117, %v1188
        %v1264 = vadd.f32 %v1118, %v1190
        %v1265 = vadd.f32 %v1119, %v1259
        %v1266 = vadd.f32 %v1120, %v1261
        %v1267 = vxor.u32 %v1263, 2147483648
        %v1268 = vmul.f32 %v1267, 1.442695
        %v1269 = vpow.pop %v1268
        %v1270 = vadd.f32 %v1269, 1.0
        %v1271 = vrcp.pop %v1270
        %v1272 = vmul.f32 1.0, %v1271
        %v1273 = vxor.u32 %v1264, 2147483648
        %v1274 = vmul.f32 %v1273, 1.442695
        %v1275 = vpow.pop %v1274
        %v1276 = vadd.f32 %v1275, 1.0
        %v1277 = vrcp.pop %v1276
        %v1278 = vmul.f32 1.0, %v1277
        %v1279 = vtanh.pop %v1265
        %v1280 = vxor.u32 %v1266, 2147483648
        %v1281 = vmul.f32 %v1280, 1.442695
        %v1282 = vpow.pop %v1281
        %v1283 = vadd.f32 %v1282, 1.0
        %v1284 = vrcp.pop %v1283
        %v1285 = vmul.f32 1.0, %v1284
        %v1286 = vmul.f32 %v1278, %v1030
        %v1287 = vmul.f32 %v1272, %v1279
        %v1288 = vadd.f32 %v1286, %v1287
        %v1289 = vtanh.pop %v1288
        %v1290 = vmul.f32 %v1285, %v1289
        %v1292 = vsel %vm859, %v1290, 0
        %1294 = vmatprep.subr.mxu0 0.0
        %1295 = vmatpush1.msra.mxu0 %v843
        %1296 = vmatprep.subr.mxu0 0.0
        %1297 = vmatpush1.msra.mxu0 %v844
        %1298 = vmatprep.subr.mxu0 0.0
        %1299 = vmatpush1.msra.mxu0 %v845
        %1300 = vmatprep.subr.mxu0 0.0
        %1301 = vmatpush1.msra.mxu0 %v846
        %1302 = vmatprep.subr.mxu0 0.0
        %1303 = vmatpush1.msra.mxu0 %v847
        %1304 = vmatprep.subr.mxu0 0.0
        %1305 = vmatpush1.msra.mxu0 %v848
        %1306 = vmatprep.subr.mxu0 0.0
        %1307 = vmatpush1.msra.mxu0 0.0
        %1308 = vmatprep.subr.mxu0 0.0
        %1309 = vmatpush1.msra.mxu0 0.0
        %1310 = vmatprep.subr.mxu0 0.0
        %1311 = vmatpush1.msra.mxu0 0.0
        %1312 = vmatprep.subr.mxu0 0.0
        %1313 = vmatpush1.msra.mxu0 0.0
        %1314 = vmatprep.subr.mxu0 0.0
        %1315 = vmatpush1.msra.mxu0 0.0
        %1316 = vmatprep.subr.mxu0 0.0
        %1317 = vmatpush1.msra.mxu0 0.0
        %1318 = vmatprep.subr.mxu0 0.0
        %1319 = vmatpush1.msra.mxu0 0.0
        %1320 = vmatprep.subr.mxu0 0.0
        %1321 = vmatpush1.msra.mxu0 0.0
        %1322 = vmatprep.subr.mxu0 0.0
        %1323 = vmatpush1.msra.mxu0 0.0
        %1324 = vmatprep.subr.mxu0 0.0
        %1325 = vmatpush1.msra.mxu0 0.0
        %1326 = vmatprep.subr.mxu0 0.0
        %1327 = vmatpush1.msra.mxu0 0.0
        %1328 = vmatprep.subr.mxu0 0.0
        %1329 = vmatpush1.msra.mxu0 0.0
        %1330 = vmatprep.subr.mxu0 0.0
        %1331 = vmatpush1.msra.mxu0 0.0
        %1332 = vmatprep.subr.mxu0 0.0
        %1333 = vmatpush1.msra.mxu0 0.0
        %1334 = vmatprep.subr.mxu0 0.0
        %1335 = vmatpush1.msra.mxu0 0.0
        %1336 = vmatprep.subr.mxu0 0.0
        %1337 = vmatpush1.msra.mxu0 0.0
        %1338 = vmatprep.subr.mxu0 0.0
        %1339 = vmatpush1.msra.mxu0 0.0
        %1340 = vmatprep.subr.mxu0 0.0
        %1341 = vmatpush1.msra.mxu0 0.0
        %1342 = vmatprep.subr.mxu0 0.0
        %1343 = vmatpush1.msra.mxu0 0.0
        %1344 = vmatprep.subr.mxu0 0.0
        %1345 = vmatpush1.msra.mxu0 0.0
        %1346 = vmatprep.subr.mxu0 0.0
        %1347 = vmatpush1.msra.mxu0 0.0
        %1348 = vmatprep.subr.mxu0 0.0
        %1349 = vmatpush1.msra.mxu0 0.0
        %1350 = vmatprep.subr.mxu0 0.0
        %1351 = vmatpush1.msra.mxu0 0.0
        %1352 = vmatprep.subr.mxu0 0.0
        %1353 = vmatpush1.msra.mxu0 0.0
        %1354 = vmatprep.subr.mxu0 0.0
        %1355 = vmatpush1.msra.mxu0 0.0
        %1356 = vmatprep.subr.mxu0 0.0
        %1357 = vmatpush1.msra.mxu0 0.0
        %1358 = vmatprep.mubr.f32.mxu0 0.0
        %1359 = vmatmul.mubr.f32.gmra.mrb[0].mxu0 %v1292
        %v1360 = vpop.f32.mrb[0].mxu0
        %v1361 = vadd.f32 %v1037, %v1360
        %v1362 = vpop.f32.mrb[0].mxu0
        %1363 = vdwg.mxu0
        %s1364 = scalar_lea.vmem %s469, 8 [#allocation7]
        %1365 = vst.msk [vmem:[%s1364] sm:$0xff] %vm1112, %v1361
        %s1366 = smul.u32 2, 4
        %s1367 = smul.addr %s1366, 8
        %s1368 = scalar_lea.vmem [#allocation2], %s1367
        %v1369 = vld [vmem:[%s1368] sm:$0xff]
        %v1370 = vld [vmem:[%s1368 + $0x8] sm:$0xff]
        %v1371 = vld [vmem:[%s1368 + $0x10] sm:$0xff]
        %v1372 = vld [vmem:[%s1368 + $0x18] sm:$0xff]
        %1373 = vmatprep.subr.mxu0 %v820
        %1374 = vmatpush1.msra.mxu0 %v819
        %1375 = vmatprep.subr.mxu0 %v824
        %1376 = vmatpush1.msra.mxu0 %v823
        %1377 = vmatprep.subr.mxu0 %v828
        %1378 = vmatpush1.msra.mxu0 %v827
        %1379 = vmatprep.subr.mxu0 %v832
        %1380 = vmatpush1.msra.mxu0 %v831
        %1381 = vmatprep.subr.mxu0 %v836
        %1382 = vmatpush1.msra.mxu0 %v835
        %1383 = vmatprep.subr.mxu0 %v840
        %1384 = vmatpush1.msra.mxu0 %v839
        %1385 = vmatprep.subr.mxu0 0.0
        %1386 = vmatpush1.msra.mxu0 0.0
        %1387 = vmatprep.subr.mxu0 0.0
        %1388 = vmatpush1.msra.mxu0 0.0
        %1389 = vmatprep.subr.mxu0 0.0
        %1390 = vmatpush1.msra.mxu0 0.0
        %1391 = vmatprep.subr.mxu0 0.0
        %1392 = vmatpush1.msra.mxu0 0.0
        %1393 = vmatprep.subr.mxu0 0.0
        %1394 = vmatpush1.msra.mxu0 0.0
        %1395 = vmatprep.subr.mxu0 0.0
        %1396 = vmatpush1.msra.mxu0 0.0
        %1397 = vmatprep.subr.mxu0 0.0
        %1398 = vmatpush1.msra.mxu0 0.0
        %1399 = vmatprep.subr.mxu0 0.0
        %1400 = vmatpush1.msra.mxu0 0.0
        %1401 = vmatprep.subr.mxu0 0.0
        %1402 = vmatpush1.msra.mxu0 0.0
        %1403 = vmatprep.subr.mxu0 0.0
        %1404 = vmatpush1.msra.mxu0 0.0
        %1405 = vmatprep.subr.mxu0 0.0
        %1406 = vmatpush1.msra.mxu0 0.0
        %1407 = vmatprep.subr.mxu0 0.0
        %1408 = vmatpush1.msra.mxu0 0.0
        %1409 = vmatprep.subr.mxu0 0.0
        %1410 = vmatpush1.msra.mxu0 0.0
        %1411 = vmatprep.subr.mxu0 0.0
        %1412 = vmatpush1.msra.mxu0 0.0
        %1413 = vmatprep.subr.mxu0 0.0
        %1414 = vmatpush1.msra.mxu0 0.0
        %1415 = vmatprep.subr.mxu0 0.0
        %1416 = vmatpush1.msra.mxu0 0.0
        %1417 = vmatprep.subr.mxu0 0.0
        %1418 = vmatpush1.msra.mxu0 0.0
        %1419 = vmatprep.subr.mxu0 0.0
        %1420 = vmatpush1.msra.mxu0 0.0
        %1421 = vmatprep.subr.mxu0 0.0
        %1422 = vmatpush1.msra.mxu0 0.0
        %1423 = vmatprep.subr.mxu0 0.0
        %1424 = vmatpush1.msra.mxu0 0.0
        %1425 = vmatprep.subr.mxu0 0.0
        %1426 = vmatpush1.msra.mxu0 0.0
        %1427 = vmatprep.subr.mxu0 0.0
        %1428 = vmatpush1.msra.mxu0 0.0
        %1429 = vmatprep.subr.mxu0 0.0
        %1430 = vmatpush1.msra.mxu0 0.0
        %1431 = vmatprep.subr.mxu0 0.0
        %1432 = vmatpush1.msra.mxu0 0.0
        %1433 = vmatprep.subr.mxu0 0.0
        %1434 = vmatpush1.msra.mxu0 0.0
        %1435 = vmatprep.subr.mxu0 0.0
        %1436 = vmatpush1.msra.mxu0 0.0
        %1437 = vmatprep.mubr.f32.mxu0 0.0
        %1438 = vmatmul.mubr.f32.gmra.mrb[0].mxu0 %v1292
        %v1439 = vpop.f32.mrb[0].mxu0
        %v1440 = vadd.f32 0.0, %v1439
        %v1441 = vpop.f32.mrb[0].mxu0
        %v1442 = vadd.f32 0.0, %v1441
        %1443 = vdwg.mxu0
        %1444 = vmatprep.subr.mxu0 %v822
        %1445 = vmatpush1.msra.mxu0 %v821
        %1446 = vmatprep.subr.mxu0 %v826
        %1447 = vmatpush1.msra.mxu0 %v825
        %1448 = vmatprep.subr.mxu0 %v830
        %1449 = vmatpush1.msra.mxu0 %v829
        %1450 = vmatprep.subr.mxu0 %v834
        %1451 = vmatpush1.msra.mxu0 %v833
        %1452 = vmatprep.subr.mxu0 %v838
        %1453 = vmatpush1.msra.mxu0 %v837
        %1454 = vmatprep.subr.mxu0 %v842
        %1455 = vmatpush1.msra.mxu0 %v841
        %1456 = vmatprep.subr.mxu0 0.0
        %1457 = vmatpush1.msra.mxu0 0.0
        %1458 = vmatprep.subr.mxu0 0.0
        %1459 = vmatpush1.msra.mxu0 0.0
        %1460 = vmatprep.subr.mxu0 0.0
        %1461 = vmatpush1.msra.mxu0 0.0
        %1462 = vmatprep.subr.mxu0 0.0
        %1463 = vmatpush1.msra.mxu0 0.0
        %1464 = vmatprep.subr.mxu0 0.0
        %1465 = vmatpush1.msra.mxu0 0.0
        %1466 = vmatprep.subr.mxu0 0.0
        %1467 = vmatpush1.msra.mxu0 0.0
        %1468 = vmatprep.subr.mxu0 0.0
        %1469 = vmatpush1.msra.mxu0 0.0
        %1470 = vmatprep.subr.mxu0 0.0
        %1471 = vmatpush1.msra.mxu0 0.0
        %1472 = vmatprep.subr.mxu0 0.0
        %1473 = vmatpush1.msra.mxu0 0.0
        %1474 = vmatprep.subr.mxu0 0.0
        %1475 = vmatpush1.msra.mxu0 0.0
        %1476 = vmatprep.subr.mxu0 0.0
        %1477 = vmatpush1.msra.mxu0 0.0
        %1478 = vmatprep.subr.mxu0 0.0
        %1479 = vmatpush1.msra.mxu0 0.0
        %1480 = vmatprep.subr.mxu0 0.0
        %1481 = vmatpush1.msra.mxu0 0.0
        %1482 = vmatprep.subr.mxu0 0.0
        %1483 = vmatpush1.msra.mxu0 0.0
        %1484 = vmatprep.subr.mxu0 0.0
        %1485 = vmatpush1.msra.mxu0 0.0
        %1486 = vmatprep.subr.mxu0 0.0
        %1487 = vmatpush1.msra.mxu0 0.0
        %1488 = vmatprep.subr.mxu0 0.0
        %1489 = vmatpush1.msra.mxu0 0.0
        %1490 = vmatprep.subr.mxu0 0.0
        %1491 = vmatpush1.msra.mxu0 0.0
        %1492 = vmatprep.subr.mxu0 0.0
        %1493 = vmatpush1.msra.mxu0 0.0
        %1494 = vmatprep.subr.mxu0 0.0
        %1495 = vmatpush1.msra.mxu0 0.0
        %1496 = vmatprep.subr.mxu0 0.0
        %1497 = vmatpush1.msra.mxu0 0.0
        %1498 = vmatprep.subr.mxu0 0.0
        %1499 = vmatpush1.msra.mxu0 0.0
        %1500 = vmatprep.subr.mxu0 0.0
        %1501 = vmatpush1.msra.mxu0 0.0
        %1502 = vmatprep.subr.mxu0 0.0
        %1503 = vmatpush1.msra.mxu0 0.0
        %1504 = vmatprep.subr.mxu0 0.0
        %1505 = vmatpush1.msra.mxu0 0.0
        %1506 = vmatprep.subr.mxu0 0.0
        %1507 = vmatpush1.msra.mxu0 0.0
        %1508 = vmatprep.mubr.f32.mxu0 0.0
        %1509 = vmatmul.mubr.f32.gmra.mrb[0].mxu0 %v1292
        %v1510 = vpop.f32.mrb[0].mxu0
        %v1511 = vadd.f32 0.0, %v1510
        %v1512 = vpop.f32.mrb[0].mxu0
        %v1513 = vadd.f32 0.0, %v1512
        %1514 = vdwg.mxu0
        %v1515 = vadd.f32 %v1369, %v1440
        %v1516 = vadd.f32 %v1370, %v1442
        %v1517 = vadd.f32 %v1371, %v1511
        %v1518 = vadd.f32 %v1372, %v1513
        %v1519 = vxor.u32 %v1515, 2147483648
        %v1520 = vmul.f32 %v1519, 1.442695
        %v1521 = vpow.pop %v1520
        %v1522 = vadd.f32 %v1521, 1.0
        %v1523 = vrcp.pop %v1522
        %v1524 = vmul.f32 1.0, %v1523
        %v1525 = vxor.u32 %v1516, 2147483648
        %v1526 = vmul.f32 %v1525, 1.442695
        %v1527 = vpow.pop %v1526
        %v1528 = vadd.f32 %v1527, 1.0
        %v1529 = vrcp.pop %v1528
        %v1530 = vmul.f32 1.0, %v1529
        %v1531 = vtanh.pop %v1517
        %v1532 = vxor.u32 %v1518, 2147483648
        %v1533 = vmul.f32 %v1532, 1.442695
        %v1534 = vpow.pop %v1533
        %v1535 = vadd.f32 %v1534, 1.0
        %v1536 = vrcp.pop %v1535
        %v1537 = vmul.f32 1.0, %v1536
        %v1538 = vmul.f32 %v1530, %v1288
        %v1539 = vmul.f32 %v1524, %v1531
        %v1540 = vadd.f32 %v1538, %v1539
        %v1541 = vtanh.pop %v1540
        %v1542 = vmul.f32 %v1537, %v1541
        %v1544 = vsel %vm859, %v1542, 0
        %1546 = vmatprep.subr.mxu0 0.0
        %1547 = vmatpush1.msra.mxu0 %v843
        %1548 = vmatprep.subr.mxu0 0.0
        %1549 = vmatpush1.msra.mxu0 %v844
        %1550 = vmatprep.subr.mxu0 0.0
        %1551 = vmatpush1.msra.mxu0 %v845
        %1552 = vmatprep.subr.mxu0 0.0
        %1553 = vmatpush1.msra.mxu0 %v846
        %1554 = vmatprep.subr.mxu0 0.0
        %1555 = vmatpush1.msra.mxu0 %v847
        %1556 = vmatprep.subr.mxu0 0.0
        %1557 = vmatpush1.msra.mxu0 %v848
        %1558 = vmatprep.subr.mxu0 0.0
        %1559 = vmatpush1.msra.mxu0 0.0
        %1560 = vmatprep.subr.mxu0 0.0
        %1561 = vmatpush1.msra.mxu0 0.0
        %1562 = vmatprep.subr.mxu0 0.0
        %1563 = vmatpush1.msra.mxu0 0.0
        %1564 = vmatprep.subr.mxu0 0.0
        %1565 = vmatpush1.msra.mxu0 0.0
        %1566 = vmatprep.subr.mxu0 0.0
        %1567 = vmatpush1.msra.mxu0 0.0
        %1568 = vmatprep.subr.mxu0 0.0
        %1569 = vmatpush1.msra.mxu0 0.0
        %1570 = vmatprep.subr.mxu0 0.0
        %1571 = vmatpush1.msra.mxu0 0.0
        %1572 = vmatprep.subr.mxu0 0.0
        %1573 = vmatpush1.msra.mxu0 0.0
        %1574 = vmatprep.subr.mxu0 0.0
        %1575 = vmatpush1.msra.mxu0 0.0
        %1576 = vmatprep.subr.mxu0 0.0
        %1577 = vmatpush1.msra.mxu0 0.0
        %1578 = vmatprep.subr.mxu0 0.0
        %1579 = vmatpush1.msra.mxu0 0.0
        %1580 = vmatprep.subr.mxu0 0.0
        %1581 = vmatpush1.msra.mxu0 0.0
        %1582 = vmatprep.subr.mxu0 0.0
        %1583 = vmatpush1.msra.mxu0 0.0
        %1584 = vmatprep.subr.mxu0 0.0
        %1585 = vmatpush1.msra.mxu0 0.0
        %1586 = vmatprep.subr.mxu0 0.0
        %1587 = vmatpush1.msra.mxu0 0.0
        %1588 = vmatprep.subr.mxu0 0.0
        %1589 = vmatpush1.msra.mxu0 0.0
        %1590 = vmatprep.subr.mxu0 0.0
        %1591 = vmatpush1.msra.mxu0 0.0
        %1592 = vmatprep.subr.mxu0 0.0
        %1593 = vmatpush1.msra.mxu0 0.0
        %1594 = vmatprep.subr.mxu0 0.0
        %1595 = vmatpush1.msra.mxu0 0.0
        %1596 = vmatprep.subr.mxu0 0.0
        %1597 = vmatpush1.msra.mxu0 0.0
        %1598 = vmatprep.subr.mxu0 0.0
        %1599 = vmatpush1.msra.mxu0 0.0
        %1600 = vmatprep.subr.mxu0 0.0
        %1601 = vmatpush1.msra.mxu0 0.0
        %1602 = vmatprep.subr.mxu0 0.0
        %1603 = vmatpush1.msra.mxu0 0.0
        %1604 = vmatprep.subr.mxu0 0.0
        %1605 = vmatpush1.msra.mxu0 0.0
        %1606 = vmatprep.subr.mxu0 0.0
        %1607 = vmatpush1.msra.mxu0 0.0
        %1608 = vmatprep.subr.mxu0 0.0
        %1609 = vmatpush1.msra.mxu0 0.0
        %1610 = vmatprep.mubr.f32.mxu0 0.0
        %1611 = vmatmul.mubr.f32.gmra.mrb[0].mxu0 %v1544
        %v1612 = vpop.f32.mrb[0].mxu0
        %v1613 = vadd.f32 %v1037, %v1612
        %v1614 = vpop.f32.mrb[0].mxu0
        %1615 = vdwg.mxu0
        %s1616 = scalar_lea.vmem %s469, 16 [#allocation7]
        %1617 = vst.msk [vmem:[%s1616] sm:$0xff] %vm1112, %v1613
        %s1618 = smul.u32 3, 4
        %s1619 = smul.addr %s1618, 8
        %s1620 = scalar_lea.vmem [#allocation2], %s1619
        %v1621 = vld [vmem:[%s1620] sm:$0xff]
        %v1622 = vld [vmem:[%s1620 + $0x8] sm:$0xff]
        %v1623 = vld [vmem:[%s1620 + $0x10] sm:$0xff]
        %v1624 = vld [vmem:[%s1620 + $0x18] sm:$0xff]
        %1625 = vmatprep.subr.mxu0 %v820
        %1626 = vmatpush1.msra.mxu0 %v819
        %1627 = vmatprep.subr.mxu0 %v824
        %1628 = vmatpush1.msra.mxu0 %v823
        %1629 = vmatprep.subr.mxu0 %v828
        %1630 = vmatpush1.msra.mxu0 %v827
        %1631 = vmatprep.subr.mxu0 %v832
        %1632 = vmatpush1.msra.mxu0 %v831
        %1633 = vmatprep.subr.mxu0 %v836
        %1634 = vmatpush1.msra.mxu0 %v835
        %1635 = vmatprep.subr.mxu0 %v840
        %1636 = vmatpush1.msra.mxu0 %v839
        %1637 = vmatprep.subr.mxu0 0.0
        %1638 = vmatpush1.msra.mxu0 0.0
        %1639 = vmatprep.subr.mxu0 0.0
        %1640 = vmatpush1.msra.mxu0 0.0
        %1641 = vmatprep.subr.mxu0 0.0
        %1642 = vmatpush1.msra.mxu0 0.0
        %1643 = vmatprep.subr.mxu0 0.0
        %1644 = vmatpush1.msra.mxu0 0.0
        %1645 = vmatprep.subr.mxu0 0.0
        %1646 = vmatpush1.msra.mxu0 0.0
        %1647 = vmatprep.subr.mxu0 0.0
        %1648 = vmatpush1.msra.mxu0 0.0
        %1649 = vmatprep.subr.mxu0 0.0
        %1650 = vmatpush1.msra.mxu0 0.0
        %1651 = vmatprep.subr.mxu0 0.0
        %1652 = vmatpush1.msra.mxu0 0.0
        %1653 = vmatprep.subr.mxu0 0.0
        %1654 = vmatpush1.msra.mxu0 0.0
        %1655 = vmatprep.subr.mxu0 0.0
        %1656 = vmatpush1.msra.mxu0 0.0
        %1657 = vmatprep.subr.mxu0 0.0
        %1658 = vmatpush1.msra.mxu0 0.0
        %1659 = vmatprep.subr.mxu0 0.0
        %1660 = vmatpush1.msra.mxu0 0.0
        %1661 = vmatprep.subr.mxu0 0.0
        %1662 = vmatpush1.msra.mxu0 0.0
        %1663 = vmatprep.subr.mxu0 0.0
        %1664 = vmatpush1.msra.mxu0 0.0
        %1665 = vmatprep.subr.mxu0 0.0
        %1666 = vmatpush1.msra.mxu0 0.0
        %1667 = vmatprep.subr.mxu0 0.0
        %1668 = vmatpush1.msra.mxu0 0.0
        %1669 = vmatprep.subr.mxu0 0.0
        %1670 = vmatpush1.msra.mxu0 0.0
        %1671 = vmatprep.subr.mxu0 0.0
        %1672 = vmatpush1.msra.mxu0 0.0
        %1673 = vmatprep.subr.mxu0 0.0
        %1674 = vmatpush1.msra.mxu0 0.0
        %1675 = vmatprep.subr.mxu0 0.0
        %1676 = vmatpush1.msra.mxu0 0.0
        %1677 = vmatprep.subr.mxu0 0.0
        %1678 = vmatpush1.msra.mxu0 0.0
        %1679 = vmatprep.subr.mxu0 0.0
        %1680 = vmatpush1.msra.mxu0 0.0
        %1681 = vmatprep.subr.mxu0 0.0
        %1682 = vmatpush1.msra.mxu0 0.0
        %1683 = vmatprep.subr.mxu0 0.0
        %1684 = vmatpush1.msra.mxu0 0.0
        %1685 = vmatprep.subr.mxu0 0.0
        %1686 = vmatpush1.msra.mxu0 0.0
        %1687 = vmatprep.subr.mxu0 0.0
        %1688 = vmatpush1.msra.mxu0 0.0
        %1689 = vmatprep.mubr.f32.mxu0 0.0
        %1690 = vmatmul.mubr.f32.gmra.mrb[0].mxu0 %v1544
        %v1691 = vpop.f32.mrb[0].mxu0
        %v1692 = vadd.f32 0.0, %v1691
        %v1693 = vpop.f32.mrb[0].mxu0
        %v1694 = vadd.f32 0.0, %v1693
        %1695 = vdwg.mxu0
        %1696 = vmatprep.subr.mxu0 %v822
        %1697 = vmatpush1.msra.mxu0 %v821
        %1698 = vmatprep.subr.mxu0 %v826
        %1699 = vmatpush1.msra.mxu0 %v825
        %1700 = vmatprep.subr.mxu0 %v830
        %1701 = vmatpush1.msra.mxu0 %v829
        %1702 = vmatprep.subr.mxu0 %v834
        %1703 = vmatpush1.msra.mxu0 %v833
        %1704 = vmatprep.subr.mxu0 %v838
        %1705 = vmatpush1.msra.mxu0 %v837
        %1706 = vmatprep.subr.mxu0 %v842
        %1707 = vmatpush1.msra.mxu0 %v841
        %1708 = vmatprep.subr.mxu0 0.0
        %1709 = vmatpush1.msra.mxu0 0.0
        %1710 = vmatprep.subr.mxu0 0.0
        %1711 = vmatpush1.msra.mxu0 0.0
        %1712 = vmatprep.subr.mxu0 0.0
        %1713 = vmatpush1.msra.mxu0 0.0
        %1714 = vmatprep.subr.mxu0 0.0
        %1715 = vmatpush1.msra.mxu0 0.0
        %1716 = vmatprep.subr.mxu0 0.0
        %1717 = vmatpush1.msra.mxu0 0.0
        %1718 = vmatprep.subr.mxu0 0.0
        %1719 = vmatpush1.msra.mxu0 0.0
        %1720 = vmatprep.subr.mxu0 0.0
        %1721 = vmatpush1.msra.mxu0 0.0
        %1722 = vmatprep.subr.mxu0 0.0
        %1723 = vmatpush1.msra.mxu0 0.0
        %1724 = vmatprep.subr.mxu0 0.0
        %1725 = vmatpush1.msra.mxu0 0.0
        %1726 = vmatprep.subr.mxu0 0.0
        %1727 = vmatpush1.msra.mxu0 0.0
        %1728 = vmatprep.subr.mxu0 0.0
        %1729 = vmatpush1.msra.mxu0 0.0
        %1730 = vmatprep.subr.mxu0 0.0
        %1731 = vmatpush1.msra.mxu0 0.0
        %1732 = vmatprep.subr.mxu0 0.0
        %1733 = vmatpush1.msra.mxu0 0.0
        %1734 = vmatprep.subr.mxu0 0.0
        %1735 = vmatpush1.msra.mxu0 0.0
        %1736 = vmatprep.subr.mxu0 0.0
        %1737 = vmatpush1.msra.mxu0 0.0
        %1738 = vmatprep.subr.mxu0 0.0
        %1739 = vmatpush1.msra.mxu0 0.0
        %1740 = vmatprep.subr.mxu0 0.0
        %1741 = vmatpush1.msra.mxu0 0.0
        %1742 = vmatprep.subr.mxu0 0.0
        %1743 = vmatpush1.msra.mxu0 0.0
        %1744 = vmatprep.subr.mxu0 0.0
        %1745 = vmatpush1.msra.mxu0 0.0
        %1746 = vmatprep.subr.mxu0 0.0
        %1747 = vmatpush1.msra.mxu0 0.0
        %1748 = vmatprep.subr.mxu0 0.0
        %1749 = vmatpush1.msra.mxu0 0.0
        %1750 = vmatprep.subr.mxu0 0.0
        %1751 = vmatpush1.msra.mxu0 0.0
        %1752 = vmatprep.subr.mxu0 0.0
        %1753 = vmatpush1.msra.mxu0 0.0
        %1754 = vmatprep.subr.mxu0 0.0
        %1755 = vmatpush1.msra.mxu0 0.0
        %1756 = vmatprep.subr.mxu0 0.0
        %1757 = vmatpush1.msra.mxu0 0.0
        %1758 = vmatprep.subr.mxu0 0.0
        %1759 = vmatpush1.msra.mxu0 0.0
        %1760 = vmatprep.mubr.f32.mxu0 0.0
        %1761 = vmatmul.mubr.f32.gmra.mrb[0].mxu0 %v1544
        %v1762 = vpop.f32.mrb[0].mxu0
        %v1763 = vadd.f32 0.0, %v1762
        %v1764 = vpop.f32.mrb[0].mxu0
        %v1765 = vadd.f32 0.0, %v1764
        %1766 = vdwg.mxu0
        %v1767 = vadd.f32 %v1621, %v1692
        %v1768 = vadd.f32 %v1622, %v1694
        %v1769 = vadd.f32 %v1623, %v1763
        %v1770 = vadd.f32 %v1624, %v1765
        %v1771 = vxor.u32 %v1767, 2147483648
        %v1772 = vmul.f32 %v1771, 1.442695
        %v1773 = vpow.pop %v1772
        %v1774 = vadd.f32 %v1773, 1.0
        %v1775 = vrcp.pop %v1774
        %v1776 = vmul.f32 1.0, %v1775
        %v1777 = vxor.u32 %v1768, 2147483648
        %v1778 = vmul.f32 %v1777, 1.442695
        %v1779 = vpow.pop %v1778
        %v1780 = vadd.f32 %v1779, 1.0
        %v1781 = vrcp.pop %v1780
        %v1782 = vmul.f32 1.0, %v1781
        %v1783 = vtanh.pop %v1769
        %v1784 = vxor.u32 %v1770, 2147483648
        %v1785 = vmul.f32 %v1784, 1.442695
        %v1786 = vpow.pop %v1785
        %v1787 = vadd.f32 %v1786, 1.0
        %v1788 = vrcp.pop %v1787
        %v1789 = vmul.f32 1.0, %v1788
        %v1790 = vmul.f32 %v1782, %v1540
        %v1791 = vmul.f32 %v1776, %v1783
        %v1792 = vadd.f32 %v1790, %v1791
        %v1793 = vtanh.pop %v1792
        %v1794 = vmul.f32 %v1789, %v1793
        %v1796 = vsel %vm859, %v1794, 0
        %1798 = vmatprep.subr.mxu0 0.0
        %1799 = vmatpush1.msra.mxu0 %v843
        %1800 = vmatprep.subr.mxu0 0.0
        %1801 = vmatpush1.msra.mxu0 %v844
        %1802 = vmatprep.subr.mxu0 0.0
        %1803 = vmatpush1.msra.mxu0 %v845
        %1804 = vmatprep.subr.mxu0 0.0
        %1805 = vmatpush1.msra.mxu0 %v846
        %1806 = vmatprep.subr.mxu0 0.0
        %1807 = vmatpush1.msra.mxu0 %v847
        %1808 = vmatprep.subr.mxu0 0.0
        %1809 = vmatpush1.msra.mxu0 %v848
        %1810 = vmatprep.subr.mxu0 0.0
        %1811 = vmatpush1.msra.mxu0 0.0
        %1812 = vmatprep.subr.mxu0 0.0
        %1813 = vmatpush1.msra.mxu0 0.0
        %1814 = vmatprep.subr.mxu0 0.0
        %1815 = vmatpush1.msra.mxu0 0.0
        %1816 = vmatprep.subr.mxu0 0.0
        %1817 = vmatpush1.msra.mxu0 0.0
        %1818 = vmatprep.subr.mxu0 0.0
        %1819 = vmatpush1.msra.mxu0 0.0
        %1820 = vmatprep.subr.mxu0 0.0
        %1821 = vmatpush1.msra.mxu0 0.0
        %1822 = vmatprep.subr.mxu0 0.0
        %1823 = vmatpush1.msra.mxu0 0.0
        %1824 = vmatprep.subr.mxu0 0.0
        %1825 = vmatpush1.msra.mxu0 0.0
        %1826 = vmatprep.subr.mxu0 0.0
        %1827 = vmatpush1.msra.mxu0 0.0
        %1828 = vmatprep.subr.mxu0 0.0
        %1829 = vmatpush1.msra.mxu0 0.0
        %1830 = vmatprep.subr.mxu0 0.0
        %1831 = vmatpush1.msra.mxu0 0.0
        %1832 = vmatprep.subr.mxu0 0.0
        %1833 = vmatpush1.msra.mxu0 0.0
        %1834 = vmatprep.subr.mxu0 0.0
        %1835 = vmatpush1.msra.mxu0 0.0
        %1836 = vmatprep.subr.mxu0 0.0
        %1837 = vmatpush1.msra.mxu0 0.0
        %1838 = vmatprep.subr.mxu0 0.0
        %1839 = vmatpush1.msra.mxu0 0.0
        %1840 = vmatprep.subr.mxu0 0.0
        %1841 = vmatpush1.msra.mxu0 0.0
        %1842 = vmatprep.subr.mxu0 0.0
        %1843 = vmatpush1.msra.mxu0 0.0
        %1844 = vmatprep.subr.mxu0 0.0
        %1845 = vmatpush1.msra.mxu0 0.0
        %1846 = vmatprep.subr.mxu0 0.0
        %1847 = vmatpush1.msra.mxu0 0.0
        %1848 = vmatprep.subr.mxu0 0.0
        %1849 = vmatpush1.msra.mxu0 0.0
        %1850 = vmatprep.subr.mxu0 0.0
        %1851 = vmatpush1.msra.mxu0 0.0
        %1852 = vmatprep.subr.mxu0 0.0
        %1853 = vmatpush1.msra.mxu0 0.0
        %1854 = vmatprep.subr.mxu0 0.0
        %1855 = vmatpush1.msra.mxu0 0.0
        %1856 = vmatprep.subr.mxu0 0.0
        %1857 = vmatpush1.msra.mxu0 0.0
        %1858 = vmatprep.subr.mxu0 0.0
        %1859 = vmatpush1.msra.mxu0 0.0
        %1860 = vmatprep.subr.mxu0 0.0
        %1861 = vmatpush1.msra.mxu0 0.0
        %1862 = vmatprep.mubr.f32.mxu0 0.0
        %1863 = vmatmul.mubr.f32.gmra.mrb[0].mxu0 %v1796
        %v1864 = vpop.f32.mrb[0].mxu0
        %v1865 = vadd.f32 %v1037, %v1864
        %v1866 = vpop.f32.mrb[0].mxu0
        %1867 = vdwg.mxu0
        %s1868 = scalar_lea.vmem %s469, 24 [#allocation7]
        %1869 = vst.msk [vmem:[%s1868] sm:$0xff] %vm1112, %v1865
        %s1870 = smul.u32 4, 4
        %s1871 = smul.addr %s1870, 8
        %s1872 = scalar_lea.vmem [#allocation2], %s1871
        %v1873 = vld [vmem:[%s1872] sm:$0xff]
        %v1874 = vld [vmem:[%s1872 + $0x8] sm:$0xff]
        %v1875 = vld [vmem:[%s1872 + $0x10] sm:$0xff]
        %v1876 = vld [vmem:[%s1872 + $0x18] sm:$0xff]
        %1877 = vmatprep.subr.mxu0 %v820
        %1878 = vmatpush1.msra.mxu0 %v819
        %1879 = vmatprep.subr.mxu0 %v824
        %1880 = vmatpush1.msra.mxu0 %v823
        %1881 = vmatprep.subr.mxu0 %v828
        %1882 = vmatpush1.msra.mxu0 %v827
        %1883 = vmatprep.subr.mxu0 %v832
        %1884 = vmatpush1.msra.mxu0 %v831
        %1885 = vmatprep.subr.mxu0 %v836
        %1886 = vmatpush1.msra.mxu0 %v835
        %1887 = vmatprep.subr.mxu0 %v840
        %1888 = vmatpush1.msra.mxu0 %v839
        %1889 = vmatprep.subr.mxu0 0.0
        %1890 = vmatpush1.msra.mxu0 0.0
        %1891 = vmatprep.subr.mxu0 0.0
        %1892 = vmatpush1.msra.mxu0 0.0
        %1893 = vmatprep.subr.mxu0 0.0
        %1894 = vmatpush1.msra.mxu0 0.0
        %1895 = vmatprep.subr.mxu0 0.0
        %1896 = vmatpush1.msra.mxu0 0.0
        %1897 = vmatprep.subr.mxu0 0.0
        %1898 = vmatpush1.msra.mxu0 0.0
        %1899 = vmatprep.subr.mxu0 0.0
        %1900 = vmatpush1.msra.mxu0 0.0
        %1901 = vmatprep.subr.mxu0 0.0
        %1902 = vmatpush1.msra.mxu0 0.0
        %1903 = vmatprep.subr.mxu0 0.0
        %1904 = vmatpush1.msra.mxu0 0.0
        %1905 = vmatprep.subr.mxu0 0.0
        %1906 = vmatpush1.msra.mxu0 0.0
        %1907 = vmatprep.subr.mxu0 0.0
        %1908 = vmatpush1.msra.mxu0 0.0
        %1909 = vmatprep.subr.mxu0 0.0
        %1910 = vmatpush1.msra.mxu0 0.0
        %1911 = vmatprep.subr.mxu0 0.0
        %1912 = vmatpush1.msra.mxu0 0.0
        %1913 = vmatprep.subr.mxu0 0.0
        %1914 = vmatpush1.msra.mxu0 0.0
        %1915 = vmatprep.subr.mxu0 0.0
        %1916 = vmatpush1.msra.mxu0 0.0
        %1917 = vmatprep.subr.mxu0 0.0
        %1918 = vmatpush1.msra.mxu0 0.0
        %1919 = vmatprep.subr.mxu0 0.0
        %1920 = vmatpush1.msra.mxu0 0.0
        %1921 = vmatprep.subr.mxu0 0.0
        %1922 = vmatpush1.msra.mxu0 0.0
        %1923 = vmatprep.subr.mxu0 0.0
        %1924 = vmatpush1.msra.mxu0 0.0
        %1925 = vmatprep.subr.mxu0 0.0
        %1926 = vmatpush1.msra.mxu0 0.0
        %1927 = vmatprep.subr.mxu0 0.0
        %1928 = vmatpush1.msra.mxu0 0.0
        %1929 = vmatprep.subr.mxu0 0.0
        %1930 = vmatpush1.msra.mxu0 0.0
        %1931 = vmatprep.subr.mxu0 0.0
        %1932 = vmatpush1.msra.mxu0 0.0
        %1933 = vmatprep.subr.mxu0 0.0
        %1934 = vmatpush1.msra.mxu0 0.0
        %1935 = vmatprep.subr.mxu0 0.0
        %1936 = vmatpush1.msra.mxu0 0.0
        %1937 = vmatprep.subr.mxu0 0.0
        %1938 = vmatpush1.msra.mxu0 0.0
        %1939 = vmatprep.subr.mxu0 0.0
        %1940 = vmatpush1.msra.mxu0 0.0
        %1941 = vmatprep.mubr.f32.mxu0 0.0
        %1942 = vmatmul.mubr.f32.gmra.mrb[0].mxu0 %v1796
        %v1943 = vpop.f32.mrb[0].mxu0
        %v1944 = vadd.f32 0.0, %v1943
        %v1945 = vpop.f32.mrb[0].mxu0
        %v1946 = vadd.f32 0.0, %v1945
        %1947 = vdwg.mxu0
        %1948 = vmatprep.subr.mxu0 %v822
        %1949 = vmatpush1.msra.mxu0 %v821
        %1950 = vmatprep.subr.mxu0 %v826
        %1951 = vmatpush1.msra.mxu0 %v825
        %1952 = vmatprep.subr.mxu0 %v830
        %1953 = vmatpush1.msra.mxu0 %v829
        %1954 = vmatprep.subr.mxu0 %v834
        %1955 = vmatpush1.msra.mxu0 %v833
        %1956 = vmatprep.subr.mxu0 %v838
        %1957 = vmatpush1.msra.mxu0 %v837
        %1958 = vmatprep.subr.mxu0 %v842
        %1959 = vmatpush1.msra.mxu0 %v841
        %1960 = vmatprep.subr.mxu0 0.0
        %1961 = vmatpush1.msra.mxu0 0.0
        %1962 = vmatprep.subr.mxu0 0.0
        %1963 = vmatpush1.msra.mxu0 0.0
        %1964 = vmatprep.subr.mxu0 0.0
        %1965 = vmatpush1.msra.mxu0 0.0
        %1966 = vmatprep.subr.mxu0 0.0
        %1967 = vmatpush1.msra.mxu0 0.0
        %1968 = vmatprep.subr.mxu0 0.0
        %1969 = vmatpush1.msra.mxu0 0.0
        %1970 = vmatprep.subr.mxu0 0.0
        %1971 = vmatpush1.msra.mxu0 0.0
        %1972 = vmatprep.subr.mxu0 0.0
        %1973 = vmatpush1.msra.mxu0 0.0
        %1974 = vmatprep.subr.mxu0 0.0
        %1975 = vmatpush1.msra.mxu0 0.0
        %1976 = vmatprep.subr.mxu0 0.0
        %1977 = vmatpush1.msra.mxu0 0.0
        %1978 = vmatprep.subr.mxu0 0.0
        %1979 = vmatpush1.msra.mxu0 0.0
        %1980 = vmatprep.subr.mxu0 0.0
        %1981 = vmatpush1.msra.mxu0 0.0
        %1982 = vmatprep.subr.mxu0 0.0
        %1983 = vmatpush1.msra.mxu0 0.0
        %1984 = vmatprep.subr.mxu0 0.0
        %1985 = vmatpush1.msra.mxu0 0.0
        %1986 = vmatprep.subr.mxu0 0.0
        %1987 = vmatpush1.msra.mxu0 0.0
        %1988 = vmatprep.subr.mxu0 0.0
        %1989 = vmatpush1.msra.mxu0 0.0
        %1990 = vmatprep.subr.mxu0 0.0
        %1991 = vmatpush1.msra.mxu0 0.0
        %1992 = vmatprep.subr.mxu0 0.0
        %1993 = vmatpush1.msra.mxu0 0.0
        %1994 = vmatprep.subr.mxu0 0.0
        %1995 = vmatpush1.msra.mxu0 0.0
        %1996 = vmatprep.subr.mxu0 0.0
        %1997 = vmatpush1.msra.mxu0 0.0
        %1998 = vmatprep.subr.mxu0 0.0
        %1999 = vmatpush1.msra.mxu0 0.0
        %2000 = vmatprep.subr.mxu0 0.0
        %2001 = vmatpush1.msra.mxu0 0.0
        %2002 = vmatprep.subr.mxu0 0.0
        %2003 = vmatpush1.msra.mxu0 0.0
        %2004 = vmatprep.subr.mxu0 0.0
        %2005 = vmatpush1.msra.mxu0 0.0
        %2006 = vmatprep.subr.mxu0 0.0
        %2007 = vmatpush1.msra.mxu0 0.0
        %2008 = vmatprep.subr.mxu0 0.0
        %2009 = vmatpush1.msra.mxu0 0.0
        %2010 = vmatprep.subr.mxu0 0.0
        %2011 = vmatpush1.msra.mxu0 0.0
        %2012 = vmatprep.mubr.f32.mxu0 0.0
        %2013 = vmatmul.mubr.f32.gmra.mrb[0].mxu0 %v1796
        %v2014 = vpop.f32.mrb[0].mxu0
        %v2015 = vadd.f32 0.0, %v2014
        %v2016 = vpop.f32.mrb[0].mxu0
        %v2017 = vadd.f32 0.0, %v2016
        %2018 = vdwg.mxu0
        %v2019 = vadd.f32 %v1873, %v1944
        %v2020 = vadd.f32 %v1874, %v1946
        %v2021 = vadd.f32 %v1875, %v2015
        %v2022 = vadd.f32 %v1876, %v2017
        %v2023 = vxor.u32 %v2019, 2147483648
        %v2024 = vmul.f32 %v2023, 1.442695
        %v2025 = vpow.pop %v2024
        %v2026 = vadd.f32 %v2025, 1.0
        %v2027 = vrcp.pop %v2026
        %v2028 = vmul.f32 1.0, %v2027
        %v2029 = vxor.u32 %v2020, 2147483648
        %v2030 = vmul.f32 %v2029, 1.442695
        %v2031 = vpow.pop %v2030
        %v2032 = vadd.f32 %v2031, 1.0
        %v2033 = vrcp.pop %v2032
        %v2034 = vmul.f32 1.0, %v2033
        %v2035 = vtanh.pop %v2021
        %v2036 = vxor.u32 %v2022, 2147483648
        %v2037 = vmul.f32 %v2036, 1.442695
        %v2038 = vpow.pop %v2037
        %v2039 = vadd.f32 %v2038, 1.0
        %v2040 = vrcp.pop %v2039
        %v2041 = vmul.f32 1.0, %v2040
        %v2042 = vmul.f32 %v2034, %v1792
        %v2043 = vmul.f32 %v2028, %v2035
        %v2044 = vadd.f32 %v2042, %v2043
        %v2045 = vtanh.pop %v2044
        %v2046 = vmul.f32 %v2041, %v2045
        %v2048 = vsel %vm859, %v2046, 0
        %2050 = vmatprep.subr.mxu0 0.0
        %2051 = vmatpush1.msra.mxu0 %v843
        %2052 = vmatprep.subr.mxu0 0.0
        %2053 = vmatpush1.msra.mxu0 %v844
        %2054 = vmatprep.subr.mxu0 0.0
        %2055 = vmatpush1.msra.mxu0 %v845
        %2056 = vmatprep.subr.mxu0 0.0
        %2057 = vmatpush1.msra.mxu0 %v846
        %2058 = vmatprep.subr.mxu0 0.0
        %2059 = vmatpush1.msra.mxu0 %v847
        %2060 = vmatprep.subr.mxu0 0.0
        %2061 = vmatpush1.msra.mxu0 %v848
        %2062 = vmatprep.subr.mxu0 0.0
        %2063 = vmatpush1.msra.mxu0 0.0
        %2064 = vmatprep.subr.mxu0 0.0
        %2065 = vmatpush1.msra.mxu0 0.0
        %2066 = vmatprep.subr.mxu0 0.0
        %2067 = vmatpush1.msra.mxu0 0.0
        %2068 = vmatprep.subr.mxu0 0.0
        %2069 = vmatpush1.msra.mxu0 0.0
        %2070 = vmatprep.subr.mxu0 0.0
        %2071 = vmatpush1.msra.mxu0 0.0
        %2072 = vmatprep.subr.mxu0 0.0
        %2073 = vmatpush1.msra.mxu0 0.0
        %2074 = vmatprep.subr.mxu0 0.0
        %2075 = vmatpush1.msra.mxu0 0.0
        %2076 = vmatprep.subr.mxu0 0.0
        %2077 = vmatpush1.msra.mxu0 0.0
        %2078 = vmatprep.subr.mxu0 0.0
        %2079 = vmatpush1.msra.mxu0 0.0
        %2080 = vmatprep.subr.mxu0 0.0
        %2081 = vmatpush1.msra.mxu0 0.0
        %2082 = vmatprep.subr.mxu0 0.0
        %2083 = vmatpush1.msra.mxu0 0.0
        %2084 = vmatprep.subr.mxu0 0.0
        %2085 = vmatpush1.msra.mxu0 0.0
        %2086 = vmatprep.subr.mxu0 0.0
        %2087 = vmatpush1.msra.mxu0 0.0
        %2088 = vmatprep.subr.mxu0 0.0
        %2089 = vmatpush1.msra.mxu0 0.0
        %2090 = vmatprep.subr.mxu0 0.0
        %2091 = vmatpush1.msra.mxu0 0.0
        %2092 = vmatprep.subr.mxu0 0.0
        %2093 = vmatpush1.msra.mxu0 0.0
        %2094 = vmatprep.subr.mxu0 0.0
        %2095 = vmatpush1.msra.mxu0 0.0
        %2096 = vmatprep.subr.mxu0 0.0
        %2097 = vmatpush1.msra.mxu0 0.0
        %2098 = vmatprep.subr.mxu0 0.0
        %2099 = vmatpush1.msra.mxu0 0.0
        %2100 = vmatprep.subr.mxu0 0.0
        %2101 = vmatpush1.msra.mxu0 0.0
        %2102 = vmatprep.subr.mxu0 0.0
        %2103 = vmatpush1.msra.mxu0 0.0
        %2104 = vmatprep.subr.mxu0 0.0
        %2105 = vmatpush1.msra.mxu0 0.0
        %2106 = vmatprep.subr.mxu0 0.0
        %2107 = vmatpush1.msra.mxu0 0.0
        %2108 = vmatprep.subr.mxu0 0.0
        %2109 = vmatpush1.msra.mxu0 0.0
        %2110 = vmatprep.subr.mxu0 0.0
        %2111 = vmatpush1.msra.mxu0 0.0
        %2112 = vmatprep.subr.mxu0 0.0
        %2113 = vmatpush1.msra.mxu0 0.0
        %2114 = vmatprep.mubr.f32.mxu0 0.0
        %2115 = vmatmul.mubr.f32.gmra.mrb[0].mxu0 %v2048
        %v2116 = vpop.f32.mrb[0].mxu0
        %v2117 = vadd.f32 %v1037, %v2116
        %v2118 = vpop.f32.mrb[0].mxu0
        %2119 = vdwg.mxu0
        %s2120 = scalar_lea.vmem %s469, 32 [#allocation7]
        %2121 = vst.msk [vmem:[%s2120] sm:$0xff] %vm1112, %v2117
        %s2122 = smul.u32 5, 4
        %s2123 = smul.addr %s2122, 8
        %s2124 = scalar_lea.vmem [#allocation2], %s2123
        %v2125 = vld [vmem:[%s2124] sm:$0xff]
        %v2126 = vld [vmem:[%s2124 + $0x8] sm:$0xff]
        %v2127 = vld [vmem:[%s2124 + $0x10] sm:$0xff]
        %v2128 = vld [vmem:[%s2124 + $0x18] sm:$0xff]
        %2129 = vmatprep.subr.mxu0 %v820
        %2130 = vmatpush1.msra.mxu0 %v819
        %2131 = vmatprep.subr.mxu0 %v824
        %2132 = vmatpush1.msra.mxu0 %v823
        %2133 = vmatprep.subr.mxu0 %v828
        %2134 = vmatpush1.msra.mxu0 %v827
        %2135 = vmatprep.subr.mxu0 %v832
        %2136 = vmatpush1.msra.mxu0 %v831
        %2137 = vmatprep.subr.mxu0 %v836
        %2138 = vmatpush1.msra.mxu0 %v835
        %2139 = vmatprep.subr.mxu0 %v840
        %2140 = vmatpush1.msra.mxu0 %v839
        %2141 = vmatprep.subr.mxu0 0.0
        %2142 = vmatpush1.msra.mxu0 0.0
        %2143 = vmatprep.subr.mxu0 0.0
        %2144 = vmatpush1.msra.mxu0 0.0
        %2145 = vmatprep.subr.mxu0 0.0
        %2146 = vmatpush1.msra.mxu0 0.0
        %2147 = vmatprep.subr.mxu0 0.0
        %2148 = vmatpush1.msra.mxu0 0.0
        %2149 = vmatprep.subr.mxu0 0.0
        %2150 = vmatpush1.msra.mxu0 0.0
        %2151 = vmatprep.subr.mxu0 0.0
        %2152 = vmatpush1.msra.mxu0 0.0
        %2153 = vmatprep.subr.mxu0 0.0
        %2154 = vmatpush1.msra.mxu0 0.0
        %2155 = vmatprep.subr.mxu0 0.0
        %2156 = vmatpush1.msra.mxu0 0.0
        %2157 = vmatprep.subr.mxu0 0.0
        %2158 = vmatpush1.msra.mxu0 0.0
        %2159 = vmatprep.subr.mxu0 0.0
        %2160 = vmatpush1.msra.mxu0 0.0
        %2161 = vmatprep.subr.mxu0 0.0
        %2162 = vmatpush1.msra.mxu0 0.0
        %2163 = vmatprep.subr.mxu0 0.0
        %2164 = vmatpush1.msra.mxu0 0.0
        %2165 = vmatprep.subr.mxu0 0.0
        %2166 = vmatpush1.msra.mxu0 0.0
        %2167 = vmatprep.subr.mxu0 0.0
        %2168 = vmatpush1.msra.mxu0 0.0
        %2169 = vmatprep.subr.mxu0 0.0
        %2170 = vmatpush1.msra.mxu0 0.0
        %2171 = vmatprep.subr.mxu0 0.0
        %2172 = vmatpush1.msra.mxu0 0.0
        %2173 = vmatprep.subr.mxu0 0.0
        %2174 = vmatpush1.msra.mxu0 0.0
        %2175 = vmatprep.subr.mxu0 0.0
        %2176 = vmatpush1.msra.mxu0 0.0
        %2177 = vmatprep.subr.mxu0 0.0
        %2178 = vmatpush1.msra.mxu0 0.0
        %2179 = vmatprep.subr.mxu0 0.0
        %2180 = vmatpush1.msra.mxu0 0.0
        %2181 = vmatprep.subr.mxu0 0.0
        %2182 = vmatpush1.msra.mxu0 0.0
        %2183 = vmatprep.subr.mxu0 0.0
        %2184 = vmatpush1.msra.mxu0 0.0
        %2185 = vmatprep.subr.mxu0 0.0
        %2186 = vmatpush1.msra.mxu0 0.0
        %2187 = vmatprep.subr.mxu0 0.0
        %2188 = vmatpush1.msra.mxu0 0.0
        %2189 = vmatprep.subr.mxu0 0.0
        %2190 = vmatpush1.msra.mxu0 0.0
        %2191 = vmatprep.subr.mxu0 0.0
        %2192 = vmatpush1.msra.mxu0 0.0
        %2193 = vmatprep.mubr.f32.mxu0 0.0
        %2194 = vmatmul.mubr.f32.gmra.mrb[0].mxu0 %v2048
        %v2195 = vpop.f32.mrb[0].mxu0
        %v2196 = vadd.f32 0.0, %v2195
        %v2197 = vpop.f32.mrb[0].mxu0
        %v2198 = vadd.f32 0.0, %v2197
        %2199 = vdwg.mxu0
        %2200 = vmatprep.subr.mxu0 %v822
        %2201 = vmatpush1.msra.mxu0 %v821
        %2202 = vmatprep.subr.mxu0 %v826
        %2203 = vmatpush1.msra.mxu0 %v825
        %2204 = vmatprep.subr.mxu0 %v830
        %2205 = vmatpush1.msra.mxu0 %v829
        %2206 = vmatprep.subr.mxu0 %v834
        %2207 = vmatpush1.msra.mxu0 %v833
        %2208 = vmatprep.subr.mxu0 %v838
        %2209 = vmatpush1.msra.mxu0 %v837
        %2210 = vmatprep.subr.mxu0 %v842
        %2211 = vmatpush1.msra.mxu0 %v841
        %2212 = vmatprep.subr.mxu0 0.0
        %2213 = vmatpush1.msra.mxu0 0.0
        %2214 = vmatprep.subr.mxu0 0.0
        %2215 = vmatpush1.msra.mxu0 0.0
        %2216 = vmatprep.subr.mxu0 0.0
        %2217 = vmatpush1.msra.mxu0 0.0
        %2218 = vmatprep.subr.mxu0 0.0
        %2219 = vmatpush1.msra.mxu0 0.0
        %2220 = vmatprep.subr.mxu0 0.0
        %2221 = vmatpush1.msra.mxu0 0.0
        %2222 = vmatprep.subr.mxu0 0.0
        %2223 = vmatpush1.msra.mxu0 0.0
        %2224 = vmatprep.subr.mxu0 0.0
        %2225 = vmatpush1.msra.mxu0 0.0
        %2226 = vmatprep.subr.mxu0 0.0
        %2227 = vmatpush1.msra.mxu0 0.0
        %2228 = vmatprep.subr.mxu0 0.0
        %2229 = vmatpush1.msra.mxu0 0.0
        %2230 = vmatprep.subr.mxu0 0.0
        %2231 = vmatpush1.msra.mxu0 0.0
        %2232 = vmatprep.subr.mxu0 0.0
        %2233 = vmatpush1.msra.mxu0 0.0
        %2234 = vmatprep.subr.mxu0 0.0
        %2235 = vmatpush1.msra.mxu0 0.0
        %2236 = vmatprep.subr.mxu0 0.0
        %2237 = vmatpush1.msra.mxu0 0.0
        %2238 = vmatprep.subr.mxu0 0.0
        %2239 = vmatpush1.msra.mxu0 0.0
        %2240 = vmatprep.subr.mxu0 0.0
        %2241 = vmatpush1.msra.mxu0 0.0
        %2242 = vmatprep.subr.mxu0 0.0
        %2243 = vmatpush1.msra.mxu0 0.0
        %2244 = vmatprep.subr.mxu0 0.0
        %2245 = vmatpush1.msra.mxu0 0.0
        %2246 = vmatprep.subr.mxu0 0.0
        %2247 = vmatpush1.msra.mxu0 0.0
        %2248 = vmatprep.subr.mxu0 0.0
        %2249 = vmatpush1.msra.mxu0 0.0
        %2250 = vmatprep.subr.mxu0 0.0
        %2251 = vmatpush1.msra.mxu0 0.0
        %2252 = vmatprep.subr.mxu0 0.0
        %2253 = vmatpush1.msra.mxu0 0.0
        %2254 = vmatprep.subr.mxu0 0.0
        %2255 = vmatpush1.msra.mxu0 0.0
        %2256 = vmatprep.subr.mxu0 0.0
        %2257 = vmatpush1.msra.mxu0 0.0
        %2258 = vmatprep.subr.mxu0 0.0
        %2259 = vmatpush1.msra.mxu0 0.0
        %2260 = vmatprep.subr.mxu0 0.0
        %2261 = vmatpush1.msra.mxu0 0.0
        %2262 = vmatprep.subr.mxu0 0.0
        %2263 = vmatpush1.msra.mxu0 0.0
        %2264 = vmatprep.mubr.f32.mxu0 0.0
        %2265 = vmatmul.mubr.f32.gmra.mrb[0].mxu0 %v2048
        %v2266 = vpop.f32.mrb[0].mxu0
        %v2267 = vadd.f32 0.0, %v2266
        %v2268 = vpop.f32.mrb[0].mxu0
        %v2269 = vadd.f32 0.0, %v2268
        %2270 = vdwg.mxu0
        %v2271 = vadd.f32 %v2125, %v2196
        %v2272 = vadd.f32 %v2126, %v2198
        %v2273 = vadd.f32 %v2127, %v2267
        %v2274 = vadd.f32 %v2128, %v2269
        %v2275 = vxor.u32 %v2271, 2147483648
        %v2276 = vmul.f32 %v2275, 1.442695
        %v2277 = vpow.pop %v2276
        %v2278 = vadd.f32 %v2277, 1.0
        %v2279 = vrcp.pop %v2278
        %v2280 = vmul.f32 1.0, %v2279
        %v2281 = vxor.u32 %v2272, 2147483648
        %v2282 = vmul.f32 %v2281, 1.442695
        %v2283 = vpow.pop %v2282
        %v2284 = vadd.f32 %v2283, 1.0
        %v2285 = vrcp.pop %v2284
        %v2286 = vmul.f32 1.0, %v2285
        %v2287 = vtanh.pop %v2273
        %v2288 = vxor.u32 %v2274, 2147483648
        %v2289 = vmul.f32 %v2288, 1.442695
        %v2290 = vpow.pop %v2289
        %v2291 = vadd.f32 %v2290, 1.0
        %v2292 = vrcp.pop %v2291
        %v2293 = vmul.f32 1.0, %v2292
        %v2294 = vmul.f32 %v2286, %v2044
        %v2295 = vmul.f32 %v2280, %v2287
        %v2296 = vadd.f32 %v2294, %v2295
        %v2297 = vtanh.pop %v2296
        %v2298 = vmul.f32 %v2293, %v2297
        %v2300 = vsel %vm859, %v2298, 0
        %2302 = vmatprep.subr.mxu0 0.0
        %2303 = vmatpush1.msra.mxu0 %v843
        %2304 = vmatprep.subr.mxu0 0.0
        %2305 = vmatpush1.msra.mxu0 %v844
        %2306 = vmatprep.subr.mxu0 0.0
        %2307 = vmatpush1.msra.mxu0 %v845
        %2308 = vmatprep.subr.mxu0 0.0
        %2309 = vmatpush1.msra.mxu0 %v846
        %2310 = vmatprep.subr.mxu0 0.0
        %2311 = vmatpush1.msra.mxu0 %v847
        %2312 = vmatprep.subr.mxu0 0.0
        %2313 = vmatpush1.msra.mxu0 %v848
        %2314 = vmatprep.subr.mxu0 0.0
        %2315 = vmatpush1.msra.mxu0 0.0
        %2316 = vmatprep.subr.mxu0 0.0
        %2317 = vmatpush1.msra.mxu0 0.0
        %2318 = vmatprep.subr.mxu0 0.0
        %2319 = vmatpush1.msra.mxu0 0.0
        %2320 = vmatprep.subr.mxu0 0.0
        %2321 = vmatpush1.msra.mxu0 0.0
        %2322 = vmatprep.subr.mxu0 0.0
        %2323 = vmatpush1.msra.mxu0 0.0
        %2324 = vmatprep.subr.mxu0 0.0
        %2325 = vmatpush1.msra.mxu0 0.0
        %2326 = vmatprep.subr.mxu0 0.0
        %2327 = vmatpush1.msra.mxu0 0.0
        %2328 = vmatprep.subr.mxu0 0.0
        %2329 = vmatpush1.msra.mxu0 0.0
        %2330 = vmatprep.subr.mxu0 0.0
        %2331 = vmatpush1.msra.mxu0 0.0
        %2332 = vmatprep.subr.mxu0 0.0
        %2333 = vmatpush1.msra.mxu0 0.0
        %2334 = vmatprep.subr.mxu0 0.0
        %2335 = vmatpush1.msra.mxu0 0.0
        %2336 = vmatprep.subr.mxu0 0.0
        %2337 = vmatpush1.msra.mxu0 0.0
        %2338 = vmatprep.subr.mxu0 0.0
        %2339 = vmatpush1.msra.mxu0 0.0
        %2340 = vmatprep.subr.mxu0 0.0
        %2341 = vmatpush1.msra.mxu0 0.0
        %2342 = vmatprep.subr.mxu0 0.0
        %2343 = vmatpush1.msra.mxu0 0.0
        %2344 = vmatprep.subr.mxu0 0.0
        %2345 = vmatpush1.msra.mxu0 0.0
        %2346 = vmatprep.subr.mxu0 0.0
        %2347 = vmatpush1.msra.mxu0 0.0
        %2348 = vmatprep.subr.mxu0 0.0
        %2349 = vmatpush1.msra.mxu0 0.0
        %2350 = vmatprep.subr.mxu0 0.0
        %2351 = vmatpush1.msra.mxu0 0.0
        %2352 = vmatprep.subr.mxu0 0.0
        %2353 = vmatpush1.msra.mxu0 0.0
        %2354 = vmatprep.subr.mxu0 0.0
        %2355 = vmatpush1.msra.mxu0 0.0
        %2356 = vmatprep.subr.mxu0 0.0
        %2357 = vmatpush1.msra.mxu0 0.0
        %2358 = vmatprep.subr.mxu0 0.0
        %2359 = vmatpush1.msra.mxu0 0.0
        %2360 = vmatprep.subr.mxu0 0.0
        %2361 = vmatpush1.msra.mxu0 0.0
        %2362 = vmatprep.subr.mxu0 0.0
        %2363 = vmatpush1.msra.mxu0 0.0
        %2364 = vmatprep.subr.mxu0 0.0
        %2365 = vmatpush1.msra.mxu0 0.0
        %2366 = vmatprep.mubr.f32.mxu0 0.0
        %2367 = vmatmul.mubr.f32.gmra.mrb[0].mxu0 %v2300
        %v2368 = vpop.f32.mrb[0].mxu0
        %v2369 = vadd.f32 %v1037, %v2368
        %v2370 = vpop.f32.mrb[0].mxu0
        %2371 = vdwg.mxu0
        %s2372 = scalar_lea.vmem %s469, 40 [#allocation7]
        %2373 = vst.msk [vmem:[%s2372] sm:$0xff] %vm1112, %v2369
        %s2374 = smul.u32 6, 4
        %s2375 = smul.addr %s2374, 8
        %s2376 = scalar_lea.vmem [#allocation2], %s2375
        %v2377 = vld [vmem:[%s2376] sm:$0xff]
        %v2378 = vld [vmem:[%s2376 + $0x8] sm:$0xff]
        %v2379 = vld [vmem:[%s2376 + $0x10] sm:$0xff]
        %v2380 = vld [vmem:[%s2376 + $0x18] sm:$0xff]
        %2381 = vmatprep.subr.mxu0 %v820
        %2382 = vmatpush1.msra.mxu0 %v819
        %2383 = vmatprep.subr.mxu0 %v824
        %2384 = vmatpush1.msra.mxu0 %v823
        %2385 = vmatprep.subr.mxu0 %v828
        %2386 = vmatpush1.msra.mxu0 %v827
        %2387 = vmatprep.subr.mxu0 %v832
        %2388 = vmatpush1.msra.mxu0 %v831
        %2389 = vmatprep.subr.mxu0 %v836
        %2390 = vmatpush1.msra.mxu0 %v835
        %2391 = vmatprep.subr.mxu0 %v840
        %2392 = vmatpush1.msra.mxu0 %v839
        %2393 = vmatprep.subr.mxu0 0.0
        %2394 = vmatpush1.msra.mxu0 0.0
        %2395 = vmatprep.subr.mxu0 0.0
        %2396 = vmatpush1.msra.mxu0 0.0
        %2397 = vmatprep.subr.mxu0 0.0
        %2398 = vmatpush1.msra.mxu0 0.0
        %2399 = vmatprep.subr.mxu0 0.0
        %2400 = vmatpush1.msra.mxu0 0.0
        %2401 = vmatprep.subr.mxu0 0.0
        %2402 = vmatpush1.msra.mxu0 0.0
        %2403 = vmatprep.subr.mxu0 0.0
        %2404 = vmatpush1.msra.mxu0 0.0
        %2405 = vmatprep.subr.mxu0 0.0
        %2406 = vmatpush1.msra.mxu0 0.0
        %2407 = vmatprep.subr.mxu0 0.0
        %2408 = vmatpush1.msra.mxu0 0.0
        %2409 = vmatprep.subr.mxu0 0.0
        %2410 = vmatpush1.msra.mxu0 0.0
        %2411 = vmatprep.subr.mxu0 0.0
        %2412 = vmatpush1.msra.mxu0 0.0
        %2413 = vmatprep.subr.mxu0 0.0
        %2414 = vmatpush1.msra.mxu0 0.0
        %2415 = vmatprep.subr.mxu0 0.0
        %2416 = vmatpush1.msra.mxu0 0.0
        %2417 = vmatprep.subr.mxu0 0.0
        %2418 = vmatpush1.msra.mxu0 0.0
        %2419 = vmatprep.subr.mxu0 0.0
        %2420 = vmatpush1.msra.mxu0 0.0
        %2421 = vmatprep.subr.mxu0 0.0
        %2422 = vmatpush1.msra.mxu0 0.0
        %2423 = vmatprep.subr.mxu0 0.0
        %2424 = vmatpush1.msra.mxu0 0.0
        %2425 = vmatprep.subr.mxu0 0.0
        %2426 = vmatpush1.msra.mxu0 0.0
        %2427 = vmatprep.subr.mxu0 0.0
        %2428 = vmatpush1.msra.mxu0 0.0
        %2429 = vmatprep.subr.mxu0 0.0
        %2430 = vmatpush1.msra.mxu0 0.0
        %2431 = vmatprep.subr.mxu0 0.0
        %2432 = vmatpush1.msra.mxu0 0.0
        %2433 = vmatprep.subr.mxu0 0.0
        %2434 = vmatpush1.msra.mxu0 0.0
        %2435 = vmatprep.subr.mxu0 0.0
        %2436 = vmatpush1.msra.mxu0 0.0
        %2437 = vmatprep.subr.mxu0 0.0
        %2438 = vmatpush1.msra.mxu0 0.0
        %2439 = vmatprep.subr.mxu0 0.0
        %2440 = vmatpush1.msra.mxu0 0.0
        %2441 = vmatprep.subr.mxu0 0.0
        %2442 = vmatpush1.msra.mxu0 0.0
        %2443 = vmatprep.subr.mxu0 0.0
        %2444 = vmatpush1.msra.mxu0 0.0
        %2445 = vmatprep.mubr.f32.mxu0 0.0
        %2446 = vmatmul.mubr.f32.gmra.mrb[0].mxu0 %v2300
        %v2447 = vpop.f32.mrb[0].mxu0
        %v2448 = vadd.f32 0.0, %v2447
        %v2449 = vpop.f32.mrb[0].mxu0
        %v2450 = vadd.f32 0.0, %v2449
        %2451 = vdwg.mxu0
        %2452 = vmatprep.subr.mxu0 %v822
        %2453 = vmatpush1.msra.mxu0 %v821
        %2454 = vmatprep.subr.mxu0 %v826
        %2455 = vmatpush1.msra.mxu0 %v825
        %2456 = vmatprep.subr.mxu0 %v830
        %2457 = vmatpush1.msra.mxu0 %v829
        %2458 = vmatprep.subr.mxu0 %v834
        %2459 = vmatpush1.msra.mxu0 %v833
        %2460 = vmatprep.subr.mxu0 %v838
        %2461 = vmatpush1.msra.mxu0 %v837
        %2462 = vmatprep.subr.mxu0 %v842
        %2463 = vmatpush1.msra.mxu0 %v841
        %2464 = vmatprep.subr.mxu0 0.0
        %2465 = vmatpush1.msra.mxu0 0.0
        %2466 = vmatprep.subr.mxu0 0.0
        %2467 = vmatpush1.msra.mxu0 0.0
        %2468 = vmatprep.subr.mxu0 0.0
        %2469 = vmatpush1.msra.mxu0 0.0
        %2470 = vmatprep.subr.mxu0 0.0
        %2471 = vmatpush1.msra.mxu0 0.0
        %2472 = vmatprep.subr.mxu0 0.0
        %2473 = vmatpush1.msra.mxu0 0.0
        %2474 = vmatprep.subr.mxu0 0.0
        %2475 = vmatpush1.msra.mxu0 0.0
        %2476 = vmatprep.subr.mxu0 0.0
        %2477 = vmatpush1.msra.mxu0 0.0
        %2478 = vmatprep.subr.mxu0 0.0
        %2479 = vmatpush1.msra.mxu0 0.0
        %2480 = vmatprep.subr.mxu0 0.0
        %2481 = vmatpush1.msra.mxu0 0.0
        %2482 = vmatprep.subr.mxu0 0.0
        %2483 = vmatpush1.msra.mxu0 0.0
        %2484 = vmatprep.subr.mxu0 0.0
        %2485 = vmatpush1.msra.mxu0 0.0
        %2486 = vmatprep.subr.mxu0 0.0
        %2487 = vmatpush1.msra.mxu0 0.0
        %2488 = vmatprep.subr.mxu0 0.0
        %2489 = vmatpush1.msra.mxu0 0.0
        %2490 = vmatprep.subr.mxu0 0.0
        %2491 = vmatpush1.msra.mxu0 0.0
        %2492 = vmatprep.subr.mxu0 0.0
        %2493 = vmatpush1.msra.mxu0 0.0
        %2494 = vmatprep.subr.mxu0 0.0
        %2495 = vmatpush1.msra.mxu0 0.0
        %2496 = vmatprep.subr.mxu0 0.0
        %2497 = vmatpush1.msra.mxu0 0.0
        %2498 = vmatprep.subr.mxu0 0.0
        %2499 = vmatpush1.msra.mxu0 0.0
        %2500 = vmatprep.subr.mxu0 0.0
        %2501 = vmatpush1.msra.mxu0 0.0
        %2502 = vmatprep.subr.mxu0 0.0
        %2503 = vmatpush1.msra.mxu0 0.0
        %2504 = vmatprep.subr.mxu0 0.0
        %2505 = vmatpush1.msra.mxu0 0.0
        %2506 = vmatprep.subr.mxu0 0.0
        %2507 = vmatpush1.msra.mxu0 0.0
        %2508 = vmatprep.subr.mxu0 0.0
        %2509 = vmatpush1.msra.mxu0 0.0
        %2510 = vmatprep.subr.mxu0 0.0
        %2511 = vmatpush1.msra.mxu0 0.0
        %2512 = vmatprep.subr.mxu0 0.0
        %2513 = vmatpush1.msra.mxu0 0.0
        %2514 = vmatprep.subr.mxu0 0.0
        %2515 = vmatpush1.msra.mxu0 0.0
        %2516 = vmatprep.mubr.f32.mxu0 0.0
        %2517 = vmatmul.mubr.f32.gmra.mrb[0].mxu0 %v2300
        %v2518 = vpop.f32.mrb[0].mxu0
        %v2519 = vadd.f32 0.0, %v2518
        %v2520 = vpop.f32.mrb[0].mxu0
        %v2521 = vadd.f32 0.0, %v2520
        %2522 = vdwg.mxu0
        %v2523 = vadd.f32 %v2377, %v2448
        %v2524 = vadd.f32 %v2378, %v2450
        %v2525 = vadd.f32 %v2379, %v2519
        %v2526 = vadd.f32 %v2380, %v2521
        %v2527 = vxor.u32 %v2523, 2147483648
        %v2528 = vmul.f32 %v2527, 1.442695
        %v2529 = vpow.pop %v2528
        %v2530 = vadd.f32 %v2529, 1.0
        %v2531 = vrcp.pop %v2530
        %v2532 = vmul.f32 1.0, %v2531
        %v2533 = vxor.u32 %v2524, 2147483648
        %v2534 = vmul.f32 %v2533, 1.442695
        %v2535 = vpow.pop %v2534
        %v2536 = vadd.f32 %v2535, 1.0
        %v2537 = vrcp.pop %v2536
        %v2538 = vmul.f32 1.0, %v2537
        %v2539 = vtanh.pop %v2525
        %v2540 = vxor.u32 %v2526, 2147483648
        %v2541 = vmul.f32 %v2540, 1.442695
        %v2542 = vpow.pop %v2541
        %v2543 = vadd.f32 %v2542, 1.0
        %v2544 = vrcp.pop %v2543
        %v2545 = vmul.f32 1.0, %v2544
        %v2546 = vmul.f32 %v2538, %v2296
        %v2547 = vmul.f32 %v2532, %v2539
        %v2548 = vadd.f32 %v2546, %v2547
        %v2549 = vtanh.pop %v2548
        %v2550 = vmul.f32 %v2545, %v2549
        %v2552 = vsel %vm859, %v2550, 0
        %2554 = vmatprep.subr.mxu0 0.0
        %2555 = vmatpush1.msra.mxu0 %v843
        %2556 = vmatprep.subr.mxu0 0.0
        %2557 = vmatpush1.msra.mxu0 %v844
        %2558 = vmatprep.subr.mxu0 0.0
        %2559 = vmatpush1.msra.mxu0 %v845
        %2560 = vmatprep.subr.mxu0 0.0
        %2561 = vmatpush1.msra.mxu0 %v846
        %2562 = vmatprep.subr.mxu0 0.0
        %2563 = vmatpush1.msra.mxu0 %v847
        %2564 = vmatprep.subr.mxu0 0.0
        %2565 = vmatpush1.msra.mxu0 %v848
        %2566 = vmatprep.subr.mxu0 0.0
        %2567 = vmatpush1.msra.mxu0 0.0
        %2568 = vmatprep.subr.mxu0 0.0
        %2569 = vmatpush1.msra.mxu0 0.0
        %2570 = vmatprep.subr.mxu0 0.0
        %2571 = vmatpush1.msra.mxu0 0.0
        %2572 = vmatprep.subr.mxu0 0.0
        %2573 = vmatpush1.msra.mxu0 0.0
        %2574 = vmatprep.subr.mxu0 0.0
        %2575 = vmatpush1.msra.mxu0 0.0
        %2576 = vmatprep.subr.mxu0 0.0
        %2577 = vmatpush1.msra.mxu0 0.0
        %2578 = vmatprep.subr.mxu0 0.0
        %2579 = vmatpush1.msra.mxu0 0.0
        %2580 = vmatprep.subr.mxu0 0.0
        %2581 = vmatpush1.msra.mxu0 0.0
        %2582 = vmatprep.subr.mxu0 0.0
        %2583 = vmatpush1.msra.mxu0 0.0
        %2584 = vmatprep.subr.mxu0 0.0
        %2585 = vmatpush1.msra.mxu0 0.0
        %2586 = vmatprep.subr.mxu0 0.0
        %2587 = vmatpush1.msra.mxu0 0.0
        %2588 = vmatprep.subr.mxu0 0.0
        %2589 = vmatpush1.msra.mxu0 0.0
        %2590 = vmatprep.subr.mxu0 0.0
        %2591 = vmatpush1.msra.mxu0 0.0
        %2592 = vmatprep.subr.mxu0 0.0
        %2593 = vmatpush1.msra.mxu0 0.0
        %2594 = vmatprep.subr.mxu0 0.0
        %2595 = vmatpush1.msra.mxu0 0.0
        %2596 = vmatprep.subr.mxu0 0.0
        %2597 = vmatpush1.msra.mxu0 0.0
        %2598 = vmatprep.subr.mxu0 0.0
        %2599 = vmatpush1.msra.mxu0 0.0
        %2600 = vmatprep.subr.mxu0 0.0
        %2601 = vmatpush1.msra.mxu0 0.0
        %2602 = vmatprep.subr.mxu0 0.0
        %2603 = vmatpush1.msra.mxu0 0.0
        %2604 = vmatprep.subr.mxu0 0.0
        %2605 = vmatpush1.msra.mxu0 0.0
        %2606 = vmatprep.subr.mxu0 0.0
        %2607 = vmatpush1.msra.mxu0 0.0
        %2608 = vmatprep.subr.mxu0 0.0
        %2609 = vmatpush1.msra.mxu0 0.0
        %2610 = vmatprep.subr.mxu0 0.0
        %2611 = vmatpush1.msra.mxu0 0.0
        %2612 = vmatprep.subr.mxu0 0.0
        %2613 = vmatpush1.msra.mxu0 0.0
        %2614 = vmatprep.subr.mxu0 0.0
        %2615 = vmatpush1.msra.mxu0 0.0
        %2616 = vmatprep.subr.mxu0 0.0
        %2617 = vmatpush1.msra.mxu0 0.0
        %2618 = vmatprep.mubr.f32.mxu0 0.0
        %2619 = vmatmul.mubr.f32.gmra.mrb[0].mxu0 %v2552
        %v2620 = vpop.f32.mrb[0].mxu0
        %v2621 = vadd.f32 %v1037, %v2620
        %v2622 = vpop.f32.mrb[0].mxu0
        %2623 = vdwg.mxu0
        %s2624 = scalar_lea.vmem %s469, 48 [#allocation7]
        %2625 = vst.msk [vmem:[%s2624] sm:$0xff] %vm1112, %v2621
        %s2626 = smul.u32 7, 4
        %s2627 = smul.addr %s2626, 8
        %s2628 = scalar_lea.vmem [#allocation2], %s2627
        %v2629 = vld [vmem:[%s2628] sm:$0xff]
        %v2630 = vld [vmem:[%s2628 + $0x8] sm:$0xff]
        %v2631 = vld [vmem:[%s2628 + $0x10] sm:$0xff]
        %v2632 = vld [vmem:[%s2628 + $0x18] sm:$0xff]
        %2633 = vmatprep.subr.mxu0 %v820
        %2634 = vmatpush1.msra.mxu0 %v819
        %2635 = vmatprep.subr.mxu0 %v824
        %2636 = vmatpush1.msra.mxu0 %v823
        %2637 = vmatprep.subr.mxu0 %v828
        %2638 = vmatpush1.msra.mxu0 %v827
        %2639 = vmatprep.subr.mxu0 %v832
        %2640 = vmatpush1.msra.mxu0 %v831
        %2641 = vmatprep.subr.mxu0 %v836
        %2642 = vmatpush1.msra.mxu0 %v835
        %2643 = vmatprep.subr.mxu0 %v840
        %2644 = vmatpush1.msra.mxu0 %v839
        %2645 = vmatprep.subr.mxu0 0.0
        %2646 = vmatpush1.msra.mxu0 0.0
        %2647 = vmatprep.subr.mxu0 0.0
        %2648 = vmatpush1.msra.mxu0 0.0
        %2649 = vmatprep.subr.mxu0 0.0
        %2650 = vmatpush1.msra.mxu0 0.0
        %2651 = vmatprep.subr.mxu0 0.0
        %2652 = vmatpush1.msra.mxu0 0.0
        %2653 = vmatprep.subr.mxu0 0.0
        %2654 = vmatpush1.msra.mxu0 0.0
        %2655 = vmatprep.subr.mxu0 0.0
        %2656 = vmatpush1.msra.mxu0 0.0
        %2657 = vmatprep.subr.mxu0 0.0
        %2658 = vmatpush1.msra.mxu0 0.0
        %2659 = vmatprep.subr.mxu0 0.0
        %2660 = vmatpush1.msra.mxu0 0.0
        %2661 = vmatprep.subr.mxu0 0.0
        %2662 = vmatpush1.msra.mxu0 0.0
        %2663 = vmatprep.subr.mxu0 0.0
        %2664 = vmatpush1.msra.mxu0 0.0
        %2665 = vmatprep.subr.mxu0 0.0
        %2666 = vmatpush1.msra.mxu0 0.0
        %2667 = vmatprep.subr.mxu0 0.0
        %2668 = vmatpush1.msra.mxu0 0.0
        %2669 = vmatprep.subr.mxu0 0.0
        %2670 = vmatpush1.msra.mxu0 0.0
        %2671 = vmatprep.subr.mxu0 0.0
        %2672 = vmatpush1.msra.mxu0 0.0
        %2673 = vmatprep.subr.mxu0 0.0
        %2674 = vmatpush1.msra.mxu0 0.0
        %2675 = vmatprep.subr.mxu0 0.0
        %2676 = vmatpush1.msra.mxu0 0.0
        %2677 = vmatprep.subr.mxu0 0.0
        %2678 = vmatpush1.msra.mxu0 0.0
        %2679 = vmatprep.subr.mxu0 0.0
        %2680 = vmatpush1.msra.mxu0 0.0
        %2681 = vmatprep.subr.mxu0 0.0
        %2682 = vmatpush1.msra.mxu0 0.0
        %2683 = vmatprep.subr.mxu0 0.0
        %2684 = vmatpush1.msra.mxu0 0.0
        %2685 = vmatprep.subr.mxu0 0.0
        %2686 = vmatpush1.msra.mxu0 0.0
        %2687 = vmatprep.subr.mxu0 0.0
        %2688 = vmatpush1.msra.mxu0 0.0
        %2689 = vmatprep.subr.mxu0 0.0
        %2690 = vmatpush1.msra.mxu0 0.0
        %2691 = vmatprep.subr.mxu0 0.0
        %2692 = vmatpush1.msra.mxu0 0.0
        %2693 = vmatprep.subr.mxu0 0.0
        %2694 = vmatpush1.msra.mxu0 0.0
        %2695 = vmatprep.subr.mxu0 0.0
        %2696 = vmatpush1.msra.mxu0 0.0
        %2697 = vmatprep.mubr.f32.mxu0 0.0
        %2698 = vmatmul.mubr.f32.gmra.mrb[0].mxu0 %v2552
        %v2699 = vpop.f32.mrb[0].mxu0
        %v2700 = vadd.f32 0.0, %v2699
        %v2701 = vpop.f32.mrb[0].mxu0
        %v2702 = vadd.f32 0.0, %v2701
        %2703 = vdwg.mxu0
        %2704 = vmatprep.subr.mxu0 %v822
        %2705 = vmatpush1.msra.mxu0 %v821
        %2706 = vmatprep.subr.mxu0 %v826
        %2707 = vmatpush1.msra.mxu0 %v825
        %2708 = vmatprep.subr.mxu0 %v830
        %2709 = vmatpush1.msra.mxu0 %v829
        %2710 = vmatprep.subr.mxu0 %v834
        %2711 = vmatpush1.msra.mxu0 %v833
        %2712 = vmatprep.subr.mxu0 %v838
        %2713 = vmatpush1.msra.mxu0 %v837
        %2714 = vmatprep.subr.mxu0 %v842
        %2715 = vmatpush1.msra.mxu0 %v841
        %2716 = vmatprep.subr.mxu0 0.0
        %2717 = vmatpush1.msra.mxu0 0.0
        %2718 = vmatprep.subr.mxu0 0.0
        %2719 = vmatpush1.msra.mxu0 0.0
        %2720 = vmatprep.subr.mxu0 0.0
        %2721 = vmatpush1.msra.mxu0 0.0
        %2722 = vmatprep.subr.mxu0 0.0
        %2723 = vmatpush1.msra.mxu0 0.0
        %2724 = vmatprep.subr.mxu0 0.0
        %2725 = vmatpush1.msra.mxu0 0.0
        %2726 = vmatprep.subr.mxu0 0.0
        %2727 = vmatpush1.msra.mxu0 0.0
        %2728 = vmatprep.subr.mxu0 0.0
        %2729 = vmatpush1.msra.mxu0 0.0
        %2730 = vmatprep.subr.mxu0 0.0
        %2731 = vmatpush1.msra.mxu0 0.0
        %2732 = vmatprep.subr.mxu0 0.0
        %2733 = vmatpush1.msra.mxu0 0.0
        %2734 = vmatprep.subr.mxu0 0.0
        %2735 = vmatpush1.msra.mxu0 0.0
        %2736 = vmatprep.subr.mxu0 0.0
        %2737 = vmatpush1.msra.mxu0 0.0
        %2738 = vmatprep.subr.mxu0 0.0
        %2739 = vmatpush1.msra.mxu0 0.0
        %2740 = vmatprep.subr.mxu0 0.0
        %2741 = vmatpush1.msra.mxu0 0.0
        %2742 = vmatprep.subr.mxu0 0.0
        %2743 = vmatpush1.msra.mxu0 0.0
        %2744 = vmatprep.subr.mxu0 0.0
        %2745 = vmatpush1.msra.mxu0 0.0
        %2746 = vmatprep.subr.mxu0 0.0
        %2747 = vmatpush1.msra.mxu0 0.0
        %2748 = vmatprep.subr.mxu0 0.0
        %2749 = vmatpush1.msra.mxu0 0.0
        %2750 = vmatprep.subr.mxu0 0.0
        %2751 = vmatpush1.msra.mxu0 0.0
        %2752 = vmatprep.subr.mxu0 0.0
        %2753 = vmatpush1.msra.mxu0 0.0
        %2754 = vmatprep.subr.mxu0 0.0
        %2755 = vmatpush1.msra.mxu0 0.0
        %2756 = vmatprep.subr.mxu0 0.0
        %2757 = vmatpush1.msra.mxu0 0.0
        %2758 = vmatprep.subr.mxu0 0.0
        %2759 = vmatpush1.msra.mxu0 0.0
        %2760 = vmatprep.subr.mxu0 0.0
        %2761 = vmatpush1.msra.mxu0 0.0
        %2762 = vmatprep.subr.mxu0 0.0
        %2763 = vmatpush1.msra.mxu0 0.0
        %2764 = vmatprep.subr.mxu0 0.0
        %2765 = vmatpush1.msra.mxu0 0.0
        %2766 = vmatprep.subr.mxu0 0.0
        %2767 = vmatpush1.msra.mxu0 0.0
        %2768 = vmatprep.mubr.f32.mxu0 0.0
        %2769 = vmatmul.mubr.f32.gmra.mrb[0].mxu0 %v2552
        %v2770 = vpop.f32.mrb[0].mxu0
        %v2771 = vadd.f32 0.0, %v2770
        %v2772 = vpop.f32.mrb[0].mxu0
        %v2773 = vadd.f32 0.0, %v2772
        %2774 = vdwg.mxu0
        %v2775 = vadd.f32 %v2629, %v2700
        %v2776 = vadd.f32 %v2630, %v2702
        %v2777 = vadd.f32 %v2631, %v2771
        %v2778 = vadd.f32 %v2632, %v2773
        %v2779 = vxor.u32 %v2775, 2147483648
        %v2780 = vmul.f32 %v2779, 1.442695
        %v2781 = vpow.pop %v2780
        %v2782 = vadd.f32 %v2781, 1.0
        %v2783 = vrcp.pop %v2782
        %v2784 = vmul.f32 1.0, %v2783
        %v2785 = vxor.u32 %v2776, 2147483648
        %v2786 = vmul.f32 %v2785, 1.442695
        %v2787 = vpow.pop %v2786
        %v2788 = vadd.f32 %v2787, 1.0
        %v2789 = vrcp.pop %v2788
        %v2790 = vmul.f32 1.0, %v2789
        %v2791 = vtanh.pop %v2777
        %v2792 = vxor.u32 %v2778, 2147483648
        %v2793 = vmul.f32 %v2792, 1.442695
        %v2794 = vpow.pop %v2793
        %v2795 = vadd.f32 %v2794, 1.0
        %v2796 = vrcp.pop %v2795
        %v2797 = vmul.f32 1.0, %v2796
        %v2798 = vmul.f32 %v2790, %v2548
        %v2799 = vmul.f32 %v2784, %v2791
        %v2800 = vadd.f32 %v2798, %v2799
        %v2801 = vtanh.pop %v2800
        %v2802 = vmul.f32 %v2797, %v2801
        %v2804 = vsel %vm859, %v2802, 0
        %2806 = vmatprep.subr.mxu0 0.0
        %2807 = vmatpush1.msra.mxu0 %v843
        %2808 = vmatprep.subr.mxu0 0.0
        %2809 = vmatpush1.msra.mxu0 %v844
        %2810 = vmatprep.subr.mxu0 0.0
        %2811 = vmatpush1.msra.mxu0 %v845
        %2812 = vmatprep.subr.mxu0 0.0
        %2813 = vmatpush1.msra.mxu0 %v846
        %2814 = vmatprep.subr.mxu0 0.0
        %2815 = vmatpush1.msra.mxu0 %v847
        %2816 = vmatprep.subr.mxu0 0.0
        %2817 = vmatpush1.msra.mxu0 %v848
        %2818 = vmatprep.subr.mxu0 0.0
        %2819 = vmatpush1.msra.mxu0 0.0
        %2820 = vmatprep.subr.mxu0 0.0
        %2821 = vmatpush1.msra.mxu0 0.0
        %2822 = vmatprep.subr.mxu0 0.0
        %2823 = vmatpush1.msra.mxu0 0.0
        %2824 = vmatprep.subr.mxu0 0.0
        %2825 = vmatpush1.msra.mxu0 0.0
        %2826 = vmatprep.subr.mxu0 0.0
        %2827 = vmatpush1.msra.mxu0 0.0
        %2828 = vmatprep.subr.mxu0 0.0
        %2829 = vmatpush1.msra.mxu0 0.0
        %2830 = vmatprep.subr.mxu0 0.0
        %2831 = vmatpush1.msra.mxu0 0.0
        %2832 = vmatprep.subr.mxu0 0.0
        %2833 = vmatpush1.msra.mxu0 0.0
        %2834 = vmatprep.subr.mxu0 0.0
        %2835 = vmatpush1.msra.mxu0 0.0
        %2836 = vmatprep.subr.mxu0 0.0
        %2837 = vmatpush1.msra.mxu0 0.0
        %2838 = vmatprep.subr.mxu0 0.0
        %2839 = vmatpush1.msra.mxu0 0.0
        %2840 = vmatprep.subr.mxu0 0.0
        %2841 = vmatpush1.msra.mxu0 0.0
        %2842 = vmatprep.subr.mxu0 0.0
        %2843 = vmatpush1.msra.mxu0 0.0
        %2844 = vmatprep.subr.mxu0 0.0
        %2845 = vmatpush1.msra.mxu0 0.0
        %2846 = vmatprep.subr.mxu0 0.0
        %2847 = vmatpush1.msra.mxu0 0.0
        %2848 = vmatprep.subr.mxu0 0.0
        %2849 = vmatpush1.msra.mxu0 0.0
        %2850 = vmatprep.subr.mxu0 0.0
        %2851 = vmatpush1.msra.mxu0 0.0
        %2852 = vmatprep.subr.mxu0 0.0
        %2853 = vmatpush1.msra.mxu0 0.0
        %2854 = vmatprep.subr.mxu0 0.0
        %2855 = vmatpush1.msra.mxu0 0.0
        %2856 = vmatprep.subr.mxu0 0.0
        %2857 = vmatpush1.msra.mxu0 0.0
        %2858 = vmatprep.subr.mxu0 0.0
        %2859 = vmatpush1.msra.mxu0 0.0
        %2860 = vmatprep.subr.mxu0 0.0
        %2861 = vmatpush1.msra.mxu0 0.0
        %2862 = vmatprep.subr.mxu0 0.0
        %2863 = vmatpush1.msra.mxu0 0.0
        %2864 = vmatprep.subr.mxu0 0.0
        %2865 = vmatpush1.msra.mxu0 0.0
        %2866 = vmatprep.subr.mxu0 0.0
        %2867 = vmatpush1.msra.mxu0 0.0
        %2868 = vmatprep.subr.mxu0 0.0
        %2869 = vmatpush1.msra.mxu0 0.0
        %2870 = vmatprep.mubr.f32.mxu0 0.0
        %2871 = vmatmul.mubr.f32.gmra.mrb[0].mxu0 %v2804
        %v2872 = vpop.f32.mrb[0].mxu0
        %v2873 = vadd.f32 %v1037, %v2872
        %v2874 = vpop.f32.mrb[0].mxu0
        %2875 = vdwg.mxu0
        %s2876 = scalar_lea.vmem %s469, 56 [#allocation7]
        %2877 = vst.msk [vmem:[%s2876] sm:$0xff] %vm1112, %v2873
        %2878 = vst.msk [vmem:[%s490] sm:$0xff] %vm859, %v2802
        %2879 = vst.msk [vmem:[%s482] sm:$0xff] %vm859, %v2800
        %s2880 = sand.u32 %s219, 1
        %s2881 = sand.u32 %s219, 1
        %s2882 = smul.addr %s2881, 64
        %s2883 = scalar_lea.vmem [#allocation7], %s2882
        %p2884 = scmp.lt.s32.totalorder %s28, 1
        %s2885 = scalar_select %p2884, %s28, 1
        %s2886 = smul.addr %s2885, 8
        %s2887 = scalar_lea.vmem %s9, %s2886
        %s2888 = sand.u32 %s271, 1
        %s2889 = scalar_lea.sflag [#allocation6], %s2888
        %s2890 = sand.u32 %s271, 1
        %s2891 = smul.addr %s2890, 8
        %s2892 = scalar_lea.vmem [#allocation8], %s2891
        // Predicated region
        $region95: #{a2c_forward.1} parent=85 // pred_check
          %p2893 = pneg %p229
        $region96: #{a2c_forward.1} parent=85 // pred_check_branch
          %2895 = sbr.rel (%p2893) target = $region98
        $region97: #{a2c_forward.1} parent=85 // pred_region
          %s2896 = smul.addr %s28, 8
          %s2897 = scalar_lea.vmem %s8, %s2896
          // Predicated region
          $region99: #{a2c_forward.1} parent=97 // pred_check
            _
          $region100: #{a2c_forward.1} parent=97 // pred_check_branch
            %2899 = sbr.rel (0) target = $region102
          $region101: #{a2c_forward.1} parent=97 // pred_region
            // Predicated region
            $region103: #{a2c_forward.1} parent=101 // pred_check
              _
            $region104: #{a2c_forward.1} parent=101 // pred_check_branch
              %2901 = sbr.rel (0) target = $region106
            $region105: #{a2c_forward.1} parent=101 // pred_region
              // Predicated region
              $region118: #{a2c_forward.1} parent=105 // pred_check
                _
              $region119: #{a2c_forward.1} parent=105 // pred_check_branch
                %2930 = sbr.rel (0) target = $region121
              $region120: #{a2c_forward.1} parent=105 // pred_region
                loop: start=0, step=1, limit=1
                $region122: #{a2c_forward.1} parent=120 // loop_pre_header
                  _
                $region123: #{a2c_forward.1} parent=120 // loop_header
                  %s2932 = sphi 0, %s2936
                  %p2933 = scmp.ge.s32.totalorder %s2932, 1
                  %s2937 = sphi %s2883, %s2883
                  %s2938 = sphi %s2897, %s2897
                $region124: #{a2c_forward.1} parent=120 // loop_header_branch
                  %2935 = sbr.rel (%p2933) target = $region128
                $region125: #{a2c_forward.1} parent=120 // loop_body
                  %v2939 = vld [vmem:[%s2937] sm:$0xff]
                  %2940 = vst [vmem:[%s2938] sm:$0xff] %v2939
                  %v2941 = vld [vmem:[%s2937 + $0x8] sm:$0xff]
                  %2942 = vst [vmem:[%s2938 + $0x10] sm:$0xff] %v2941
                  %v2943 = vld [vmem:[%s2937 + $0x10] sm:$0xff]
                  %2944 = vst [vmem:[%s2938 + $0x20] sm:$0xff] %v2943
                  %v2945 = vld [vmem:[%s2937 + $0x18] sm:$0xff]
                  %2946 = vst [vmem:[%s2938 + $0x30] sm:$0xff] %v2945
                  %v2947 = vld [vmem:[%s2937 + $0x20] sm:$0xff]
                  %2948 = vst [vmem:[%s2938 + $0x40] sm:$0xff] %v2947
                  %v2949 = vld [vmem:[%s2937 + $0x28] sm:$0xff]
                  %2950 = vst [vmem:[%s2938 + $0x50] sm:$0xff] %v2949
                  %v2951 = vld [vmem:[%s2937 + $0x30] sm:$0xff]
                  %2952 = vst [vmem:[%s2938 + $0x60] sm:$0xff] %v2951
                  %v2953 = vld [vmem:[%s2937 + $0x38] sm:$0xff]
                  %2954 = vst [vmem:[%s2938 + $0x70] sm:$0xff] %v2953
                $region126: #{a2c_forward.1} parent=120 // loop_footer
                  %s2936 = sadd.s32 1, %s2932
                $region127: #{a2c_forward.1} parent=120 // loop_footer_branch
                  %2931 = sbr.rel target = $region123
                $region128: #{a2c_forward.1} parent=120 // loop_exit
                  _
              $region121: #{a2c_forward.1} parent=105 // pred_fallthru
                _
              // Predicated region
              $region129: #{a2c_forward.1} parent=105 // pred_check
                _
              $region130: #{a2c_forward.1} parent=105 // pred_check_branch
                %2956 = sbr.rel target = $region132
              $region131: #{a2c_forward.1} parent=105 // pred_region
                _
              $region132: #{a2c_forward.1} parent=105 // pred_fallthru
                _
            $region106: #{a2c_forward.1} parent=101 // pred_fallthru
              _
            // Predicated region
            $region107: #{a2c_forward.1} parent=101 // pred_check
              _
            $region108: #{a2c_forward.1} parent=101 // pred_check_branch
              %2903 = sbr.rel target = $region110
            $region109: #{a2c_forward.1} parent=101 // pred_region
              loop: start=0, step=1, limit=1
              $region111: #{a2c_forward.1} parent=109 // loop_pre_header
                _
              $region112: #{a2c_forward.1} parent=109 // loop_header
                %s2906 = sphi 0, %s2910
                %p2907 = scmp.ge.s32.totalorder %s2906, 1
                %s2911 = sphi %s2883, %s2883
                %s2912 = sphi %s2897, %s2897
              $region113: #{a2c_forward.1} parent=109 // loop_header_branch
                %2909 = sbr.rel (%p2907) target = $region117
              $region114: #{a2c_forward.1} parent=109 // loop_body
                %v2913 = vld [vmem:[%s2911] sm:$0xff]
                %2914 = vst [vmem:[%s2912] sm:$0xff] %v2913
                %v2915 = vld [vmem:[%s2911 + $0x8] sm:$0xff]
                %2916 = vst [vmem:[%s2912 + $0x10] sm:$0xff] %v2915
                %v2917 = vld [vmem:[%s2911 + $0x10] sm:$0xff]
                %2918 = vst [vmem:[%s2912 + $0x20] sm:$0xff] %v2917
                %v2919 = vld [vmem:[%s2911 + $0x18] sm:$0xff]
                %2920 = vst [vmem:[%s2912 + $0x30] sm:$0xff] %v2919
                %v2921 = vld [vmem:[%s2911 + $0x20] sm:$0xff]
                %2922 = vst [vmem:[%s2912 + $0x40] sm:$0xff] %v2921
                %v2923 = vld [vmem:[%s2911 + $0x28] sm:$0xff]
                %2924 = vst [vmem:[%s2912 + $0x50] sm:$0xff] %v2923
                %v2925 = vld [vmem:[%s2911 + $0x30] sm:$0xff]
                %2926 = vst [vmem:[%s2912 + $0x60] sm:$0xff] %v2925
                %v2927 = vld [vmem:[%s2911 + $0x38] sm:$0xff]
                %2928 = vst [vmem:[%s2912 + $0x70] sm:$0xff] %v2927
              $region115: #{a2c_forward.1} parent=109 // loop_footer
                %s2910 = sadd.s32 1, %s2906
              $region116: #{a2c_forward.1} parent=109 // loop_footer_branch
                %2905 = sbr.rel target = $region112
              $region117: #{a2c_forward.1} parent=109 // loop_exit
                _
            $region110: #{a2c_forward.1} parent=101 // pred_fallthru
              _
          $region102: #{a2c_forward.1} parent=97 // pred_fallthru
            _
          %2957 = vnop
        $region98: #{a2c_forward.1} parent=85 // pred_fallthru
          _
        // Predicated region
        $region133: #{a2c_forward.1} parent=85 // pred_check
          %p2958 = pneg %p255
        $region134: #{a2c_forward.1} parent=85 // pred_check_branch
          %2960 = sbr.rel (%p2958) target = $region136
        $region135: #{a2c_forward.1} parent=85 // pred_region
          _
        $region136: #{a2c_forward.1} parent=85 // pred_fallthru
          _
        // Predicated region
        $region137: #{a2c_forward.1} parent=85 // pred_check
          %p2961 = pneg %p281
        $region138: #{a2c_forward.1} parent=85 // pred_check_branch
          %2963 = sbr.rel (%p2961) target = $region140
        $region139: #{a2c_forward.1} parent=85 // pred_region
          %s2965 = ssub.s32 128, 128
          %2966 = vsyncadd %s2889, %s2965
          %s2967 = smul.addr %s28, 128
          %s2968 = scalar_lea.hbm %s10, %s2967
          %s2970 = sshll.u32 %s2892, 4
          %s2971 = int_to_ptr.vmem [resolvable:$true] %s2970
          %2973 = dma.vmem_to_hbm [thread:$0]  %s2971, 128, %s2968, %s2889
        $region140: #{a2c_forward.1} parent=85 // pred_fallthru
          _
      $region86: #{a2c_forward.1} parent=5 // pred_fallthru
        _
      %p2974 = scmp.le.s32.totalorder 2, %s23
      // Predicated region
      $region141: #{a2c_forward.1} parent=5 // pred_check
        %p2975 = pneg %p2974
      $region142: #{a2c_forward.1} parent=5 // pred_check_branch
        %2977 = sbr.rel (%p2975) target = $region144
      $region143: #{a2c_forward.1} parent=5 // pred_region
        %s2978 = ssub.s32 %s23, 2
        // Predicated region
        $region145: #{a2c_forward.1} parent=143 // pred_check
          %p2979 = pneg %p235
        $region146: #{a2c_forward.1} parent=143 // pred_check_branch
          %2981 = sbr.rel (%p2979) target = $region148
        $region147: #{a2c_forward.1} parent=143 // pred_region
          %s2982 = sand.u32 %s220, 1
          %s2983 = sand.u32 %s220, 1
          %s2984 = smul.addr %s2983, 64
          %s2985 = scalar_lea.vmem [#allocation7], %s2984
        $region148: #{a2c_forward.1} parent=143 // pred_fallthru
          _
        // Predicated region
        $region149: #{a2c_forward.1} parent=143 // pred_check
          %p2986 = pneg %p261
        $region150: #{a2c_forward.1} parent=143 // pred_check_branch
          %2988 = sbr.rel (%p2986) target = $region152
        $region151: #{a2c_forward.1} parent=143 // pred_region
          %p2989 = scmp.lt.s32.totalorder %s29, 1
          %s2990 = scalar_select %p2989, %s29, 1
          %s2991 = smul.addr %s2990, 8
          %s2992 = scalar_lea.vmem %s9, %s2991
        $region152: #{a2c_forward.1} parent=143 // pred_fallthru
          _
        // Predicated region
        $region153: #{a2c_forward.1} parent=143 // pred_check
          %p2993 = pneg %p287
        $region154: #{a2c_forward.1} parent=143 // pred_check_branch
          %2995 = sbr.rel (%p2993) target = $region156
        $region155: #{a2c_forward.1} parent=143 // pred_region
          %s2996 = sand.u32 %s272, 1
          %s2997 = scalar_lea.sflag [#allocation6], %s2996
          %s2998 = sand.u32 %s272, 1
          %s2999 = smul.addr %s2998, 8
          %s3000 = scalar_lea.vmem [#allocation8], %s2999
          %3001 = dma.done %s2997, 128
        $region156: #{a2c_forward.1} parent=143 // pred_fallthru
          _
      $region144: #{a2c_forward.1} parent=5 // pred_fallthru
        _
    $region6: #{a2c_forward.1} parent=1 // loop_footer
      %s27 = sadd.s32 1, %s23
    $region7: #{a2c_forward.1} parent=1 // loop_footer_branch
      %22 = sbr.rel target = $region3
    $region8: #{a2c_forward.1} parent=1 // loop_exit
      _
    %3002 = vsyncpa [#allocation5], 1
    %s3003 = scalar_lea.sflag [#allocation5], 1
    %3004 = vsyncpa %s3003, 1
    %3005 = vsyncpa [#allocation6], 1
    %s3006 = scalar_lea.sflag [#allocation6], 1
    %3007 = vsyncpa %s3006, 1

</llo_original>
